<compile_context>
chip_gen: v7x
topology: tpu7x:2x2x1
jax: 0.10.0
libtpu: 0.0.40
codegen_flags: <defaults>
</compile_context>

<pallas_src>
import jax
import jax.numpy as jnp
from jax.experimental import pallas as pl
from jax.experimental.pallas import tpu as pltpu

_K = 5      # conv kernel size of all three layers (module defaults l1_k=l2_k=l3_k=5)
_HALO = 7   # 2 + 2 + 2 (three 5x5 convs) + 1 (bilinear halo)


def _pick_tile_h(h):
    """Largest divisor of h in [8, 32] (keeps row tiles VMEM-friendly), else full h."""
    best = None
    for d in range(8, min(32, h) + 1):
        if h % d == 0:
            best = d
    return best if best is not None else h


def srpo_forward(params, x_nchw, tile_h=None):
    n, cin, img_h, img_w = x_nchw.shape
    w1, b1 = params["w1"], params["b1"]
    w2, b2 = params["w2"], params["b2"]
    w3, b3 = params["w3"], params["b3"]
    c1, c2, c3 = w1.shape[3], w2.shape[3], w3.shape[3]
    for wgt, ci in ((w1, cin), (w2, c1), (w3, c2)):
        assert wgt.shape[0] == _K and wgt.shape[1] == _K and wgt.shape[2] == ci

    th = tile_h if tile_h is not None else _pick_tile_h(img_h)
    assert img_h % th == 0 and (th == img_h or th % 8 == 0), (img_h, th)
    nt = img_h // th
    wp = img_w + 2 * _HALO

    # ---- input-side glue (small tensors only; all heavy lifting is in the kernel) ----
    # NCHW -> (N, H, Cin, W) so W sits on the TPU lane dim, zero-pad spatial by 7, then
    # cut overlapping row tiles so every grid step sees its halo with a plain BlockSpec.
    xr = jnp.transpose(x_nchw, (0, 2, 1, 3))
    xp = jnp.pad(xr, ((0, 0), (_HALO, _HALO), (0, 0), (_HALO, _HALO)))
    xt = jnp.stack([xp[:, i * th:i * th + th + 2 * _HALO] for i in range(nt)], axis=1)
    # xt: (N, nT, TH+14, Cin, W+14)

    # weights as (Cout, 25*Cin) matrices matching the in-kernel im2col tap order (ky, kx, ci)
    w1m = jnp.transpose(w1, (3, 0, 1, 2)).reshape(c1, _K * _K * cin)
    w2m = jnp.transpose(w2, (3, 0, 1, 2)).reshape(c2, _K * _K * c1)
    w3m = jnp.transpose(w3, (3, 0, 1, 2)).reshape(c3, _K * _K * c2)
    b1m = b1.reshape(c1, 1)
    b2m = b2.reshape(c2, 1)
    b3m = b3.reshape(c3, 1)

    def kernel(x_ref, w1_ref, b1_ref, w2_ref, b2_ref, w3_ref, b3_ref,
               out_ref, f1_ref, f2_ref, off_ref):
        t = pl.program_id(1)
        n_t = pl.num_programs(1)
        W = img_w

        # Zero the column frames of the feature scratches: they implement the zero
        # padding of conv2/conv3 in the W direction (never written below).
        f1_ref[:, :, 0:5] = jnp.zeros((th + 10, c1, 5), jnp.float32)
        f1_ref[:, :, W + 5:W + 10] = jnp.zeros((th + 10, c1, 5), jnp.float32)
        f2_ref[:, :, 0:3] = jnp.zeros((th + 6, c2, 3), jnp.float32)
        f2_ref[:, :, W + 3:W + 6] = jnp.zeros((th + 6, c2, 3), jnp.float32)

        w1v = w1_ref[...]
        w2v = w2_ref[...]
        w3v = w3_ref[...]
        b1v = b1_ref[...]
        b2v = b2_ref[...]
        b3v = b3_ref[...]

        x_tile = x_ref.at[0, 0]   # (TH+14, Cin, W+14) view, rows leading

        # conv1 + ReLU on rows [-5, TH+5) of the tile (halo for conv2/conv3), in-image
        # columns only.  Rows outside the image are forced to zero so the next conv
        # sees PyTorch-style zero padding.
        @pl.loop(0, th + 10)
        def _conv1(hh):
            taps = []
            for dy in range(_K):
                row = x_tile[hh + dy]                            # (Cin, W+14)
                for dx in range(_K):
                    taps.append(row[:, 5 + dx:5 + dx + W])
            col = jnp.concatenate(taps, axis=0)                  # (25*Cin, W) in-VMEM im2col
            acc = jnp.dot(w1v, col, preferred_element_type=jnp.float32) + b1v
            acc = jnp.maximum(acc, 0.0)
            valid = jnp.logical_and(jnp.logical_or(t > 0, hh >= 5),
                                    jnp.logical_or(t < n_t - 1, hh < th + 5))
            f1_ref[hh, :, 5:5 + W] = jnp.where(valid, acc, 0.0)

        # conv2 + ReLU on rows [-3, TH+3)
        @pl.loop(0, th + 6)
        def _conv2(hh):
            taps = []
            for dy in range(_K):
                row = f1_ref[hh + dy]                            # (C1, W+10)
                for dx in range(_K):
                    taps.append(row[:, 3 + dx:3 + dx + W])
            col = jnp.concatenate(taps, axis=0)                  # (25*C1, W)
            acc = jnp.dot(w2v, col, preferred_element_type=jnp.float32) + b2v
            acc = jnp.maximum(acc, 0.0)
            valid = jnp.logical_and(jnp.logical_or(t > 0, hh >= 3),
                                    jnp.logical_or(t < n_t - 1, hh < th + 3))
            f2_ref[hh, :, 3:3 + W] = jnp.where(valid, acc, 0.0)

        # conv3 (no activation): offsets on rows [-1, TH+1) x cols [-1, W+1)
        @pl.loop(0, th + 2)
        def _conv3(hh):
            taps = []
            for dy in range(_K):
                row = f2_ref[hh + dy]                            # (C2, W+6)
                for dx in range(_K):
                    taps.append(row[:, dx:dx + W + 2])
            col = jnp.concatenate(taps, axis=0)                  # (25*C2, W+2)
            off_ref[hh] = jnp.dot(w3v, col, preferred_element_type=jnp.float32) + b3v

        # Edge clamp of the 1-px offset halo (PyTorch bilinear align_corners=False clamps
        # out-of-range source coords).  Columns always; rows only on image-border tiles
        # (interior tile halos already hold the true neighbouring values).
        off_ref[:, :, 0:1] = off_ref[:, :, 1:2]
        off_ref[:, :, W + 1:W + 2] = off_ref[:, :, W:W + 1]

        @pl.when(t == 0)
        def _top():
            off_ref[0:1] = off_ref[1:2]

        @pl.when(t == n_t - 1)
        def _bottom():
            off_ref[th + 1:th + 2] = off_ref[th:th + 1]

        # Fused 2x bilinear upsample + nearest replicate + channel concat, emitted as the
        # four output parity phases (p, q); every store is a full lane-dense (TH, W) plane.
        for ch in range(c3):
            oc = off_ref[:, ch, :]                               # (TH+2, W+2)
            C_ = oc[1:th + 1, 1:W + 1]
            U_ = oc[0:th, 1:W + 1]
            D_ = oc[2:th + 2, 1:W + 1]
            L_ = oc[1:th + 1, 0:W]
            R_ = oc[1:th + 1, 2:W + 2]
            UL = oc[0:th, 0:W]
            UR = oc[0:th, 2:W + 2]
            DL = oc[2:th + 2, 0:W]
            DR = oc[2:th + 2, 2:W + 2]
            out_ref[0, 0, 0, ch] = 0.0625 * UL + 0.1875 * U_ + 0.1875 * L_ + 0.5625 * C_
            out_ref[0, 0, 1, ch] = 0.1875 * U_ + 0.0625 * UR + 0.5625 * C_ + 0.1875 * R_
            out_ref[0, 1, 0, ch] = 0.1875 * L_ + 0.0625 * DL + 0.5625 * C_ + 0.1875 * D_
            out_ref[0, 1, 1, ch] = 0.5625 * C_ + 0.1875 * R_ + 0.1875 * D_ + 0.0625 * DR
            out_ref[0, 0, 0, c3 + ch] = C_
            out_ref[0, 0, 1, c3 + ch] = C_
            out_ref[0, 1, 0, c3 + ch] = C_
            out_ref[0, 1, 1, c3 + ch] = C_

    out6 = pl.pallas_call(
        kernel,
        out_shape=jax.ShapeDtypeStruct((n, 2, 2, 2 * c3, img_h, img_w), jnp.float32),
        grid_spec=pltpu.PrefetchScalarGridSpec(
            num_scalar_prefetch=0,
            grid=(n, nt),
            in_specs=[
                pl.BlockSpec((1, 1, th + 2 * _HALO, cin, wp), lambda i, j: (i, j, 0, 0, 0)),
                pl.BlockSpec((c1, _K * _K * cin), lambda i, j: (0, 0)),
                pl.BlockSpec((c1, 1), lambda i, j: (0, 0)),
                pl.BlockSpec((c2, _K * _K * c1), lambda i, j: (0, 0)),
                pl.BlockSpec((c2, 1), lambda i, j: (0, 0)),
                pl.BlockSpec((c3, _K * _K * c2), lambda i, j: (0, 0)),
                pl.BlockSpec((c3, 1), lambda i, j: (0, 0)),
            ],
            out_specs=pl.BlockSpec((1, 2, 2, 2 * c3, th, img_w),
                                   lambda i, j: (i, 0, 0, 0, j, 0)),
            scratch_shapes=[
                pltpu.VMEM((th + 10, c1, img_w + 10), jnp.float32),   # feature1 (+halo)
                pltpu.VMEM((th + 6, c2, img_w + 6), jnp.float32),     # feature2 (+halo)
                pltpu.VMEM((th + 2, c3, img_w + 2), jnp.float32),     # offset   (+halo)
            ],
        ),
        compiler_params=pltpu.CompilerParams(
            dimension_semantics=("parallel", "parallel"),
            vmem_limit_bytes=48 * 1024 * 1024,
        ),
    )(xt, w1m, b1m, w2m, b2m, w3m, b3m)

    # (n, p, q, ch, k, l) -> (n, ch, k, p, l, q) -> (N, 4, 2H, 2W): the reshape is
    # layout-preserving, so this is the single remaining XLA pass over the upsampled
    # tensor (the 2x pixel interleave).
    out = jnp.transpose(out6, (0, 3, 4, 1, 5, 2)).reshape(n, 2 * c3, 2 * img_h, 2 * img_w)
    return None, out


def init_params(key, input_channel=3, l1_c=16, l1_k=5, l2_c=16, l2_k=5, l3_c=2, l3_k=5):
    k1, k2, k3 = jax.random.split(key, 3)

    def conv_init(k, ks, cin, cout):
        fan_in = ks * ks * cin
        w = jax.random.normal(k, (ks, ks, cin, cout), jnp.float32) * jnp.sqrt(2.0 / fan_in)
        b = jnp.linspace(-0.05, 0.05, cout, dtype=jnp.float32)
        return w, b

    w1, b1 = conv_init(k1, l1_k, input_channel, l1_c)
    w2, b2 = conv_init(k2, l2_k, l1_c, l2_c)
    w3, b3 = conv_init(k3, l3_k, l2_c, l3_c)
    return {"w1": w1, "b1": b1, "w2": w2, "b2": b2, "w3": w3, "b3": b3}


if __name__ == "__main__":
    key = jax.random.PRNGKey(0)
    kx, kp = jax.random.split(key)
    x = jax.random.normal(kx, (2, 3, 16, 16), jnp.float32)   # NCHW, input_channel=3
    params = init_params(kp)

    # tile_h=8 exercises the multi-row-tile (halo + masking) path: grid = (2, 2).
    fwd = jax.jit(lambda p, xx: srpo_forward(p, xx, tile_h=8))
    none_out, output = fwd(params, x)
    output = jax.block_until_ready(output)

    assert none_out is None
    assert output.shape == (2, 4, 32, 32), output.shape
    assert output.dtype == jnp.float32
    assert bool(jnp.isfinite(output).all())
    print("KERNEL_OK")
</pallas_src>

<mosaic_0001>
module attributes {stable_mosaic.version = 11 : i64} {
  func.func @kernel(%arg0: i32, %arg1: i32, %arg2: memref<1x1x22x3x30xf32, #tpu.memory_space<vmem>>, %arg3: memref<16x75xf32, #tpu.memory_space<vmem>>, %arg4: memref<16x1xf32, #tpu.memory_space<vmem>>, %arg5: memref<16x400xf32, #tpu.memory_space<vmem>>, %arg6: memref<16x1xf32, #tpu.memory_space<vmem>>, %arg7: memref<2x400xf32, #tpu.memory_space<vmem>>, %arg8: memref<2x1xf32, #tpu.memory_space<vmem>>, %arg9: memref<1x2x2x4x8x16xf32, #tpu.memory_space<vmem>>, %arg10: memref<18x16x26xf32, #tpu.memory_space<vmem>>, %arg11: memref<14x16x22xf32, #tpu.memory_space<vmem>>, %arg12: memref<10x2x18xf32, #tpu.memory_space<vmem>>) attributes {dimension_semantics = [#tpu.dimension_semantics<parallel>, #tpu.dimension_semantics<parallel>], iteration_bounds = array<i64: 2, 2>, scalar_prefetch = 0 : i64, scratch_operands = 3 : i64, tpu.core_type = #tpu.core_type<tc>, window_params = [{transform_indices = @transform_0, window_bounds = array<i64: 1, 1, 22, 3, 30>}, {pipeline_mode = #tpu.pipeline_mode<synchronous>, transform_indices = @transform_1, window_bounds = array<i64: 16, 75>}, {pipeline_mode = #tpu.pipeline_mode<synchronous>, transform_indices = @transform_2, window_bounds = array<i64: 16, 1>}, {pipeline_mode = #tpu.pipeline_mode<synchronous>, transform_indices = @transform_3, window_bounds = array<i64: 16, 400>}, {pipeline_mode = #tpu.pipeline_mode<synchronous>, transform_indices = @transform_4, window_bounds = array<i64: 16, 1>}, {pipeline_mode = #tpu.pipeline_mode<synchronous>, transform_indices = @transform_5, window_bounds = array<i64: 2, 400>}, {pipeline_mode = #tpu.pipeline_mode<synchronous>, transform_indices = @transform_6, window_bounds = array<i64: 2, 1>}, {transform_indices = @transform_7, window_bounds = array<i64: 1, 2, 2, 4, 8, 16>}]} {
    %cst = arith.constant 0.000000e+00 : f32
    %0 = vector.broadcast %cst : f32 to vector<18x16x5xf32>
    %c0 = arith.constant 0 : index
    %c0_0 = arith.constant 0 : index
    %c0_1 = arith.constant 0 : index
    %1 = vector.load %arg10[%c0, %c0_0, %c0_1] : memref<18x16x26xf32, #tpu.memory_space<vmem>>, vector<18x16x5xf32>
    tpu.vector_store %arg10[%c0, %c0_0, %c0_1], %0 {strides = array<i32>} : memref<18x16x26xf32, #tpu.memory_space<vmem>>, vector<18x16x5xf32>,
    %cst_2 = arith.constant 0.000000e+00 : f32
    %2 = vector.broadcast %cst_2 : f32 to vector<18x16x5xf32>
    %c0_3 = arith.constant 0 : index
    %c0_4 = arith.constant 0 : index
    %c21 = arith.constant 21 : index
    %3 = vector.load %arg10[%c0_3, %c0_4, %c21] : memref<18x16x26xf32, #tpu.memory_space<vmem>>, vector<18x16x5xf32>
    tpu.vector_store %arg10[%c0_3, %c0_4, %c21], %2 {strides = array<i32>} : memref<18x16x26xf32, #tpu.memory_space<vmem>>, vector<18x16x5xf32>,
    %cst_5 = arith.constant 0.000000e+00 : f32
    %4 = vector.broadcast %cst_5 : f32 to vector<14x16x3xf32>
    %c0_6 = arith.constant 0 : index
    %c0_7 = arith.constant 0 : index
    %c0_8 = arith.constant 0 : index
    %5 = vector.load %arg11[%c0_6, %c0_7, %c0_8] : memref<14x16x22xf32, #tpu.memory_space<vmem>>, vector<14x16x3xf32>
    tpu.vector_store %arg11[%c0_6, %c0_7, %c0_8], %4 {strides = array<i32>} : memref<14x16x22xf32, #tpu.memory_space<vmem>>, vector<14x16x3xf32>,
    %cst_9 = arith.constant 0.000000e+00 : f32
    %6 = vector.broadcast %cst_9 : f32 to vector<14x16x3xf32>
    %c0_10 = arith.constant 0 : index
    %c0_11 = arith.constant 0 : index
    %c19 = arith.constant 19 : index
    %7 = vector.load %arg11[%c0_10, %c0_11, %c19] : memref<14x16x22xf32, #tpu.memory_space<vmem>>, vector<14x16x3xf32>
    tpu.vector_store %arg11[%c0_10, %c0_11, %c19], %6 {strides = array<i32>} : memref<14x16x22xf32, #tpu.memory_space<vmem>>, vector<14x16x3xf32>,
    %c0_12 = arith.constant 0 : index
    %c0_13 = arith.constant 0 : index
    %8 = vector.load %arg3[%c0_12, %c0_13] : memref<16x75xf32, #tpu.memory_space<vmem>>, vector<16x75xf32>
    %c0_14 = arith.constant 0 : index
    %c0_15 = arith.constant 0 : index
    %9 = vector.load %arg5[%c0_14, %c0_15] : memref<16x400xf32, #tpu.memory_space<vmem>>, vector<16x400xf32>
    %c0_16 = arith.constant 0 : index
    %c0_17 = arith.constant 0 : index
    %10 = vector.load %arg7[%c0_16, %c0_17] : memref<2x400xf32, #tpu.memory_space<vmem>>, vector<2x400xf32>
    %c0_18 = arith.constant 0 : index
    %c0_19 = arith.constant 0 : index
    %11 = vector.load %arg4[%c0_18, %c0_19] : memref<16x1xf32, #tpu.memory_space<vmem>>, vector<16x1xf32>
    %c0_20 = arith.constant 0 : index
    %c0_21 = arith.constant 0 : index
    %12 = vector.load %arg6[%c0_20, %c0_21] : memref<16x1xf32, #tpu.memory_space<vmem>>, vector<16x1xf32>
    %c0_22 = arith.constant 0 : index
    %c0_23 = arith.constant 0 : index
    %13 = vector.load %arg8[%c0_22, %c0_23] : memref<2x1xf32, #tpu.memory_space<vmem>>, vector<2x1xf32>
    %c0_i32 = arith.constant 0 : i32
    %c0_i32_24 = arith.constant 0 : i32
    %c0_i32_25 = arith.constant 0 : i32
    %c18_i32 = arith.constant 18 : i32
    %14 = arith.addi %c0_i32_25, %c18_i32 : i32
    %c1_i32 = arith.constant 1 : i32
    scf.for %arg13 = %c0_i32_25 to %14 step %c1_i32  : i32 {
      %c1_i32_178 = arith.constant 1 : i32
      %185 = arith.muli %arg13, %c1_i32_178 : i32
      %c0_i32_179 = arith.constant 0 : i32
      %186 = arith.addi %c0_i32_179, %185 : i32
      %c0_i32_180 = arith.constant 0 : i32
      %187 = arith.addi %186, %c0_i32_180 : i32
      %c0_i32_181 = arith.constant 0 : i32
      %c0_i32_182 = arith.constant 0 : i32
      %c0_i32_183 = arith.constant 0 : i32
      %188 = tpu.memref_slice %arg2[%c0_i32, %c0_i32_24, %c0_i32_181, %c0_i32_182, %c0_i32_183] : memref<1x1x22x3x30xf32, #tpu.memory_space<vmem>> -> memref<1x1x22x3x30xf32, #tpu.memory_space<vmem>>
      %189 = tpu.memref_squeeze %188 : memref<1x1x22x3x30xf32, #tpu.memory_space<vmem>> -> memref<22x3x30xf32, #tpu.memory_space<vmem>>
      %190 = arith.index_cast %187 : i32 to index
      %c0_184 = arith.constant 0 : index
      %c0_185 = arith.constant 0 : index
      %191 = vector.load %189[%190, %c0_184, %c0_185] : memref<22x3x30xf32, #tpu.memory_space<vmem>>, vector<1x3x30xf32>
      %192 = vector.shape_cast %191 : vector<1x3x30xf32> to vector<3x30xf32>
      %193 = vector.extract_strided_slice %192 {offsets = [0, 5], sizes = [3, 16], strides = [1, 1]} : vector<3x30xf32> to vector<3x16xf32>
      %194 = vector.extract_strided_slice %192 {offsets = [0, 6], sizes = [3, 16], strides = [1, 1]} : vector<3x30xf32> to vector<3x16xf32>
      %195 = vector.extract_strided_slice %192 {offsets = [0, 7], sizes = [3, 16], strides = [1, 1]} : vector<3x30xf32> to vector<3x16xf32>
      %196 = vector.extract_strided_slice %192 {offsets = [0, 8], sizes = [3, 16], strides = [1, 1]} : vector<3x30xf32> to vector<3x16xf32>
      %197 = vector.extract_strided_slice %192 {offsets = [0, 9], sizes = [3, 16], strides = [1, 1]} : vector<3x30xf32> to vector<3x16xf32>
      %c1_i32_186 = arith.constant 1 : i32
      %198 = arith.addi %186, %c1_i32_186 : i32
      %c0_i32_187 = arith.constant 0 : i32
      %c0_i32_188 = arith.constant 0 : i32
      %c0_i32_189 = arith.constant 0 : i32
      %199 = tpu.memref_slice %arg2[%c0_i32, %c0_i32_24, %c0_i32_187, %c0_i32_188, %c0_i32_189] : memref<1x1x22x3x30xf32, #tpu.memory_space<vmem>> -> memref<1x1x22x3x30xf32, #tpu.memory_space<vmem>>
      %200 = tpu.memref_squeeze %199 : memref<1x1x22x3x30xf32, #tpu.memory_space<vmem>> -> memref<22x3x30xf32, #tpu.memory_space<vmem>>
      %201 = arith.index_cast %198 : i32 to index
      %c0_190 = arith.constant 0 : index
      %c0_191 = arith.constant 0 : index
      %202 = vector.load %200[%201, %c0_190, %c0_191] : memref<22x3x30xf32, #tpu.memory_space<vmem>>, vector<1x3x30xf32>
      %203 = vector.shape_cast %202 : vector<1x3x30xf32> to vector<3x30xf32>
      %204 = vector.extract_strided_slice %203 {offsets = [0, 5], sizes = [3, 16], strides = [1, 1]} : vector<3x30xf32> to vector<3x16xf32>
      %205 = vector.extract_strided_slice %203 {offsets = [0, 6], sizes = [3, 16], strides = [1, 1]} : vector<3x30xf32> to vector<3x16xf32>
      %206 = vector.extract_strided_slice %203 {offsets = [0, 7], sizes = [3, 16], strides = [1, 1]} : vector<3x30xf32> to vector<3x16xf32>
      %207 = vector.extract_strided_slice %203 {offsets = [0, 8], sizes = [3, 16], strides = [1, 1]} : vector<3x30xf32> to vector<3x16xf32>
      %208 = vector.extract_strided_slice %203 {offsets = [0, 9], sizes = [3, 16], strides = [1, 1]} : vector<3x30xf32> to vector<3x16xf32>
      %c2_i32 = arith.constant 2 : i32
      %209 = arith.addi %186, %c2_i32 : i32
      %c0_i32_192 = arith.constant 0 : i32
      %c0_i32_193 = arith.constant 0 : i32
      %c0_i32_194 = arith.constant 0 : i32
      %210 = tpu.memref_slice %arg2[%c0_i32, %c0_i32_24, %c0_i32_192, %c0_i32_193, %c0_i32_194] : memref<1x1x22x3x30xf32, #tpu.memory_space<vmem>> -> memref<1x1x22x3x30xf32, #tpu.memory_space<vmem>>
      %211 = tpu.memref_squeeze %210 : memref<1x1x22x3x30xf32, #tpu.memory_space<vmem>> -> memref<22x3x30xf32, #tpu.memory_space<vmem>>
      %212 = arith.index_cast %209 : i32 to index
      %c0_195 = arith.constant 0 : index
      %c0_196 = arith.constant 0 : index
      %213 = vector.load %211[%212, %c0_195, %c0_196] : memref<22x3x30xf32, #tpu.memory_space<vmem>>, vector<1x3x30xf32>
      %214 = vector.shape_cast %213 : vector<1x3x30xf32> to vector<3x30xf32>
      %215 = vector.extract_strided_slice %214 {offsets = [0, 5], sizes = [3, 16], strides = [1, 1]} : vector<3x30xf32> to vector<3x16xf32>
      %216 = vector.extract_strided_slice %214 {offsets = [0, 6], sizes = [3, 16], strides = [1, 1]} : vector<3x30xf32> to vector<3x16xf32>
      %217 = vector.extract_strided_slice %214 {offsets = [0, 7], sizes = [3, 16], strides = [1, 1]} : vector<3x30xf32> to vector<3x16xf32>
      %218 = vector.extract_strided_slice %214 {offsets = [0, 8], sizes = [3, 16], strides = [1, 1]} : vector<3x30xf32> to vector<3x16xf32>
      %219 = vector.extract_strided_slice %214 {offsets = [0, 9], sizes = [3, 16], strides = [1, 1]} : vector<3x30xf32> to vector<3x16xf32>
      %c3_i32 = arith.constant 3 : i32
      %220 = arith.addi %186, %c3_i32 : i32
      %c0_i32_197 = arith.constant 0 : i32
      %c0_i32_198 = arith.constant 0 : i32
      %c0_i32_199 = arith.constant 0 : i32
      %221 = tpu.memref_slice %arg2[%c0_i32, %c0_i32_24, %c0_i32_197, %c0_i32_198, %c0_i32_199] : memref<1x1x22x3x30xf32, #tpu.memory_space<vmem>> -> memref<1x1x22x3x30xf32, #tpu.memory_space<vmem>>
      %222 = tpu.memref_squeeze %221 : memref<1x1x22x3x30xf32, #tpu.memory_space<vmem>> -> memref<22x3x30xf32, #tpu.memory_space<vmem>>
      %223 = arith.index_cast %220 : i32 to index
      %c0_200 = arith.constant 0 : index
      %c0_201 = arith.constant 0 : index
      %224 = vector.load %222[%223, %c0_200, %c0_201] : memref<22x3x30xf32, #tpu.memory_space<vmem>>, vector<1x3x30xf32>
      %225 = vector.shape_cast %224 : vector<1x3x30xf32> to vector<3x30xf32>
      %226 = vector.extract_strided_slice %225 {offsets = [0, 5], sizes = [3, 16], strides = [1, 1]} : vector<3x30xf32> to vector<3x16xf32>
      %227 = vector.extract_strided_slice %225 {offsets = [0, 6], sizes = [3, 16], strides = [1, 1]} : vector<3x30xf32> to vector<3x16xf32>
      %228 = vector.extract_strided_slice %225 {offsets = [0, 7], sizes = [3, 16], strides = [1, 1]} : vector<3x30xf32> to vector<3x16xf32>
      %229 = vector.extract_strided_slice %225 {offsets = [0, 8], sizes = [3, 16], strides = [1, 1]} : vector<3x30xf32> to vector<3x16xf32>
      %230 = vector.extract_strided_slice %225 {offsets = [0, 9], sizes = [3, 16], strides = [1, 1]} : vector<3x30xf32> to vector<3x16xf32>
      %c4_i32 = arith.constant 4 : i32
      %231 = arith.addi %186, %c4_i32 : i32
      %c0_i32_202 = arith.constant 0 : i32
      %c0_i32_203 = arith.constant 0 : i32
      %c0_i32_204 = arith.constant 0 : i32
      %232 = tpu.memref_slice %arg2[%c0_i32, %c0_i32_24, %c0_i32_202, %c0_i32_203, %c0_i32_204] : memref<1x1x22x3x30xf32, #tpu.memory_space<vmem>> -> memref<1x1x22x3x30xf32, #tpu.memory_space<vmem>>
      %233 = tpu.memref_squeeze %232 : memref<1x1x22x3x30xf32, #tpu.memory_space<vmem>> -> memref<22x3x30xf32, #tpu.memory_space<vmem>>
      %234 = arith.index_cast %231 : i32 to index
      %c0_205 = arith.constant 0 : index
      %c0_206 = arith.constant 0 : index
      %235 = vector.load %233[%234, %c0_205, %c0_206] : memref<22x3x30xf32, #tpu.memory_space<vmem>>, vector<1x3x30xf32>
      %236 = vector.shape_cast %235 : vector<1x3x30xf32> to vector<3x30xf32>
      %237 = vector.extract_strided_slice %236 {offsets = [0, 5], sizes = [3, 16], strides = [1, 1]} : vector<3x30xf32> to vector<3x16xf32>
      %238 = vector.extract_strided_slice %236 {offsets = [0, 6], sizes = [3, 16], strides = [1, 1]} : vector<3x30xf32> to vector<3x16xf32>
      %239 = vector.extract_strided_slice %236 {offsets = [0, 7], sizes = [3, 16], strides = [1, 1]} : vector<3x30xf32> to vector<3x16xf32>
      %240 = vector.extract_strided_slice %236 {offsets = [0, 8], sizes = [3, 16], strides = [1, 1]} : vector<3x30xf32> to vector<3x16xf32>
      %241 = vector.extract_strided_slice %236 {offsets = [0, 9], sizes = [3, 16], strides = [1, 1]} : vector<3x30xf32> to vector<3x16xf32>
      %242 = tpu.concatenate %193, %194, %195, %196, %197, %204, %205, %206, %207, %208, %215, %216, %217, %218, %219, %226 in 0 : vector<3x16xf32>, vector<3x16xf32>, vector<3x16xf32>, vector<3x16xf32>, vector<3x16xf32>, vector<3x16xf32>, vector<3x16xf32>, vector<3x16xf32>, vector<3x16xf32>, vector<3x16xf32>, vector<3x16xf32>, vector<3x16xf32>, vector<3x16xf32>, vector<3x16xf32>, vector<3x16xf32>, vector<3x16xf32> -> vector<48x16xf32>
      %243 = tpu.concatenate %227, %228, %229, %230, %237, %238, %239, %240, %241 in 0 : vector<3x16xf32>, vector<3x16xf32>, vector<3x16xf32>, vector<3x16xf32>, vector<3x16xf32>, vector<3x16xf32>, vector<3x16xf32>, vector<3x16xf32>, vector<3x16xf32> -> vector<27x16xf32>
      %244 = tpu.concatenate %242, %243 in 0 : vector<48x16xf32>, vector<27x16xf32> -> vector<75x16xf32>
      %cst_207 = arith.constant dense<0.000000e+00> : vector<16x16xf32>
      %245 = tpu.matmul %8, %244, %cst_207 {dimension_numbers = #tpu.dot_dimension_numbers<[1], [0], [0], [1], [0, 0, 1, 1], [], []>} : vector<16x75xf32>, vector<75x16xf32>, vector<16x16xf32> -> vector<16x16xf32>
      %246 = vector.broadcast %11 : vector<16x1xf32> to vector<16x16xf32>
      %247 = arith.addf %245, %246 : vector<16x16xf32>
      %cst_208 = arith.constant 0.000000e+00 : f32
      %248 = vector.broadcast %cst_208 : f32 to vector<16x16xf32>
      %249 = arith.maximumf %247, %248 : vector<16x16xf32>
      %c0_i32_209 = arith.constant 0 : i32
      %250 = arith.cmpi sgt, %arg1, %c0_i32_209 : i32
      %c5_i32 = arith.constant 5 : i32
      %251 = arith.cmpi sge, %186, %c5_i32 : i32
      %252 = arith.ori %250, %251 : i1
      %c1_i32_210 = arith.constant 1 : i32
      %253 = arith.cmpi slt, %arg1, %c1_i32_210 : i32
      %c13_i32 = arith.constant 13 : i32
      %254 = arith.cmpi slt, %186, %c13_i32 : i32
      %255 = arith.ori %253, %254 : i1
      %256 = arith.andi %252, %255 : i1
      %cst_211 = arith.constant 0.000000e+00 : f32
      %257 = vector.broadcast %cst_211 : f32 to vector<16x16xf32>
      %258 = arith.select %256, %249, %257 : vector<16x16xf32>
      %259 = arith.index_cast %186 : i32 to index
      %c0_212 = arith.constant 0 : index
      %c5 = arith.constant 5 : index
      %260 = vector.load %arg10[%259, %c0_212, %c5] : memref<18x16x26xf32, #tpu.memory_space<vmem>>, vector<1x16x16xf32>
      %261 = vector.shape_cast %260 : vector<1x16x16xf32> to vector<16x16xf32>
      %262 = vector.shape_cast %258 : vector<16x16xf32> to vector<1x16x16xf32>
      tpu.vector_store %arg10[%259, %c0_212, %c5], %262 {strides = array<i32>} : memref<18x16x26xf32, #tpu.memory_space<vmem>>, vector<1x16x16xf32>,
    }
    %c18_i32_26 = arith.constant 18 : i32
    %c0_i32_27 = arith.constant 0 : i32
    %c14_i32 = arith.constant 14 : i32
    %15 = arith.addi %c0_i32_27, %c14_i32 : i32
    %c1_i32_28 = arith.constant 1 : i32
    scf.for %arg13 = %c0_i32_27 to %15 step %c1_i32_28  : i32 {
      %c1_i32_178 = arith.constant 1 : i32
      %185 = arith.muli %arg13, %c1_i32_178 : i32
      %c0_i32_179 = arith.constant 0 : i32
      %186 = arith.addi %c0_i32_179, %185 : i32
      %c0_i32_180 = arith.constant 0 : i32
      %187 = arith.addi %186, %c0_i32_180 : i32
      %188 = arith.index_cast %187 : i32 to index
      %c0_181 = arith.constant 0 : index
      %c0_182 = arith.constant 0 : index
      %189 = vector.load %arg10[%188, %c0_181, %c0_182] : memref<18x16x26xf32, #tpu.memory_space<vmem>>, vector<1x16x26xf32>
      %190 = vector.shape_cast %189 : vector<1x16x26xf32> to vector<16x26xf32>
      %191 = vector.extract_strided_slice %190 {offsets = [0, 3], sizes = [16, 16], strides = [1, 1]} : vector<16x26xf32> to vector<16x16xf32>
      %192 = vector.extract_strided_slice %190 {offsets = [0, 4], sizes = [16, 16], strides = [1, 1]} : vector<16x26xf32> to vector<16x16xf32>
      %193 = vector.extract_strided_slice %190 {offsets = [0, 5], sizes = [16, 16], strides = [1, 1]} : vector<16x26xf32> to vector<16x16xf32>
      %194 = vector.extract_strided_slice %190 {offsets = [0, 6], sizes = [16, 16], strides = [1, 1]} : vector<16x26xf32> to vector<16x16xf32>
      %195 = vector.extract_strided_slice %190 {offsets = [0, 7], sizes = [16, 16], strides = [1, 1]} : vector<16x26xf32> to vector<16x16xf32>
      %c1_i32_183 = arith.constant 1 : i32
      %196 = arith.addi %186, %c1_i32_183 : i32
      %197 = arith.index_cast %196 : i32 to index
      %c0_184 = arith.constant 0 : index
      %c0_185 = arith.constant 0 : index
      %198 = vector.load %arg10[%197, %c0_184, %c0_185] : memref<18x16x26xf32, #tpu.memory_space<vmem>>, vector<1x16x26xf32>
      %199 = vector.shape_cast %198 : vector<1x16x26xf32> to vector<16x26xf32>
      %200 = vector.extract_strided_slice %199 {offsets = [0, 3], sizes = [16, 16], strides = [1, 1]} : vector<16x26xf32> to vector<16x16xf32>
      %201 = vector.extract_strided_slice %199 {offsets = [0, 4], sizes = [16, 16], strides = [1, 1]} : vector<16x26xf32> to vector<16x16xf32>
      %202 = vector.extract_strided_slice %199 {offsets = [0, 5], sizes = [16, 16], strides = [1, 1]} : vector<16x26xf32> to vector<16x16xf32>
      %203 = vector.extract_strided_slice %199 {offsets = [0, 6], sizes = [16, 16], strides = [1, 1]} : vector<16x26xf32> to vector<16x16xf32>
      %204 = vector.extract_strided_slice %199 {offsets = [0, 7], sizes = [16, 16], strides = [1, 1]} : vector<16x26xf32> to vector<16x16xf32>
      %c2_i32 = arith.constant 2 : i32
      %205 = arith.addi %186, %c2_i32 : i32
      %206 = arith.index_cast %205 : i32 to index
      %c0_186 = arith.constant 0 : index
      %c0_187 = arith.constant 0 : index
      %207 = vector.load %arg10[%206, %c0_186, %c0_187] : memref<18x16x26xf32, #tpu.memory_space<vmem>>, vector<1x16x26xf32>
      %208 = vector.shape_cast %207 : vector<1x16x26xf32> to vector<16x26xf32>
      %209 = vector.extract_strided_slice %208 {offsets = [0, 3], sizes = [16, 16], strides = [1, 1]} : vector<16x26xf32> to vector<16x16xf32>
      %210 = vector.extract_strided_slice %208 {offsets = [0, 4], sizes = [16, 16], strides = [1, 1]} : vector<16x26xf32> to vector<16x16xf32>
      %211 = vector.extract_strided_slice %208 {offsets = [0, 5], sizes = [16, 16], strides = [1, 1]} : vector<16x26xf32> to vector<16x16xf32>
      %212 = vector.extract_strided_slice %208 {offsets = [0, 6], sizes = [16, 16], strides = [1, 1]} : vector<16x26xf32> to vector<16x16xf32>
      %213 = vector.extract_strided_slice %208 {offsets = [0, 7], sizes = [16, 16], strides = [1, 1]} : vector<16x26xf32> to vector<16x16xf32>
      %c3_i32 = arith.constant 3 : i32
      %214 = arith.addi %186, %c3_i32 : i32
      %215 = arith.index_cast %214 : i32 to index
      %c0_188 = arith.constant 0 : index
      %c0_189 = arith.constant 0 : index
      %216 = vector.load %arg10[%215, %c0_188, %c0_189] : memref<18x16x26xf32, #tpu.memory_space<vmem>>, vector<1x16x26xf32>
      %217 = vector.shape_cast %216 : vector<1x16x26xf32> to vector<16x26xf32>
      %218 = vector.extract_strided_slice %217 {offsets = [0, 3], sizes = [16, 16], strides = [1, 1]} : vector<16x26xf32> to vector<16x16xf32>
      %219 = vector.extract_strided_slice %217 {offsets = [0, 4], sizes = [16, 16], strides = [1, 1]} : vector<16x26xf32> to vector<16x16xf32>
      %220 = vector.extract_strided_slice %217 {offsets = [0, 5], sizes = [16, 16], strides = [1, 1]} : vector<16x26xf32> to vector<16x16xf32>
      %221 = vector.extract_strided_slice %217 {offsets = [0, 6], sizes = [16, 16], strides = [1, 1]} : vector<16x26xf32> to vector<16x16xf32>
      %222 = vector.extract_strided_slice %217 {offsets = [0, 7], sizes = [16, 16], strides = [1, 1]} : vector<16x26xf32> to vector<16x16xf32>
      %c4_i32 = arith.constant 4 : i32
      %223 = arith.addi %186, %c4_i32 : i32
      %224 = arith.index_cast %223 : i32 to index
      %c0_190 = arith.constant 0 : index
      %c0_191 = arith.constant 0 : index
      %225 = vector.load %arg10[%224, %c0_190, %c0_191] : memref<18x16x26xf32, #tpu.memory_space<vmem>>, vector<1x16x26xf32>
      %226 = vector.shape_cast %225 : vector<1x16x26xf32> to vector<16x26xf32>
      %227 = vector.extract_strided_slice %226 {offsets = [0, 3], sizes = [16, 16], strides = [1, 1]} : vector<16x26xf32> to vector<16x16xf32>
      %228 = vector.extract_strided_slice %226 {offsets = [0, 4], sizes = [16, 16], strides = [1, 1]} : vector<16x26xf32> to vector<16x16xf32>
      %229 = vector.extract_strided_slice %226 {offsets = [0, 5], sizes = [16, 16], strides = [1, 1]} : vector<16x26xf32> to vector<16x16xf32>
      %230 = vector.extract_strided_slice %226 {offsets = [0, 6], sizes = [16, 16], strides = [1, 1]} : vector<16x26xf32> to vector<16x16xf32>
      %231 = vector.extract_strided_slice %226 {offsets = [0, 7], sizes = [16, 16], strides = [1, 1]} : vector<16x26xf32> to vector<16x16xf32>
      %232 = tpu.concatenate %191, %192, %193, %194, %195, %200, %201, %202, %203, %204, %209, %210, %211, %212, %213, %218 in 0 : vector<16x16xf32>, vector<16x16xf32>, vector<16x16xf32>, vector<16x16xf32>, vector<16x16xf32>, vector<16x16xf32>, vector<16x16xf32>, vector<16x16xf32>, vector<16x16xf32>, vector<16x16xf32>, vector<16x16xf32>, vector<16x16xf32>, vector<16x16xf32>, vector<16x16xf32>, vector<16x16xf32>, vector<16x16xf32> -> vector<256x16xf32>
      %233 = tpu.concatenate %219, %220, %221, %222, %227, %228, %229, %230, %231 in 0 : vector<16x16xf32>, vector<16x16xf32>, vector<16x16xf32>, vector<16x16xf32>, vector<16x16xf32>, vector<16x16xf32>, vector<16x16xf32>, vector<16x16xf32>, vector<16x16xf32> -> vector<144x16xf32>
      %234 = tpu.concatenate %232, %233 in 0 : vector<256x16xf32>, vector<144x16xf32> -> vector<400x16xf32>
      %cst_192 = arith.constant dense<0.000000e+00> : vector<16x16xf32>
      %235 = tpu.matmul %9, %234, %cst_192 {dimension_numbers = #tpu.dot_dimension_numbers<[1], [0], [0], [1], [0, 0, 1, 1], [], []>} : vector<16x400xf32>, vector<400x16xf32>, vector<16x16xf32> -> vector<16x16xf32>
      %236 = vector.broadcast %12 : vector<16x1xf32> to vector<16x16xf32>
      %237 = arith.addf %235, %236 : vector<16x16xf32>
      %cst_193 = arith.constant 0.000000e+00 : f32
      %238 = vector.broadcast %cst_193 : f32 to vector<16x16xf32>
      %239 = arith.maximumf %237, %238 : vector<16x16xf32>
      %c0_i32_194 = arith.constant 0 : i32
      %240 = arith.cmpi sgt, %arg1, %c0_i32_194 : i32
      %c3_i32_195 = arith.constant 3 : i32
      %241 = arith.cmpi sge, %186, %c3_i32_195 : i32
      %242 = arith.ori %240, %241 : i1
      %c1_i32_196 = arith.constant 1 : i32
      %243 = arith.cmpi slt, %arg1, %c1_i32_196 : i32
      %c11_i32 = arith.constant 11 : i32
      %244 = arith.cmpi slt, %186, %c11_i32 : i32
      %245 = arith.ori %243, %244 : i1
      %246 = arith.andi %242, %245 : i1
      %cst_197 = arith.constant 0.000000e+00 : f32
      %247 = vector.broadcast %cst_197 : f32 to vector<16x16xf32>
      %248 = arith.select %246, %239, %247 : vector<16x16xf32>
      %249 = arith.index_cast %186 : i32 to index
      %c0_198 = arith.constant 0 : index
      %c3_199 = arith.constant 3 : index
      %250 = vector.load %arg11[%249, %c0_198, %c3_199] : memref<14x16x22xf32, #tpu.memory_space<vmem>>, vector<1x16x16xf32>
      %251 = vector.shape_cast %250 : vector<1x16x16xf32> to vector<16x16xf32>
      %252 = vector.shape_cast %248 : vector<16x16xf32> to vector<1x16x16xf32>
      tpu.vector_store %arg11[%249, %c0_198, %c3_199], %252 {strides = array<i32>} : memref<14x16x22xf32, #tpu.memory_space<vmem>>, vector<1x16x16xf32>,
    }
    %c14_i32_29 = arith.constant 14 : i32
    %c0_i32_30 = arith.constant 0 : i32
    %c10_i32 = arith.constant 10 : i32
    %16 = arith.addi %c0_i32_30, %c10_i32 : i32
    %c1_i32_31 = arith.constant 1 : i32
    scf.for %arg13 = %c0_i32_30 to %16 step %c1_i32_31  : i32 {
      %c1_i32_178 = arith.constant 1 : i32
      %185 = arith.muli %arg13, %c1_i32_178 : i32
      %c0_i32_179 = arith.constant 0 : i32
      %186 = arith.addi %c0_i32_179, %185 : i32
      %c0_i32_180 = arith.constant 0 : i32
      %187 = arith.addi %186, %c0_i32_180 : i32
      %188 = arith.index_cast %187 : i32 to index
      %c0_181 = arith.constant 0 : index
      %c0_182 = arith.constant 0 : index
      %189 = vector.load %arg11[%188, %c0_181, %c0_182] : memref<14x16x22xf32, #tpu.memory_space<vmem>>, vector<1x16x22xf32>
      %190 = vector.shape_cast %189 : vector<1x16x22xf32> to vector<16x22xf32>
      %191 = vector.extract_strided_slice %190 {offsets = [0, 0], sizes = [16, 18], strides = [1, 1]} : vector<16x22xf32> to vector<16x18xf32>
      %192 = vector.extract_strided_slice %190 {offsets = [0, 1], sizes = [16, 18], strides = [1, 1]} : vector<16x22xf32> to vector<16x18xf32>
      %193 = vector.extract_strided_slice %190 {offsets = [0, 2], sizes = [16, 18], strides = [1, 1]} : vector<16x22xf32> to vector<16x18xf32>
      %194 = vector.extract_strided_slice %190 {offsets = [0, 3], sizes = [16, 18], strides = [1, 1]} : vector<16x22xf32> to vector<16x18xf32>
      %195 = vector.extract_strided_slice %190 {offsets = [0, 4], sizes = [16, 18], strides = [1, 1]} : vector<16x22xf32> to vector<16x18xf32>
      %c1_i32_183 = arith.constant 1 : i32
      %196 = arith.addi %186, %c1_i32_183 : i32
      %197 = arith.index_cast %196 : i32 to index
      %c0_184 = arith.constant 0 : index
      %c0_185 = arith.constant 0 : index
      %198 = vector.load %arg11[%197, %c0_184, %c0_185] : memref<14x16x22xf32, #tpu.memory_space<vmem>>, vector<1x16x22xf32>
      %199 = vector.shape_cast %198 : vector<1x16x22xf32> to vector<16x22xf32>
      %200 = vector.extract_strided_slice %199 {offsets = [0, 0], sizes = [16, 18], strides = [1, 1]} : vector<16x22xf32> to vector<16x18xf32>
      %201 = vector.extract_strided_slice %199 {offsets = [0, 1], sizes = [16, 18], strides = [1, 1]} : vector<16x22xf32> to vector<16x18xf32>
      %202 = vector.extract_strided_slice %199 {offsets = [0, 2], sizes = [16, 18], strides = [1, 1]} : vector<16x22xf32> to vector<16x18xf32>
      %203 = vector.extract_strided_slice %199 {offsets = [0, 3], sizes = [16, 18], strides = [1, 1]} : vector<16x22xf32> to vector<16x18xf32>
      %204 = vector.extract_strided_slice %199 {offsets = [0, 4], sizes = [16, 18], strides = [1, 1]} : vector<16x22xf32> to vector<16x18xf32>
      %c2_i32 = arith.constant 2 : i32
      %205 = arith.addi %186, %c2_i32 : i32
      %206 = arith.index_cast %205 : i32 to index
      %c0_186 = arith.constant 0 : index
      %c0_187 = arith.constant 0 : index
      %207 = vector.load %arg11[%206, %c0_186, %c0_187] : memref<14x16x22xf32, #tpu.memory_space<vmem>>, vector<1x16x22xf32>
      %208 = vector.shape_cast %207 : vector<1x16x22xf32> to vector<16x22xf32>
      %209 = vector.extract_strided_slice %208 {offsets = [0, 0], sizes = [16, 18], strides = [1, 1]} : vector<16x22xf32> to vector<16x18xf32>
      %210 = vector.extract_strided_slice %208 {offsets = [0, 1], sizes = [16, 18], strides = [1, 1]} : vector<16x22xf32> to vector<16x18xf32>
      %211 = vector.extract_strided_slice %208 {offsets = [0, 2], sizes = [16, 18], strides = [1, 1]} : vector<16x22xf32> to vector<16x18xf32>
      %212 = vector.extract_strided_slice %208 {offsets = [0, 3], sizes = [16, 18], strides = [1, 1]} : vector<16x22xf32> to vector<16x18xf32>
      %213 = vector.extract_strided_slice %208 {offsets = [0, 4], sizes = [16, 18], strides = [1, 1]} : vector<16x22xf32> to vector<16x18xf32>
      %c3_i32 = arith.constant 3 : i32
      %214 = arith.addi %186, %c3_i32 : i32
      %215 = arith.index_cast %214 : i32 to index
      %c0_188 = arith.constant 0 : index
      %c0_189 = arith.constant 0 : index
      %216 = vector.load %arg11[%215, %c0_188, %c0_189] : memref<14x16x22xf32, #tpu.memory_space<vmem>>, vector<1x16x22xf32>
      %217 = vector.shape_cast %216 : vector<1x16x22xf32> to vector<16x22xf32>
      %218 = vector.extract_strided_slice %217 {offsets = [0, 0], sizes = [16, 18], strides = [1, 1]} : vector<16x22xf32> to vector<16x18xf32>
      %219 = vector.extract_strided_slice %217 {offsets = [0, 1], sizes = [16, 18], strides = [1, 1]} : vector<16x22xf32> to vector<16x18xf32>
      %220 = vector.extract_strided_slice %217 {offsets = [0, 2], sizes = [16, 18], strides = [1, 1]} : vector<16x22xf32> to vector<16x18xf32>
      %221 = vector.extract_strided_slice %217 {offsets = [0, 3], sizes = [16, 18], strides = [1, 1]} : vector<16x22xf32> to vector<16x18xf32>
      %222 = vector.extract_strided_slice %217 {offsets = [0, 4], sizes = [16, 18], strides = [1, 1]} : vector<16x22xf32> to vector<16x18xf32>
      %c4_i32 = arith.constant 4 : i32
      %223 = arith.addi %186, %c4_i32 : i32
      %224 = arith.index_cast %223 : i32 to index
      %c0_190 = arith.constant 0 : index
      %c0_191 = arith.constant 0 : index
      %225 = vector.load %arg11[%224, %c0_190, %c0_191] : memref<14x16x22xf32, #tpu.memory_space<vmem>>, vector<1x16x22xf32>
      %226 = vector.shape_cast %225 : vector<1x16x22xf32> to vector<16x22xf32>
      %227 = vector.extract_strided_slice %226 {offsets = [0, 0], sizes = [16, 18], strides = [1, 1]} : vector<16x22xf32> to vector<16x18xf32>
      %228 = vector.extract_strided_slice %226 {offsets = [0, 1], sizes = [16, 18], strides = [1, 1]} : vector<16x22xf32> to vector<16x18xf32>
      %229 = vector.extract_strided_slice %226 {offsets = [0, 2], sizes = [16, 18], strides = [1, 1]} : vector<16x22xf32> to vector<16x18xf32>
      %230 = vector.extract_strided_slice %226 {offsets = [0, 3], sizes = [16, 18], strides = [1, 1]} : vector<16x22xf32> to vector<16x18xf32>
      %231 = vector.extract_strided_slice %226 {offsets = [0, 4], sizes = [16, 18], strides = [1, 1]} : vector<16x22xf32> to vector<16x18xf32>
      %232 = tpu.concatenate %191, %192, %193, %194, %195, %200, %201, %202, %203, %204, %209, %210, %211, %212, %213, %218 in 0 : vector<16x18xf32>, vector<16x18xf32>, vector<16x18xf32>, vector<16x18xf32>, vector<16x18xf32>, vector<16x18xf32>, vector<16x18xf32>, vector<16x18xf32>, vector<16x18xf32>, vector<16x18xf32>, vector<16x18xf32>, vector<16x18xf32>, vector<16x18xf32>, vector<16x18xf32>, vector<16x18xf32>, vector<16x18xf32> -> vector<256x18xf32>
      %233 = tpu.concatenate %219, %220, %221, %222, %227, %228, %229, %230, %231 in 0 : vector<16x18xf32>, vector<16x18xf32>, vector<16x18xf32>, vector<16x18xf32>, vector<16x18xf32>, vector<16x18xf32>, vector<16x18xf32>, vector<16x18xf32>, vector<16x18xf32> -> vector<144x18xf32>
      %234 = tpu.concatenate %232, %233 in 0 : vector<256x18xf32>, vector<144x18xf32> -> vector<400x18xf32>
      %cst_192 = arith.constant dense<0.000000e+00> : vector<2x18xf32>
      %235 = tpu.matmul %10, %234, %cst_192 {dimension_numbers = #tpu.dot_dimension_numbers<[1], [0], [0], [1], [0, 0, 1, 1], [], []>} : vector<2x400xf32>, vector<400x18xf32>, vector<2x18xf32> -> vector<2x18xf32>
      %236 = vector.broadcast %13 : vector<2x1xf32> to vector<2x18xf32>
      %237 = arith.addf %235, %236 : vector<2x18xf32>
      %238 = arith.index_cast %186 : i32 to index
      %c0_193 = arith.constant 0 : index
      %c0_194 = arith.constant 0 : index
      %239 = vector.load %arg12[%238, %c0_193, %c0_194] : memref<10x2x18xf32, #tpu.memory_space<vmem>>, vector<1x2x18xf32>
      %240 = vector.shape_cast %239 : vector<1x2x18xf32> to vector<2x18xf32>
      %241 = vector.shape_cast %237 : vector<2x18xf32> to vector<1x2x18xf32>
      tpu.vector_store %arg12[%238, %c0_193, %c0_194], %241 {strides = array<i32>} : memref<10x2x18xf32, #tpu.memory_space<vmem>>, vector<1x2x18xf32>,
    }
    %c10_i32_32 = arith.constant 10 : i32
    %c0_33 = arith.constant 0 : index
    %c0_34 = arith.constant 0 : index
    %c1 = arith.constant 1 : index
    %17 = vector.load %arg12[%c0_33, %c0_34, %c1] : memref<10x2x18xf32, #tpu.memory_space<vmem>>, vector<10x2x1xf32>
    %c0_35 = arith.constant 0 : index
    %c0_36 = arith.constant 0 : index
    %c0_37 = arith.constant 0 : index
    %18 = vector.load %arg12[%c0_35, %c0_36, %c0_37] : memref<10x2x18xf32, #tpu.memory_space<vmem>>, vector<10x2x1xf32>
    tpu.vector_store %arg12[%c0_35, %c0_36, %c0_37], %17 {strides = array<i32>} : memref<10x2x18xf32, #tpu.memory_space<vmem>>, vector<10x2x1xf32>,
    %c0_38 = arith.constant 0 : index
    %c0_39 = arith.constant 0 : index
    %c16 = arith.constant 16 : index
    %19 = vector.load %arg12[%c0_38, %c0_39, %c16] : memref<10x2x18xf32, #tpu.memory_space<vmem>>, vector<10x2x1xf32>
    %c0_40 = arith.constant 0 : index
    %c0_41 = arith.constant 0 : index
    %c17 = arith.constant 17 : index
    %20 = vector.load %arg12[%c0_40, %c0_41, %c17] : memref<10x2x18xf32, #tpu.memory_space<vmem>>, vector<10x2x1xf32>
    tpu.vector_store %arg12[%c0_40, %c0_41, %c17], %19 {strides = array<i32>} : memref<10x2x18xf32, #tpu.memory_space<vmem>>, vector<10x2x1xf32>,
    %c0_i32_42 = arith.constant 0 : i32
    %21 = arith.cmpi eq, %arg1, %c0_i32_42 : i32
    %22 = arith.extui %21 : i1 to i32
    %c0_i32_43 = arith.constant 0 : i32
    %23 = arith.cmpi ne, %22, %c0_i32_43 : i32
    scf.if %23 {
      %c1_178 = arith.constant 1 : index
      %c0_179 = arith.constant 0 : index
      %c0_180 = arith.constant 0 : index
      %185 = vector.load %arg12[%c1_178, %c0_179, %c0_180] : memref<10x2x18xf32, #tpu.memory_space<vmem>>, vector<1x2x18xf32>
      %c0_181 = arith.constant 0 : index
      %c0_182 = arith.constant 0 : index
      %c0_183 = arith.constant 0 : index
      %186 = vector.load %arg12[%c0_181, %c0_182, %c0_183] : memref<10x2x18xf32, #tpu.memory_space<vmem>>, vector<1x2x18xf32>
      tpu.vector_store %arg12[%c0_181, %c0_182, %c0_183], %185 {strides = array<i32>} : memref<10x2x18xf32, #tpu.memory_space<vmem>>, vector<1x2x18xf32>,
    } else {
    }
    %c1_i32_44 = arith.constant 1 : i32
    %24 = arith.cmpi eq, %arg1, %c1_i32_44 : i32
    %25 = arith.extui %24 : i1 to i32
    %c0_i32_45 = arith.constant 0 : i32
    %26 = arith.cmpi ne, %25, %c0_i32_45 : i32
    scf.if %26 {
      %c8 = arith.constant 8 : index
      %c0_178 = arith.constant 0 : index
      %c0_179 = arith.constant 0 : index
      %185 = vector.load %arg12[%c8, %c0_178, %c0_179] : memref<10x2x18xf32, #tpu.memory_space<vmem>>, vector<1x2x18xf32>
      %c9 = arith.constant 9 : index
      %c0_180 = arith.constant 0 : index
      %c0_181 = arith.constant 0 : index
      %186 = vector.load %arg12[%c9, %c0_180, %c0_181] : memref<10x2x18xf32, #tpu.memory_space<vmem>>, vector<1x2x18xf32>
      tpu.vector_store %arg12[%c9, %c0_180, %c0_181], %185 {strides = array<i32>} : memref<10x2x18xf32, #tpu.memory_space<vmem>>, vector<1x2x18xf32>,
    } else {
    }
    %c0_46 = arith.constant 0 : index
    %c0_47 = arith.constant 0 : index
    %c0_48 = arith.constant 0 : index
    %27 = vector.load %arg12[%c0_46, %c0_47, %c0_48] : memref<10x2x18xf32, #tpu.memory_space<vmem>>, vector<10x1x18xf32>
    %28 = vector.shape_cast %27 : vector<10x1x18xf32> to vector<10x18xf32>
    %29 = vector.extract_strided_slice %28 {offsets = [1, 1], sizes = [8, 16], strides = [1, 1]} : vector<10x18xf32> to vector<8x16xf32>
    %30 = vector.extract_strided_slice %28 {offsets = [0, 1], sizes = [8, 16], strides = [1, 1]} : vector<10x18xf32> to vector<8x16xf32>
    %31 = vector.extract_strided_slice %28 {offsets = [2, 1], sizes = [8, 16], strides = [1, 1]} : vector<10x18xf32> to vector<8x16xf32>
    %32 = vector.extract_strided_slice %28 {offsets = [1, 0], sizes = [8, 16], strides = [1, 1]} : vector<10x18xf32> to vector<8x16xf32>
    %33 = vector.extract_strided_slice %28 {offsets = [1, 2], sizes = [8, 16], strides = [1, 1]} : vector<10x18xf32> to vector<8x16xf32>
    %34 = vector.extract_strided_slice %28 {offsets = [0, 0], sizes = [8, 16], strides = [1, 1]} : vector<10x18xf32> to vector<8x16xf32>
    %35 = vector.extract_strided_slice %28 {offsets = [0, 2], sizes = [8, 16], strides = [1, 1]} : vector<10x18xf32> to vector<8x16xf32>
    %36 = vector.extract_strided_slice %28 {offsets = [2, 0], sizes = [8, 16], strides = [1, 1]} : vector<10x18xf32> to vector<8x16xf32>
    %37 = vector.extract_strided_slice %28 {offsets = [2, 2], sizes = [8, 16], strides = [1, 1]} : vector<10x18xf32> to vector<8x16xf32>
    %cst_49 = arith.constant 6.250000e-02 : f32
    %38 = vector.broadcast %cst_49 : f32 to vector<8x16xf32>
    %39 = arith.mulf %38, %34 : vector<8x16xf32>
    %cst_50 = arith.constant 1.875000e-01 : f32
    %40 = vector.broadcast %cst_50 : f32 to vector<8x16xf32>
    %41 = arith.mulf %40, %30 : vector<8x16xf32>
    %42 = arith.addf %39, %41 : vector<8x16xf32>
    %cst_51 = arith.constant 1.875000e-01 : f32
    %43 = vector.broadcast %cst_51 : f32 to vector<8x16xf32>
    %44 = arith.mulf %43, %32 : vector<8x16xf32>
    %45 = arith.addf %42, %44 : vector<8x16xf32>
    %cst_52 = arith.constant 5.625000e-01 : f32
    %46 = vector.broadcast %cst_52 : f32 to vector<8x16xf32>
    %47 = arith.mulf %46, %29 : vector<8x16xf32>
    %48 = arith.addf %45, %47 : vector<8x16xf32>
    %c0_53 = arith.constant 0 : index
    %c0_54 = arith.constant 0 : index
    %c0_55 = arith.constant 0 : index
    %c0_56 = arith.constant 0 : index
    %c0_57 = arith.constant 0 : index
    %c0_58 = arith.constant 0 : index
    %49 = vector.load %arg9[%c0_53, %c0_54, %c0_55, %c0_56, %c0_57, %c0_58] : memref<1x2x2x4x8x16xf32, #tpu.memory_space<vmem>>, vector<1x1x1x1x8x16xf32>
    %50 = vector.shape_cast %49 : vector<1x1x1x1x8x16xf32> to vector<8x16xf32>
    %51 = vector.shape_cast %48 : vector<8x16xf32> to vector<1x1x1x1x8x16xf32>
    tpu.vector_store %arg9[%c0_53, %c0_54, %c0_55, %c0_56, %c0_57, %c0_58], %51 {strides = array<i32>} : memref<1x2x2x4x8x16xf32, #tpu.memory_space<vmem>>, vector<1x1x1x1x8x16xf32>,
    %cst_59 = arith.constant 1.875000e-01 : f32
    %52 = vector.broadcast %cst_59 : f32 to vector<8x16xf32>
    %53 = arith.mulf %52, %30 : vector<8x16xf32>
    %cst_60 = arith.constant 6.250000e-02 : f32
    %54 = vector.broadcast %cst_60 : f32 to vector<8x16xf32>
    %55 = arith.mulf %54, %35 : vector<8x16xf32>
    %56 = arith.addf %53, %55 : vector<8x16xf32>
    %cst_61 = arith.constant 5.625000e-01 : f32
    %57 = vector.broadcast %cst_61 : f32 to vector<8x16xf32>
    %58 = arith.mulf %57, %29 : vector<8x16xf32>
    %59 = arith.addf %56, %58 : vector<8x16xf32>
    %cst_62 = arith.constant 1.875000e-01 : f32
    %60 = vector.broadcast %cst_62 : f32 to vector<8x16xf32>
    %61 = arith.mulf %60, %33 : vector<8x16xf32>
    %62 = arith.addf %59, %61 : vector<8x16xf32>
    %c0_63 = arith.constant 0 : index
    %c0_64 = arith.constant 0 : index
    %c1_65 = arith.constant 1 : index
    %c0_66 = arith.constant 0 : index
    %c0_67 = arith.constant 0 : index
    %c0_68 = arith.constant 0 : index
    %63 = vector.load %arg9[%c0_63, %c0_64, %c1_65, %c0_66, %c0_67, %c0_68] : memref<1x2x2x4x8x16xf32, #tpu.memory_space<vmem>>, vector<1x1x1x1x8x16xf32>
    %64 = vector.shape_cast %63 : vector<1x1x1x1x8x16xf32> to vector<8x16xf32>
    %65 = vector.shape_cast %62 : vector<8x16xf32> to vector<1x1x1x1x8x16xf32>
    tpu.vector_store %arg9[%c0_63, %c0_64, %c1_65, %c0_66, %c0_67, %c0_68], %65 {strides = array<i32>} : memref<1x2x2x4x8x16xf32, #tpu.memory_space<vmem>>, vector<1x1x1x1x8x16xf32>,
    %cst_69 = arith.constant 1.875000e-01 : f32
    %66 = vector.broadcast %cst_69 : f32 to vector<8x16xf32>
    %67 = arith.mulf %66, %32 : vector<8x16xf32>
    %cst_70 = arith.constant 6.250000e-02 : f32
    %68 = vector.broadcast %cst_70 : f32 to vector<8x16xf32>
    %69 = arith.mulf %68, %36 : vector<8x16xf32>
    %70 = arith.addf %67, %69 : vector<8x16xf32>
    %cst_71 = arith.constant 5.625000e-01 : f32
    %71 = vector.broadcast %cst_71 : f32 to vector<8x16xf32>
    %72 = arith.mulf %71, %29 : vector<8x16xf32>
    %73 = arith.addf %70, %72 : vector<8x16xf32>
    %cst_72 = arith.constant 1.875000e-01 : f32
    %74 = vector.broadcast %cst_72 : f32 to vector<8x16xf32>
    %75 = arith.mulf %74, %31 : vector<8x16xf32>
    %76 = arith.addf %73, %75 : vector<8x16xf32>
    %c0_73 = arith.constant 0 : index
    %c1_74 = arith.constant 1 : index
    %c0_75 = arith.constant 0 : index
    %c0_76 = arith.constant 0 : index
    %c0_77 = arith.constant 0 : index
    %c0_78 = arith.constant 0 : index
    %77 = vector.load %arg9[%c0_73, %c1_74, %c0_75, %c0_76, %c0_77, %c0_78] : memref<1x2x2x4x8x16xf32, #tpu.memory_space<vmem>>, vector<1x1x1x1x8x16xf32>
    %78 = vector.shape_cast %77 : vector<1x1x1x1x8x16xf32> to vector<8x16xf32>
    %79 = vector.shape_cast %76 : vector<8x16xf32> to vector<1x1x1x1x8x16xf32>
    tpu.vector_store %arg9[%c0_73, %c1_74, %c0_75, %c0_76, %c0_77, %c0_78], %79 {strides = array<i32>} : memref<1x2x2x4x8x16xf32, #tpu.memory_space<vmem>>, vector<1x1x1x1x8x16xf32>,
    %cst_79 = arith.constant 5.625000e-01 : f32
    %80 = vector.broadcast %cst_79 : f32 to vector<8x16xf32>
    %81 = arith.mulf %80, %29 : vector<8x16xf32>
    %cst_80 = arith.constant 1.875000e-01 : f32
    %82 = vector.broadcast %cst_80 : f32 to vector<8x16xf32>
    %83 = arith.mulf %82, %33 : vector<8x16xf32>
    %84 = arith.addf %81, %83 : vector<8x16xf32>
    %cst_81 = arith.constant 1.875000e-01 : f32
    %85 = vector.broadcast %cst_81 : f32 to vector<8x16xf32>
    %86 = arith.mulf %85, %31 : vector<8x16xf32>
    %87 = arith.addf %84, %86 : vector<8x16xf32>
    %cst_82 = arith.constant 6.250000e-02 : f32
    %88 = vector.broadcast %cst_82 : f32 to vector<8x16xf32>
    %89 = arith.mulf %88, %37 : vector<8x16xf32>
    %90 = arith.addf %87, %89 : vector<8x16xf32>
    %c0_83 = arith.constant 0 : index
    %c1_84 = arith.constant 1 : index
    %c1_85 = arith.constant 1 : index
    %c0_86 = arith.constant 0 : index
    %c0_87 = arith.constant 0 : index
    %c0_88 = arith.constant 0 : index
    %91 = vector.load %arg9[%c0_83, %c1_84, %c1_85, %c0_86, %c0_87, %c0_88] : memref<1x2x2x4x8x16xf32, #tpu.memory_space<vmem>>, vector<1x1x1x1x8x16xf32>
    %92 = vector.shape_cast %91 : vector<1x1x1x1x8x16xf32> to vector<8x16xf32>
    %93 = vector.shape_cast %90 : vector<8x16xf32> to vector<1x1x1x1x8x16xf32>
    tpu.vector_store %arg9[%c0_83, %c1_84, %c1_85, %c0_86, %c0_87, %c0_88], %93 {strides = array<i32>} : memref<1x2x2x4x8x16xf32, #tpu.memory_space<vmem>>, vector<1x1x1x1x8x16xf32>,
    %c0_89 = arith.constant 0 : index
    %c0_90 = arith.constant 0 : index
    %c0_91 = arith.constant 0 : index
    %c2 = arith.constant 2 : index
    %c0_92 = arith.constant 0 : index
    %c0_93 = arith.constant 0 : index
    %94 = vector.load %arg9[%c0_89, %c0_90, %c0_91, %c2, %c0_92, %c0_93] : memref<1x2x2x4x8x16xf32, #tpu.memory_space<vmem>>, vector<1x1x1x1x8x16xf32>
    %95 = vector.shape_cast %94 : vector<1x1x1x1x8x16xf32> to vector<8x16xf32>
    %96 = vector.shape_cast %29 : vector<8x16xf32> to vector<1x1x1x1x8x16xf32>
    tpu.vector_store %arg9[%c0_89, %c0_90, %c0_91, %c2, %c0_92, %c0_93], %96 {strides = array<i32>} : memref<1x2x2x4x8x16xf32, #tpu.memory_space<vmem>>, vector<1x1x1x1x8x16xf32>,
    %c0_94 = arith.constant 0 : index
    %c0_95 = arith.constant 0 : index
    %c1_96 = arith.constant 1 : index
    %c2_97 = arith.constant 2 : index
    %c0_98 = arith.constant 0 : index
    %c0_99 = arith.constant 0 : index
    %97 = vector.load %arg9[%c0_94, %c0_95, %c1_96, %c2_97, %c0_98, %c0_99] : memref<1x2x2x4x8x16xf32, #tpu.memory_space<vmem>>, vector<1x1x1x1x8x16xf32>
    %98 = vector.shape_cast %97 : vector<1x1x1x1x8x16xf32> to vector<8x16xf32>
    %99 = vector.shape_cast %29 : vector<8x16xf32> to vector<1x1x1x1x8x16xf32>
    tpu.vector_store %arg9[%c0_94, %c0_95, %c1_96, %c2_97, %c0_98, %c0_99], %99 {strides = array<i32>} : memref<1x2x2x4x8x16xf32, #tpu.memory_space<vmem>>, vector<1x1x1x1x8x16xf32>,
    %c0_100 = arith.constant 0 : index
    %c1_101 = arith.constant 1 : index
    %c0_102 = arith.constant 0 : index
    %c2_103 = arith.constant 2 : index
    %c0_104 = arith.constant 0 : index
    %c0_105 = arith.constant 0 : index
    %100 = vector.load %arg9[%c0_100, %c1_101, %c0_102, %c2_103, %c0_104, %c0_105] : memref<1x2x2x4x8x16xf32, #tpu.memory_space<vmem>>, vector<1x1x1x1x8x16xf32>
    %101 = vector.shape_cast %100 : vector<1x1x1x1x8x16xf32> to vector<8x16xf32>
    %102 = vector.shape_cast %29 : vector<8x16xf32> to vector<1x1x1x1x8x16xf32>
    tpu.vector_store %arg9[%c0_100, %c1_101, %c0_102, %c2_103, %c0_104, %c0_105], %102 {strides = array<i32>} : memref<1x2x2x4x8x16xf32, #tpu.memory_space<vmem>>, vector<1x1x1x1x8x16xf32>,
    %c0_106 = arith.constant 0 : index
    %c1_107 = arith.constant 1 : index
    %c1_108 = arith.constant 1 : index
    %c2_109 = arith.constant 2 : index
    %c0_110 = arith.constant 0 : index
    %c0_111 = arith.constant 0 : index
    %103 = vector.load %arg9[%c0_106, %c1_107, %c1_108, %c2_109, %c0_110, %c0_111] : memref<1x2x2x4x8x16xf32, #tpu.memory_space<vmem>>, vector<1x1x1x1x8x16xf32>
    %104 = vector.shape_cast %103 : vector<1x1x1x1x8x16xf32> to vector<8x16xf32>
    %105 = vector.shape_cast %29 : vector<8x16xf32> to vector<1x1x1x1x8x16xf32>
    tpu.vector_store %arg9[%c0_106, %c1_107, %c1_108, %c2_109, %c0_110, %c0_111], %105 {strides = array<i32>} : memref<1x2x2x4x8x16xf32, #tpu.memory_space<vmem>>, vector<1x1x1x1x8x16xf32>,
    %c0_112 = arith.constant 0 : index
    %c1_113 = arith.constant 1 : index
    %c0_114 = arith.constant 0 : index
    %106 = vector.load %arg12[%c0_112, %c1_113, %c0_114] : memref<10x2x18xf32, #tpu.memory_space<vmem>>, vector<10x1x18xf32>
    %107 = vector.shape_cast %106 : vector<10x1x18xf32> to vector<10x18xf32>
    %108 = vector.extract_strided_slice %107 {offsets = [1, 1], sizes = [8, 16], strides = [1, 1]} : vector<10x18xf32> to vector<8x16xf32>
    %109 = vector.extract_strided_slice %107 {offsets = [0, 1], sizes = [8, 16], strides = [1, 1]} : vector<10x18xf32> to vector<8x16xf32>
    %110 = vector.extract_strided_slice %107 {offsets = [2, 1], sizes = [8, 16], strides = [1, 1]} : vector<10x18xf32> to vector<8x16xf32>
    %111 = vector.extract_strided_slice %107 {offsets = [1, 0], sizes = [8, 16], strides = [1, 1]} : vector<10x18xf32> to vector<8x16xf32>
    %112 = vector.extract_strided_slice %107 {offsets = [1, 2], sizes = [8, 16], strides = [1, 1]} : vector<10x18xf32> to vector<8x16xf32>
    %113 = vector.extract_strided_slice %107 {offsets = [0, 0], sizes = [8, 16], strides = [1, 1]} : vector<10x18xf32> to vector<8x16xf32>
    %114 = vector.extract_strided_slice %107 {offsets = [0, 2], sizes = [8, 16], strides = [1, 1]} : vector<10x18xf32> to vector<8x16xf32>
    %115 = vector.extract_strided_slice %107 {offsets = [2, 0], sizes = [8, 16], strides = [1, 1]} : vector<10x18xf32> to vector<8x16xf32>
    %116 = vector.extract_strided_slice %107 {offsets = [2, 2], sizes = [8, 16], strides = [1, 1]} : vector<10x18xf32> to vector<8x16xf32>
    %cst_115 = arith.constant 6.250000e-02 : f32
    %117 = vector.broadcast %cst_115 : f32 to vector<8x16xf32>
    %118 = arith.mulf %117, %113 : vector<8x16xf32>
    %cst_116 = arith.constant 1.875000e-01 : f32
    %119 = vector.broadcast %cst_116 : f32 to vector<8x16xf32>
    %120 = arith.mulf %119, %109 : vector<8x16xf32>
    %121 = arith.addf %118, %120 : vector<8x16xf32>
    %cst_117 = arith.constant 1.875000e-01 : f32
    %122 = vector.broadcast %cst_117 : f32 to vector<8x16xf32>
    %123 = arith.mulf %122, %111 : vector<8x16xf32>
    %124 = arith.addf %121, %123 : vector<8x16xf32>
    %cst_118 = arith.constant 5.625000e-01 : f32
    %125 = vector.broadcast %cst_118 : f32 to vector<8x16xf32>
    %126 = arith.mulf %125, %108 : vector<8x16xf32>
    %127 = arith.addf %124, %126 : vector<8x16xf32>
    %c0_119 = arith.constant 0 : index
    %c0_120 = arith.constant 0 : index
    %c0_121 = arith.constant 0 : index
    %c1_122 = arith.constant 1 : index
    %c0_123 = arith.constant 0 : index
    %c0_124 = arith.constant 0 : index
    %128 = vector.load %arg9[%c0_119, %c0_120, %c0_121, %c1_122, %c0_123, %c0_124] : memref<1x2x2x4x8x16xf32, #tpu.memory_space<vmem>>, vector<1x1x1x1x8x16xf32>
    %129 = vector.shape_cast %128 : vector<1x1x1x1x8x16xf32> to vector<8x16xf32>
    %130 = vector.shape_cast %127 : vector<8x16xf32> to vector<1x1x1x1x8x16xf32>
    tpu.vector_store %arg9[%c0_119, %c0_120, %c0_121, %c1_122, %c0_123, %c0_124], %130 {strides = array<i32>} : memref<1x2x2x4x8x16xf32, #tpu.memory_space<vmem>>, vector<1x1x1x1x8x16xf32>,
    %cst_125 = arith.constant 1.875000e-01 : f32
    %131 = vector.broadcast %cst_125 : f32 to vector<8x16xf32>
    %132 = arith.mulf %131, %109 : vector<8x16xf32>
    %cst_126 = arith.constant 6.250000e-02 : f32
    %133 = vector.broadcast %cst_126 : f32 to vector<8x16xf32>
    %134 = arith.mulf %133, %114 : vector<8x16xf32>
    %135 = arith.addf %132, %134 : vector<8x16xf32>
    %cst_127 = arith.constant 5.625000e-01 : f32
    %136 = vector.broadcast %cst_127 : f32 to vector<8x16xf32>
    %137 = arith.mulf %136, %108 : vector<8x16xf32>
    %138 = arith.addf %135, %137 : vector<8x16xf32>
    %cst_128 = arith.constant 1.875000e-01 : f32
    %139 = vector.broadcast %cst_128 : f32 to vector<8x16xf32>
    %140 = arith.mulf %139, %112 : vector<8x16xf32>
    %141 = arith.addf %138, %140 : vector<8x16xf32>
    %c0_129 = arith.constant 0 : index
    %c0_130 = arith.constant 0 : index
    %c1_131 = arith.constant 1 : index
    %c1_132 = arith.constant 1 : index
    %c0_133 = arith.constant 0 : index
    %c0_134 = arith.constant 0 : index
    %142 = vector.load %arg9[%c0_129, %c0_130, %c1_131, %c1_132, %c0_133, %c0_134] : memref<1x2x2x4x8x16xf32, #tpu.memory_space<vmem>>, vector<1x1x1x1x8x16xf32>
    %143 = vector.shape_cast %142 : vector<1x1x1x1x8x16xf32> to vector<8x16xf32>
    %144 = vector.shape_cast %141 : vector<8x16xf32> to vector<1x1x1x1x8x16xf32>
    tpu.vector_store %arg9[%c0_129, %c0_130, %c1_131, %c1_132, %c0_133, %c0_134], %144 {strides = array<i32>} : memref<1x2x2x4x8x16xf32, #tpu.memory_space<vmem>>, vector<1x1x1x1x8x16xf32>,
    %cst_135 = arith.constant 1.875000e-01 : f32
    %145 = vector.broadcast %cst_135 : f32 to vector<8x16xf32>
    %146 = arith.mulf %145, %111 : vector<8x16xf32>
    %cst_136 = arith.constant 6.250000e-02 : f32
    %147 = vector.broadcast %cst_136 : f32 to vector<8x16xf32>
    %148 = arith.mulf %147, %115 : vector<8x16xf32>
    %149 = arith.addf %146, %148 : vector<8x16xf32>
    %cst_137 = arith.constant 5.625000e-01 : f32
    %150 = vector.broadcast %cst_137 : f32 to vector<8x16xf32>
    %151 = arith.mulf %150, %108 : vector<8x16xf32>
    %152 = arith.addf %149, %151 : vector<8x16xf32>
    %cst_138 = arith.constant 1.875000e-01 : f32
    %153 = vector.broadcast %cst_138 : f32 to vector<8x16xf32>
    %154 = arith.mulf %153, %110 : vector<8x16xf32>
    %155 = arith.addf %152, %154 : vector<8x16xf32>
    %c0_139 = arith.constant 0 : index
    %c1_140 = arith.constant 1 : index
    %c0_141 = arith.constant 0 : index
    %c1_142 = arith.constant 1 : index
    %c0_143 = arith.constant 0 : index
    %c0_144 = arith.constant 0 : index
    %156 = vector.load %arg9[%c0_139, %c1_140, %c0_141, %c1_142, %c0_143, %c0_144] : memref<1x2x2x4x8x16xf32, #tpu.memory_space<vmem>>, vector<1x1x1x1x8x16xf32>
    %157 = vector.shape_cast %156 : vector<1x1x1x1x8x16xf32> to vector<8x16xf32>
    %158 = vector.shape_cast %155 : vector<8x16xf32> to vector<1x1x1x1x8x16xf32>
    tpu.vector_store %arg9[%c0_139, %c1_140, %c0_141, %c1_142, %c0_143, %c0_144], %158 {strides = array<i32>} : memref<1x2x2x4x8x16xf32, #tpu.memory_space<vmem>>, vector<1x1x1x1x8x16xf32>,
    %cst_145 = arith.constant 5.625000e-01 : f32
    %159 = vector.broadcast %cst_145 : f32 to vector<8x16xf32>
    %160 = arith.mulf %159, %108 : vector<8x16xf32>
    %cst_146 = arith.constant 1.875000e-01 : f32
    %161 = vector.broadcast %cst_146 : f32 to vector<8x16xf32>
    %162 = arith.mulf %161, %112 : vector<8x16xf32>
    %163 = arith.addf %160, %162 : vector<8x16xf32>
    %cst_147 = arith.constant 1.875000e-01 : f32
    %164 = vector.broadcast %cst_147 : f32 to vector<8x16xf32>
    %165 = arith.mulf %164, %110 : vector<8x16xf32>
    %166 = arith.addf %163, %165 : vector<8x16xf32>
    %cst_148 = arith.constant 6.250000e-02 : f32
    %167 = vector.broadcast %cst_148 : f32 to vector<8x16xf32>
    %168 = arith.mulf %167, %116 : vector<8x16xf32>
    %169 = arith.addf %166, %168 : vector<8x16xf32>
    %c0_149 = arith.constant 0 : index
    %c1_150 = arith.constant 1 : index
    %c1_151 = arith.constant 1 : index
    %c1_152 = arith.constant 1 : index
    %c0_153 = arith.constant 0 : index
    %c0_154 = arith.constant 0 : index
    %170 = vector.load %arg9[%c0_149, %c1_150, %c1_151, %c1_152, %c0_153, %c0_154] : memref<1x2x2x4x8x16xf32, #tpu.memory_space<vmem>>, vector<1x1x1x1x8x16xf32>
    %171 = vector.shape_cast %170 : vector<1x1x1x1x8x16xf32> to vector<8x16xf32>
    %172 = vector.shape_cast %169 : vector<8x16xf32> to vector<1x1x1x1x8x16xf32>
    tpu.vector_store %arg9[%c0_149, %c1_150, %c1_151, %c1_152, %c0_153, %c0_154], %172 {strides = array<i32>} : memref<1x2x2x4x8x16xf32, #tpu.memory_space<vmem>>, vector<1x1x1x1x8x16xf32>,
    %c0_155 = arith.constant 0 : index
    %c0_156 = arith.constant 0 : index
    %c0_157 = arith.constant 0 : index
    %c3 = arith.constant 3 : index
    %c0_158 = arith.constant 0 : index
    %c0_159 = arith.constant 0 : index
    %173 = vector.load %arg9[%c0_155, %c0_156, %c0_157, %c3, %c0_158, %c0_159] : memref<1x2x2x4x8x16xf32, #tpu.memory_space<vmem>>, vector<1x1x1x1x8x16xf32>
    %174 = vector.shape_cast %173 : vector<1x1x1x1x8x16xf32> to vector<8x16xf32>
    %175 = vector.shape_cast %108 : vector<8x16xf32> to vector<1x1x1x1x8x16xf32>
    tpu.vector_store %arg9[%c0_155, %c0_156, %c0_157, %c3, %c0_158, %c0_159], %175 {strides = array<i32>} : memref<1x2x2x4x8x16xf32, #tpu.memory_space<vmem>>, vector<1x1x1x1x8x16xf32>,
    %c0_160 = arith.constant 0 : index
    %c0_161 = arith.constant 0 : index
    %c1_162 = arith.constant 1 : index
    %c3_163 = arith.constant 3 : index
    %c0_164 = arith.constant 0 : index
    %c0_165 = arith.constant 0 : index
    %176 = vector.load %arg9[%c0_160, %c0_161, %c1_162, %c3_163, %c0_164, %c0_165] : memref<1x2x2x4x8x16xf32, #tpu.memory_space<vmem>>, vector<1x1x1x1x8x16xf32>
    %177 = vector.shape_cast %176 : vector<1x1x1x1x8x16xf32> to vector<8x16xf32>
    %178 = vector.shape_cast %108 : vector<8x16xf32> to vector<1x1x1x1x8x16xf32>
    tpu.vector_store %arg9[%c0_160, %c0_161, %c1_162, %c3_163, %c0_164, %c0_165], %178 {strides = array<i32>} : memref<1x2x2x4x8x16xf32, #tpu.memory_space<vmem>>, vector<1x1x1x1x8x16xf32>,
    %c0_166 = arith.constant 0 : index
    %c1_167 = arith.constant 1 : index
    %c0_168 = arith.constant 0 : index
    %c3_169 = arith.constant 3 : index
    %c0_170 = arith.constant 0 : index
    %c0_171 = arith.constant 0 : index
    %179 = vector.load %arg9[%c0_166, %c1_167, %c0_168, %c3_169, %c0_170, %c0_171] : memref<1x2x2x4x8x16xf32, #tpu.memory_space<vmem>>, vector<1x1x1x1x8x16xf32>
    %180 = vector.shape_cast %179 : vector<1x1x1x1x8x16xf32> to vector<8x16xf32>
    %181 = vector.shape_cast %108 : vector<8x16xf32> to vector<1x1x1x1x8x16xf32>
    tpu.vector_store %arg9[%c0_166, %c1_167, %c0_168, %c3_169, %c0_170, %c0_171], %181 {strides = array<i32>} : memref<1x2x2x4x8x16xf32, #tpu.memory_space<vmem>>, vector<1x1x1x1x8x16xf32>,
    %c0_172 = arith.constant 0 : index
    %c1_173 = arith.constant 1 : index
    %c1_174 = arith.constant 1 : index
    %c3_175 = arith.constant 3 : index
    %c0_176 = arith.constant 0 : index
    %c0_177 = arith.constant 0 : index
    %182 = vector.load %arg9[%c0_172, %c1_173, %c1_174, %c3_175, %c0_176, %c0_177] : memref<1x2x2x4x8x16xf32, #tpu.memory_space<vmem>>, vector<1x1x1x1x8x16xf32>
    %183 = vector.shape_cast %182 : vector<1x1x1x1x8x16xf32> to vector<8x16xf32>
    %184 = vector.shape_cast %108 : vector<8x16xf32> to vector<1x1x1x1x8x16xf32>
    tpu.vector_store %arg9[%c0_172, %c1_173, %c1_174, %c3_175, %c0_176, %c0_177], %184 {strides = array<i32>} : memref<1x2x2x4x8x16xf32, #tpu.memory_space<vmem>>, vector<1x1x1x1x8x16xf32>,
    return
  }
  func.func @transform_0(%arg0: i32, %arg1: i32) -> (i32, i32, i32, i32, i32) {
    %c0_i32 = arith.constant 0 : i32
    %c0_i32_0 = arith.constant 0 : i32
    %c0_i32_1 = arith.constant 0 : i32
    %c0_i32_2 = arith.constant 0 : i32
    return %arg0, %arg1, %c0_i32, %c0_i32_0, %c0_i32_1 : i32, i32, i32, i32, i32
  }
  func.func @transform_1(%arg0: i32, %arg1: i32) -> (i32, i32) {
    %c0_i32 = arith.constant 0 : i32
    %c0_i32_0 = arith.constant 0 : i32
    %c0_i32_1 = arith.constant 0 : i32
    return %c0_i32, %c0_i32_0 : i32, i32
  }
  func.func @transform_2(%arg0: i32, %arg1: i32) -> (i32, i32) {
    %c0_i32 = arith.constant 0 : i32
    %c0_i32_0 = arith.constant 0 : i32
    %c0_i32_1 = arith.constant 0 : i32
    return %c0_i32, %c0_i32_0 : i32, i32
  }
  func.func @transform_3(%arg0: i32, %arg1: i32) -> (i32, i32) {
    %c0_i32 = arith.constant 0 : i32
    %c0_i32_0 = arith.constant 0 : i32
    %c0_i32_1 = arith.constant 0 : i32
    return %c0_i32, %c0_i32_0 : i32, i32
  }
  func.func @transform_4(%arg0: i32, %arg1: i32) -> (i32, i32) {
    %c0_i32 = arith.constant 0 : i32
    %c0_i32_0 = arith.constant 0 : i32
    %c0_i32_1 = arith.constant 0 : i32
    return %c0_i32, %c0_i32_0 : i32, i32
  }
  func.func @transform_5(%arg0: i32, %arg1: i32) -> (i32, i32) {
    %c0_i32 = arith.constant 0 : i32
    %c0_i32_0 = arith.constant 0 : i32
    %c0_i32_1 = arith.constant 0 : i32
    return %c0_i32, %c0_i32_0 : i32, i32
  }
  func.func @transform_6(%arg0: i32, %arg1: i32) -> (i32, i32) {
    %c0_i32 = arith.constant 0 : i32
    %c0_i32_0 = arith.constant 0 : i32
    %c0_i32_1 = arith.constant 0 : i32
    return %c0_i32, %c0_i32_0 : i32, i32
  }
  func.func @transform_7(%arg0: i32, %arg1: i32) -> (i32, i32, i32, i32, i32, i32) {
    %c0_i32 = arith.constant 0 : i32
    %c0_i32_0 = arith.constant 0 : i32
    %c0_i32_1 = arith.constant 0 : i32
    %c0_i32_2 = arith.constant 0 : i32
    %c0_i32_3 = arith.constant 0 : i32
    return %arg0, %c0_i32, %c0_i32_0, %c0_i32_1, %arg1, %c0_i32_2 : i32, i32, i32, i32, i32, i32
  }
}

</mosaic_0001>

<llo_original>
// kernel: _lambda_.1
$region0: #{_lambda_.1}
  #allocation0 [shape = 'u32[]', space=smem, size = 0x4, offset = 0x4, fixed_abs, tag = 'smem constant byte address 0x4 - core index']
  #allocation1 [shape = 'u32[144,128]{1,0:T(1,128)}', space=vmem, size = 0x12000, scoped, tag = 'internal scratch']
  #allocation2 [shape = 'f32[18,16,26]{2,1,0:T(8,128)}', space=vmem, size = 0x24000, scoped, tag = 'scratch operand']
  #allocation3 [shape = 'f32[14,16,22]{2,1,0:T(8,128)}', space=vmem, size = 0x1c000, scoped, tag = 'scratch operand']
  #allocation4 [shape = 'f32[10,2,18]{2,1,0:T(2,128)}', space=vmem, size = 0x2800, scoped, tag = 'scratch operand']
  %s0 = inlined_call_operand.vmem [shape: f32[2,2,22,3,30], index: 0, kind: input, shape index: {}]
  %s1 = inlined_call_operand.vmem [shape: f32[16,75], index: 1, kind: input, shape index: {}]
  %s2 = inlined_call_operand.vmem [shape: f32[16,1], index: 2, kind: input, shape index: {}]
  %s3 = inlined_call_operand.vmem [shape: f32[16,400], index: 3, kind: input, shape index: {}]
  %s4 = inlined_call_operand.vmem [shape: f32[16,1], index: 4, kind: input, shape index: {}]
  %s5 = inlined_call_operand.vmem [shape: f32[2,400], index: 5, kind: input, shape index: {}]
  %s6 = inlined_call_operand.vmem [shape: f32[2,1], index: 6, kind: input, shape index: {}]
  %s7 = inlined_call_operand.vmem [shape: f32[2,2,2,4,16,16], index: 7, kind: output, shape index: {}]
  %s8 = sld [smem:[#allocation0]]
  $region124: #{_lambda_.1} parent=0
    _
  %s10 = ssub.s32 1, %s8
  %s11 = scalar_select 0, %s10, %s8
  $region1: #{_lambda_.1} parent=0
    #allocation5 [shape = 'u8[131072]{0}', space=vmem, size = 0x20000, scoped, tag = 'output window, operand 0']
    loop: start=0, step=1, limit=6
    $region2: #{_lambda_.1} parent=1 // loop_pre_header
      _
    $region3: #{_lambda_.1} parent=1 // loop_header
      %s13 = sphi 0, %s17
      %p14 = scmp.ge.s32.totalorder %s13, 6
      %s20 = sphi 0, %s32
      %s21 = sphi 0, %s28
      %s22 = sphi 0, %s20
      %s23 = sphi 0, %s21
      %s24 = sphi 0, %s22
      %s25 = sphi 0, %s23
      %s37 = sphi 0, %s39
      %s40 = sphi 0, %s37
      %s41 = sphi 0, %s40
      %s57 = sphi 0, %s41
      %s61 = sphi 0, %s61
      %s63 = sphi 0, %s61
      %s64 = sphi 0, %s63
      %s78 = sphi 0, %s64
      %s82 = sphi 0, %s82
      %s84 = sphi 0, %s82
      %s85 = sphi 0, %s84
      %s99 = sphi 0, %s85
      %s103 = sphi 0, %s103
      %s105 = sphi 0, %s103
      %s106 = sphi 0, %s105
      %s120 = sphi 0, %s106
      %s124 = sphi 0, %s124
      %s126 = sphi 0, %s124
      %s127 = sphi 0, %s126
      %s141 = sphi 0, %s127
      %s145 = sphi 0, %s145
      %s147 = sphi 0, %s145
      %s148 = sphi 0, %s147
      %s162 = sphi 0, %s148
      %s166 = sphi 0, %s166
      %s168 = sphi 0, %s166
      %s169 = sphi 0, %s168
      %s183 = sphi 0, %s169
      %s191 = sphi 0, %s193
      %s194 = sphi 0, %s191
      %s195 = sphi 0, %s194
      %s211 = sphi 0, %s195
    $region4: #{_lambda_.1} parent=1 // loop_header_branch
      %16 = sbr.rel (%p14) target = $region8
    $region5: #{_lambda_.1} parent=1 // loop_body
      %s18 = ssub.s32 %s13, 1
      %s19 = ssub.s32 %s13, 2
      %s26 = sadd.s32 1, %s21
      %p27 = scmp.ge.s32.totalorder %s26, 2
      %s28 = scalar_select %p27, 0, %s26
      %s29 = sadd.s32 1, %s20
      %s30 = scalar_select %p27, %s29, %s20
      %p31 = scmp.ge.s32.totalorder %s30, 2
      %s32 = scalar_select %p31, 0, %s30
      %s33 = ssub.s32 %s20, %s32
      %s34 = ssub.s32 %s21, %s28
      %s35 = sor.u32 %s33, %s34
      %p36 = scmp.eq.s32.totalorder %s35, 0
      %s38 = sadd.s32 %s37, 1
      %s39 = scalar_select %p36, %s37, %s38
      %p42 = pneg %p36
      %p43 = scmp.eq.s32.totalorder %s13, 3
      %p44 = por %p42, %p43
      %p45 = scmp.ne.s32.totalorder %s37, %s40
      %p46 = scmp.eq.s32.totalorder %s13, 0
      %p47 = por %p45, %p46
      %p48 = scmp.ne.s32.totalorder %s37, %s40
      %p49 = scmp.eq.s32.totalorder %s18, 3
      %p50 = por %p48, %p49
      %p51 = scmp.ne.s32.totalorder %s40, %s41
      %p52 = scmp.eq.s32.totalorder %s18, 0
      %p53 = por %p51, %p52
      %p54 = scmp.ne.s32.totalorder %s40, %s41
      %p55 = scmp.eq.s32.totalorder %s19, 3
      %p56 = por %p54, %p55
      %p58 = scmp.ne.s32.totalorder %s41, %s57
      %p59 = scmp.eq.s32.totalorder %s19, 0
      %p60 = por %p58, %p59
      %s62 = sadd.s32 %s61, 1
      %p65 = scmp.eq.s32.totalorder %s13, 3
      %p66 = scmp.ne.s32.totalorder %s61, %s63
      %p67 = scmp.eq.s32.totalorder %s13, 0
      %p68 = por %p66, %p67
      %p69 = scmp.ne.s32.totalorder %s61, %s63
      %p70 = scmp.eq.s32.totalorder %s18, 3
      %p71 = por %p69, %p70
      %p72 = scmp.ne.s32.totalorder %s63, %s64
      %p73 = scmp.eq.s32.totalorder %s18, 0
      %p74 = por %p72, %p73
      %p75 = scmp.ne.s32.totalorder %s63, %s64
      %p76 = scmp.eq.s32.totalorder %s19, 3
      %p77 = por %p75, %p76
      %p79 = scmp.ne.s32.totalorder %s64, %s78
      %p80 = scmp.eq.s32.totalorder %s19, 0
      %p81 = por %p79, %p80
      %s83 = sadd.s32 %s82, 1
      %p86 = scmp.eq.s32.totalorder %s13, 3
      %p87 = scmp.ne.s32.totalorder %s82, %s84
      %p88 = scmp.eq.s32.totalorder %s13, 0
      %p89 = por %p87, %p88
      %p90 = scmp.ne.s32.totalorder %s82, %s84
      %p91 = scmp.eq.s32.totalorder %s18, 3
      %p92 = por %p90, %p91
      %p93 = scmp.ne.s32.totalorder %s84, %s85
      %p94 = scmp.eq.s32.totalorder %s18, 0
      %p95 = por %p93, %p94
      %p96 = scmp.ne.s32.totalorder %s84, %s85
      %p97 = scmp.eq.s32.totalorder %s19, 3
      %p98 = por %p96, %p97
      %p100 = scmp.ne.s32.totalorder %s85, %s99
      %p101 = scmp.eq.s32.totalorder %s19, 0
      %p102 = por %p100, %p101
      %s104 = sadd.s32 %s103, 1
      %p107 = scmp.eq.s32.totalorder %s13, 3
      %p108 = scmp.ne.s32.totalorder %s103, %s105
      %p109 = scmp.eq.s32.totalorder %s13, 0
      %p110 = por %p108, %p109
      %p111 = scmp.ne.s32.totalorder %s103, %s105
      %p112 = scmp.eq.s32.totalorder %s18, 3
      %p113 = por %p111, %p112
      %p114 = scmp.ne.s32.totalorder %s105, %s106
      %p115 = scmp.eq.s32.totalorder %s18, 0
      %p116 = por %p114, %p115
      %p117 = scmp.ne.s32.totalorder %s105, %s106
      %p118 = scmp.eq.s32.totalorder %s19, 3
      %p119 = por %p117, %p118
      %p121 = scmp.ne.s32.totalorder %s106, %s120
      %p122 = scmp.eq.s32.totalorder %s19, 0
      %p123 = por %p121, %p122
      %s125 = sadd.s32 %s124, 1
      %p128 = scmp.eq.s32.totalorder %s13, 3
      %p129 = scmp.ne.s32.totalorder %s124, %s126
      %p130 = scmp.eq.s32.totalorder %s13, 0
      %p131 = por %p129, %p130
      %p132 = scmp.ne.s32.totalorder %s124, %s126
      %p133 = scmp.eq.s32.totalorder %s18, 3
      %p134 = por %p132, %p133
      %p135 = scmp.ne.s32.totalorder %s126, %s127
      %p136 = scmp.eq.s32.totalorder %s18, 0
      %p137 = por %p135, %p136
      %p138 = scmp.ne.s32.totalorder %s126, %s127
      %p139 = scmp.eq.s32.totalorder %s19, 3
      %p140 = por %p138, %p139
      %p142 = scmp.ne.s32.totalorder %s127, %s141
      %p143 = scmp.eq.s32.totalorder %s19, 0
      %p144 = por %p142, %p143
      %s146 = sadd.s32 %s145, 1
      %p149 = scmp.eq.s32.totalorder %s13, 3
      %p150 = scmp.ne.s32.totalorder %s145, %s147
      %p151 = scmp.eq.s32.totalorder %s13, 0
      %p152 = por %p150, %p151
      %p153 = scmp.ne.s32.totalorder %s145, %s147
      %p154 = scmp.eq.s32.totalorder %s18, 3
      %p155 = por %p153, %p154
      %p156 = scmp.ne.s32.totalorder %s147, %s148
      %p157 = scmp.eq.s32.totalorder %s18, 0
      %p158 = por %p156, %p157
      %p159 = scmp.ne.s32.totalorder %s147, %s148
      %p160 = scmp.eq.s32.totalorder %s19, 3
      %p161 = por %p159, %p160
      %p163 = scmp.ne.s32.totalorder %s148, %s162
      %p164 = scmp.eq.s32.totalorder %s19, 0
      %p165 = por %p163, %p164
      %s167 = sadd.s32 %s166, 1
      %p170 = scmp.eq.s32.totalorder %s13, 3
      %p171 = scmp.ne.s32.totalorder %s166, %s168
      %p172 = scmp.eq.s32.totalorder %s13, 0
      %p173 = por %p171, %p172
      %p174 = scmp.ne.s32.totalorder %s166, %s168
      %p175 = scmp.eq.s32.totalorder %s18, 3
      %p176 = por %p174, %p175
      %p177 = scmp.ne.s32.totalorder %s168, %s169
      %p178 = scmp.eq.s32.totalorder %s18, 0
      %p179 = por %p177, %p178
      %p180 = scmp.ne.s32.totalorder %s168, %s169
      %p181 = scmp.eq.s32.totalorder %s19, 3
      %p182 = por %p180, %p181
      %p184 = scmp.ne.s32.totalorder %s169, %s183
      %p185 = scmp.eq.s32.totalorder %s19, 0
      %p186 = por %p184, %p185
      %s187 = ssub.s32 %s20, %s32
      %s188 = ssub.s32 %s21, %s28
      %s189 = sor.u32 %s187, %s188
      %p190 = scmp.eq.s32.totalorder %s189, 0
      %s192 = sadd.s32 %s191, 1
      %s193 = scalar_select %p190, %s191, %s192
      %p196 = pneg %p190
      %p197 = scmp.eq.s32.totalorder %s13, 3
      %p198 = por %p196, %p197
      %p199 = scmp.ne.s32.totalorder %s191, %s194
      %p200 = scmp.eq.s32.totalorder %s13, 0
      %p201 = por %p199, %p200
      %p202 = scmp.ne.s32.totalorder %s191, %s194
      %p203 = scmp.eq.s32.totalorder %s18, 3
      %p204 = por %p202, %p203
      %p205 = scmp.ne.s32.totalorder %s194, %s195
      %p206 = scmp.eq.s32.totalorder %s18, 0
      %p207 = por %p205, %p206
      %p208 = scmp.ne.s32.totalorder %s194, %s195
      %p209 = scmp.eq.s32.totalorder %s19, 3
      %p210 = por %p208, %p209
      %p212 = scmp.ne.s32.totalorder %s195, %s211
      %p213 = scmp.eq.s32.totalorder %s19, 0
      %p214 = por %p212, %p213
      %p215 = scmp.le.s32.totalorder 1, %s13
      %p216 = scmp.lt.s32.totalorder %s13, 5
      %p217 = pnand %p215, %p216
      %p218 = pneg %p217
      // Predicated region
      $region9: #{_lambda_.1} parent=5 // pred_check
        _
      $region10: #{_lambda_.1} parent=5 // pred_check_branch
        %220 = sbr.rel (%p217) target = $region12
      $region11: #{_lambda_.1} parent=5 // pred_region
        %s221 = ssub.s32 %s13, 1
        // Predicated region
        $region13: #{_lambda_.1} parent=11 // pred_check
          %p222 = pneg %p74
        $region14: #{_lambda_.1} parent=11 // pred_check_branch
          %224 = sbr.rel (%p222) target = $region16
        $region15: #{_lambda_.1} parent=11 // pred_region
          _
        $region16: #{_lambda_.1} parent=11 // pred_fallthru
          _
        // Predicated region
        $region17: #{_lambda_.1} parent=11 // pred_check
          %p225 = pneg %p95
        $region18: #{_lambda_.1} parent=11 // pred_check_branch
          %227 = sbr.rel (%p225) target = $region20
        $region19: #{_lambda_.1} parent=11 // pred_region
          _
        $region20: #{_lambda_.1} parent=11 // pred_fallthru
          _
        // Predicated region
        $region21: #{_lambda_.1} parent=11 // pred_check
          %p228 = pneg %p116
        $region22: #{_lambda_.1} parent=11 // pred_check_branch
          %230 = sbr.rel (%p228) target = $region24
        $region23: #{_lambda_.1} parent=11 // pred_region
          _
        $region24: #{_lambda_.1} parent=11 // pred_fallthru
          _
        // Predicated region
        $region25: #{_lambda_.1} parent=11 // pred_check
          %p231 = pneg %p137
        $region26: #{_lambda_.1} parent=11 // pred_check_branch
          %233 = sbr.rel (%p231) target = $region28
        $region27: #{_lambda_.1} parent=11 // pred_region
          _
        $region28: #{_lambda_.1} parent=11 // pred_fallthru
          _
        // Predicated region
        $region29: #{_lambda_.1} parent=11 // pred_check
          %p234 = pneg %p158
        $region30: #{_lambda_.1} parent=11 // pred_check_branch
          %236 = sbr.rel (%p234) target = $region32
        $region31: #{_lambda_.1} parent=11 // pred_region
          _
        $region32: #{_lambda_.1} parent=11 // pred_fallthru
          _
        // Predicated region
        $region33: #{_lambda_.1} parent=11 // pred_check
          %p237 = pneg %p179
        $region34: #{_lambda_.1} parent=11 // pred_check_branch
          %239 = sbr.rel (%p237) target = $region36
        $region35: #{_lambda_.1} parent=11 // pred_region
          _
        $region36: #{_lambda_.1} parent=11 // pred_fallthru
          _
      $region12: #{_lambda_.1} parent=5 // pred_fallthru
        _
      %p240 = scmp.lt.s32.totalorder %s13, 4
      // Predicated region
      $region37: #{_lambda_.1} parent=5 // pred_check
        %p241 = pneg %p240
      $region38: #{_lambda_.1} parent=5 // pred_check_branch
        %243 = sbr.rel (%p241) target = $region40
      $region39: #{_lambda_.1} parent=5 // pred_region
        // Predicated region
        $region41: #{_lambda_.1} parent=39 // pred_check
          %p244 = pneg %p47
        $region42: #{_lambda_.1} parent=39 // pred_check_branch
          %246 = sbr.rel (%p244) target = $region44
        $region43: #{_lambda_.1} parent=39 // pred_region
          %p247 = scmp.lt.s32.totalorder %s20, 1
          %s248 = scalar_select %p247, %s20, 1
          %p249 = scmp.lt.s32.totalorder %s21, 1
          %s250 = scalar_select %p249, %s21, 1
          %s251 = smul.addr %s250, 22
          %s252 = smul.addr %s248, 44
          %s253 = sadd.s32 %s251, %s252
          %s254 = smul.addr %s253, 4
          %s255 = scalar_lea.vmem %s0, %s254
        $region44: #{_lambda_.1} parent=39 // pred_fallthru
          _
      $region40: #{_lambda_.1} parent=5 // pred_fallthru
        _
      %p256 = scmp.le.s32.totalorder 1, %s13
      %p257 = scmp.lt.s32.totalorder %s13, 5
      %p258 = pnand %p256, %p257
      %p259 = pneg %p258
      // Predicated region
      $region45: #{_lambda_.1} parent=5 // pred_check
        _
      $region46: #{_lambda_.1} parent=5 // pred_check_branch
        %261 = sbr.rel (%p258) target = $region48
      $region47: #{_lambda_.1} parent=5 // pred_region
        %s262 = ssub.s32 %s13, 1
        %p263 = scmp.lt.s32.totalorder %s22, 1
        %s264 = scalar_select %p263, %s22, 1
        %p265 = scmp.lt.s32.totalorder %s23, 1
        %s266 = scalar_select %p265, %s23, 1
        %s267 = smul.addr %s266, 22
        %s268 = smul.addr %s264, 44
        %s269 = sadd.s32 %s267, %s268
        %s270 = smul.addr %s269, 4
        %s271 = scalar_lea.vmem %s0, %s270
        %p272 = pneg %p53
        %p273 = pneg %p50
        %p274 = pneg %p74
        %p275 = pneg %p71
        %p276 = pneg %p95
        %p277 = pneg %p92
        %p278 = pneg %p116
        %p279 = pneg %p113
        %p280 = pneg %p137
        %p281 = pneg %p134
        %p282 = pneg %p158
        %p283 = pneg %p155
        %p284 = pneg %p179
        %p285 = pneg %p176
        %p286 = pneg %p207
        %p287 = pneg %p204
        %s288 = sand.u32 %s194, 1
        %s289 = sand.u32 %s194, 1
        %s290 = smul.addr %s289, 128
        %s291 = scalar_lea.vmem [#allocation5], %s290
        %p292 = scmp.lt.s32.totalorder %s22, 1
        %s293 = scalar_select %p292, %s22, 1
        %p294 = scmp.lt.s32.totalorder %s23, 1
        %s295 = scalar_select %p294, %s23, 1
        %s296 = smul.addr %s295, 22
        %s297 = smul.addr %s293, 44
        %s298 = sadd.s32 %s296, %s297
        %s299 = smul.addr %s298, 4
        %s300 = scalar_lea.vmem %s0, %s299
        %vm301 = vcmask 39936
        %302 = vst.msk [vmem:[#allocation2] sm:$0xff] %vm301, 0.0
        %303 = vst.msk [vmem:[#allocation2 + $0x8] sm:$0xff] %vm301, 0.0
        %304 = vst.msk [vmem:[#allocation2 + $0x10] sm:$0xff] %vm301, 0.0
        %305 = vst.msk [vmem:[#allocation2 + $0x18] sm:$0xff] %vm301, 0.0
        %306 = vst.msk [vmem:[#allocation2 + $0x20] sm:$0xff] %vm301, 0.0
        %307 = vst.msk [vmem:[#allocation2 + $0x28] sm:$0xff] %vm301, 0.0
        %308 = vst.msk [vmem:[#allocation2 + $0x30] sm:$0xff] %vm301, 0.0
        %309 = vst.msk [vmem:[#allocation2 + $0x38] sm:$0xff] %vm301, 0.0
        %310 = vst.msk [vmem:[#allocation2 + $0x40] sm:$0xff] %vm301, 0.0
        %311 = vst.msk [vmem:[#allocation2 + $0x48] sm:$0xff] %vm301, 0.0
        %312 = vst.msk [vmem:[#allocation2 + $0x50] sm:$0xff] %vm301, 0.0
        %313 = vst.msk [vmem:[#allocation2 + $0x58] sm:$0xff] %vm301, 0.0
        %314 = vst.msk [vmem:[#allocation2 + $0x60] sm:$0xff] %vm301, 0.0
        %315 = vst.msk [vmem:[#allocation2 + $0x68] sm:$0xff] %vm301, 0.0
        %316 = vst.msk [vmem:[#allocation2 + $0x70] sm:$0xff] %vm301, 0.0
        %317 = vst.msk [vmem:[#allocation2 + $0x78] sm:$0xff] %vm301, 0.0
        %318 = vst.msk [vmem:[#allocation2 + $0x80] sm:$0xff] %vm301, 0.0
        %319 = vst.msk [vmem:[#allocation2 + $0x88] sm:$0xff] %vm301, 0.0
        %320 = vst.msk [vmem:[#allocation2 + $0x90] sm:$0xff] %vm301, 0.0
        %321 = vst.msk [vmem:[#allocation2 + $0x98] sm:$0xff] %vm301, 0.0
        %322 = vst.msk [vmem:[#allocation2 + $0xa0] sm:$0xff] %vm301, 0.0
        %323 = vst.msk [vmem:[#allocation2 + $0xa8] sm:$0xff] %vm301, 0.0
        %324 = vst.msk [vmem:[#allocation2 + $0xb0] sm:$0xff] %vm301, 0.0
        %325 = vst.msk [vmem:[#allocation2 + $0xb8] sm:$0xff] %vm301, 0.0
        %326 = vst.msk [vmem:[#allocation2 + $0xc0] sm:$0xff] %vm301, 0.0
        %327 = vst.msk [vmem:[#allocation2 + $0xc8] sm:$0xff] %vm301, 0.0
        %328 = vst.msk [vmem:[#allocation2 + $0xd0] sm:$0xff] %vm301, 0.0
        %329 = vst.msk [vmem:[#allocation2 + $0xd8] sm:$0xff] %vm301, 0.0
        %330 = vst.msk [vmem:[#allocation2 + $0xe0] sm:$0xff] %vm301, 0.0
        %331 = vst.msk [vmem:[#allocation2 + $0xe8] sm:$0xff] %vm301, 0.0
        %332 = vst.msk [vmem:[#allocation2 + $0xf0] sm:$0xff] %vm301, 0.0
        %333 = vst.msk [vmem:[#allocation2 + $0xf8] sm:$0xff] %vm301, 0.0
        %334 = vst.msk [vmem:[#allocation2 + $0x100] sm:$0xff] %vm301, 0.0
        %335 = vst.msk [vmem:[#allocation2 + $0x108] sm:$0xff] %vm301, 0.0
        %336 = vst.msk [vmem:[#allocation2 + $0x110] sm:$0xff] %vm301, 0.0
        %337 = vst.msk [vmem:[#allocation2 + $0x118] sm:$0xff] %vm301, 0.0
        %vm338 = vcmask 212136
        %339 = vst.msk [vmem:[#allocation2] sm:$0xff] %vm338, 0.0
        %340 = vst.msk [vmem:[#allocation2 + $0x8] sm:$0xff] %vm338, 0.0
        %341 = vst.msk [vmem:[#allocation2 + $0x10] sm:$0xff] %vm338, 0.0
        %342 = vst.msk [vmem:[#allocation2 + $0x18] sm:$0xff] %vm338, 0.0
        %343 = vst.msk [vmem:[#allocation2 + $0x20] sm:$0xff] %vm338, 0.0
        %344 = vst.msk [vmem:[#allocation2 + $0x28] sm:$0xff] %vm338, 0.0
        %345 = vst.msk [vmem:[#allocation2 + $0x30] sm:$0xff] %vm338, 0.0
        %346 = vst.msk [vmem:[#allocation2 + $0x38] sm:$0xff] %vm338, 0.0
        %347 = vst.msk [vmem:[#allocation2 + $0x40] sm:$0xff] %vm338, 0.0
        %348 = vst.msk [vmem:[#allocation2 + $0x48] sm:$0xff] %vm338, 0.0
        %349 = vst.msk [vmem:[#allocation2 + $0x50] sm:$0xff] %vm338, 0.0
        %350 = vst.msk [vmem:[#allocation2 + $0x58] sm:$0xff] %vm338, 0.0
        %351 = vst.msk [vmem:[#allocation2 + $0x60] sm:$0xff] %vm338, 0.0
        %352 = vst.msk [vmem:[#allocation2 + $0x68] sm:$0xff] %vm338, 0.0
        %353 = vst.msk [vmem:[#allocation2 + $0x70] sm:$0xff] %vm338, 0.0
        %354 = vst.msk [vmem:[#allocation2 + $0x78] sm:$0xff] %vm338, 0.0
        %355 = vst.msk [vmem:[#allocation2 + $0x80] sm:$0xff] %vm338, 0.0
        %356 = vst.msk [vmem:[#allocation2 + $0x88] sm:$0xff] %vm338, 0.0
        %357 = vst.msk [vmem:[#allocation2 + $0x90] sm:$0xff] %vm338, 0.0
        %358 = vst.msk [vmem:[#allocation2 + $0x98] sm:$0xff] %vm338, 0.0
        %359 = vst.msk [vmem:[#allocation2 + $0xa0] sm:$0xff] %vm338, 0.0
        %360 = vst.msk [vmem:[#allocation2 + $0xa8] sm:$0xff] %vm338, 0.0
        %361 = vst.msk [vmem:[#allocation2 + $0xb0] sm:$0xff] %vm338, 0.0
        %362 = vst.msk [vmem:[#allocation2 + $0xb8] sm:$0xff] %vm338, 0.0
        %363 = vst.msk [vmem:[#allocation2 + $0xc0] sm:$0xff] %vm338, 0.0
        %364 = vst.msk [vmem:[#allocation2 + $0xc8] sm:$0xff] %vm338, 0.0
        %365 = vst.msk [vmem:[#allocation2 + $0xd0] sm:$0xff] %vm338, 0.0
        %366 = vst.msk [vmem:[#allocation2 + $0xd8] sm:$0xff] %vm338, 0.0
        %367 = vst.msk [vmem:[#allocation2 + $0xe0] sm:$0xff] %vm338, 0.0
        %368 = vst.msk [vmem:[#allocation2 + $0xe8] sm:$0xff] %vm338, 0.0
        %369 = vst.msk [vmem:[#allocation2 + $0xf0] sm:$0xff] %vm338, 0.0
        %370 = vst.msk [vmem:[#allocation2 + $0xf8] sm:$0xff] %vm338, 0.0
        %371 = vst.msk [vmem:[#allocation2 + $0x100] sm:$0xff] %vm338, 0.0
        %372 = vst.msk [vmem:[#allocation2 + $0x108] sm:$0xff] %vm338, 0.0
        %373 = vst.msk [vmem:[#allocation2 + $0x110] sm:$0xff] %vm338, 0.0
        %374 = vst.msk [vmem:[#allocation2 + $0x118] sm:$0xff] %vm338, 0.0
        %vm375 = vcmask 23552
        %376 = vst.msk [vmem:[#allocation3] sm:$0xff] %vm375, 0.0
        %377 = vst.msk [vmem:[#allocation3 + $0x8] sm:$0xff] %vm375, 0.0
        %378 = vst.msk [vmem:[#allocation3 + $0x10] sm:$0xff] %vm375, 0.0
        %379 = vst.msk [vmem:[#allocation3 + $0x18] sm:$0xff] %vm375, 0.0
        %380 = vst.msk [vmem:[#allocation3 + $0x20] sm:$0xff] %vm375, 0.0
        %381 = vst.msk [vmem:[#allocation3 + $0x28] sm:$0xff] %vm375, 0.0
        %382 = vst.msk [vmem:[#allocation3 + $0x30] sm:$0xff] %vm375, 0.0
        %383 = vst.msk [vmem:[#allocation3 + $0x38] sm:$0xff] %vm375, 0.0
        %384 = vst.msk [vmem:[#allocation3 + $0x40] sm:$0xff] %vm375, 0.0
        %385 = vst.msk [vmem:[#allocation3 + $0x48] sm:$0xff] %vm375, 0.0
        %386 = vst.msk [vmem:[#allocation3 + $0x50] sm:$0xff] %vm375, 0.0
        %387 = vst.msk [vmem:[#allocation3 + $0x58] sm:$0xff] %vm375, 0.0
        %388 = vst.msk [vmem:[#allocation3 + $0x60] sm:$0xff] %vm375, 0.0
        %389 = vst.msk [vmem:[#allocation3 + $0x68] sm:$0xff] %vm375, 0.0
        %390 = vst.msk [vmem:[#allocation3 + $0x70] sm:$0xff] %vm375, 0.0
        %391 = vst.msk [vmem:[#allocation3 + $0x78] sm:$0xff] %vm375, 0.0
        %392 = vst.msk [vmem:[#allocation3 + $0x80] sm:$0xff] %vm375, 0.0
        %393 = vst.msk [vmem:[#allocation3 + $0x88] sm:$0xff] %vm375, 0.0
        %394 = vst.msk [vmem:[#allocation3 + $0x90] sm:$0xff] %vm375, 0.0
        %395 = vst.msk [vmem:[#allocation3 + $0x98] sm:$0xff] %vm375, 0.0
        %396 = vst.msk [vmem:[#allocation3 + $0xa0] sm:$0xff] %vm375, 0.0
        %397 = vst.msk [vmem:[#allocation3 + $0xa8] sm:$0xff] %vm375, 0.0
        %398 = vst.msk [vmem:[#allocation3 + $0xb0] sm:$0xff] %vm375, 0.0
        %399 = vst.msk [vmem:[#allocation3 + $0xb8] sm:$0xff] %vm375, 0.0
        %400 = vst.msk [vmem:[#allocation3 + $0xc0] sm:$0xff] %vm375, 0.0
        %401 = vst.msk [vmem:[#allocation3 + $0xc8] sm:$0xff] %vm375, 0.0
        %402 = vst.msk [vmem:[#allocation3 + $0xd0] sm:$0xff] %vm375, 0.0
        %403 = vst.msk [vmem:[#allocation3 + $0xd8] sm:$0xff] %vm375, 0.0
        %vm404 = vcmask 179352
        %405 = vst.msk [vmem:[#allocation3] sm:$0xff] %vm404, 0.0
        %406 = vst.msk [vmem:[#allocation3 + $0x8] sm:$0xff] %vm404, 0.0
        %407 = vst.msk [vmem:[#allocation3 + $0x10] sm:$0xff] %vm404, 0.0
        %408 = vst.msk [vmem:[#allocation3 + $0x18] sm:$0xff] %vm404, 0.0
        %409 = vst.msk [vmem:[#allocation3 + $0x20] sm:$0xff] %vm404, 0.0
        %410 = vst.msk [vmem:[#allocation3 + $0x28] sm:$0xff] %vm404, 0.0
        %411 = vst.msk [vmem:[#allocation3 + $0x30] sm:$0xff] %vm404, 0.0
        %412 = vst.msk [vmem:[#allocation3 + $0x38] sm:$0xff] %vm404, 0.0
        %413 = vst.msk [vmem:[#allocation3 + $0x40] sm:$0xff] %vm404, 0.0
        %414 = vst.msk [vmem:[#allocation3 + $0x48] sm:$0xff] %vm404, 0.0
        %415 = vst.msk [vmem:[#allocation3 + $0x50] sm:$0xff] %vm404, 0.0
        %416 = vst.msk [vmem:[#allocation3 + $0x58] sm:$0xff] %vm404, 0.0
        %417 = vst.msk [vmem:[#allocation3 + $0x60] sm:$0xff] %vm404, 0.0
        %418 = vst.msk [vmem:[#allocation3 + $0x68] sm:$0xff] %vm404, 0.0
        %419 = vst.msk [vmem:[#allocation3 + $0x70] sm:$0xff] %vm404, 0.0
        %420 = vst.msk [vmem:[#allocation3 + $0x78] sm:$0xff] %vm404, 0.0
        %421 = vst.msk [vmem:[#allocation3 + $0x80] sm:$0xff] %vm404, 0.0
        %422 = vst.msk [vmem:[#allocation3 + $0x88] sm:$0xff] %vm404, 0.0
        %423 = vst.msk [vmem:[#allocation3 + $0x90] sm:$0xff] %vm404, 0.0
        %424 = vst.msk [vmem:[#allocation3 + $0x98] sm:$0xff] %vm404, 0.0
        %425 = vst.msk [vmem:[#allocation3 + $0xa0] sm:$0xff] %vm404, 0.0
        %426 = vst.msk [vmem:[#allocation3 + $0xa8] sm:$0xff] %vm404, 0.0
        %427 = vst.msk [vmem:[#allocation3 + $0xb0] sm:$0xff] %vm404, 0.0
        %428 = vst.msk [vmem:[#allocation3 + $0xb8] sm:$0xff] %vm404, 0.0
        %429 = vst.msk [vmem:[#allocation3 + $0xc0] sm:$0xff] %vm404, 0.0
        %430 = vst.msk [vmem:[#allocation3 + $0xc8] sm:$0xff] %vm404, 0.0
        %431 = vst.msk [vmem:[#allocation3 + $0xd0] sm:$0xff] %vm404, 0.0
        %432 = vst.msk [vmem:[#allocation3 + $0xd8] sm:$0xff] %vm404, 0.0
        %v433 = vld [vmem:[%s1] sm:$0xff]
        %v434 = vld [vmem:[%s1 + $0x8] sm:$0xff]
        %v435 = vld [vmem:[%s3] sm:$0xff]
        %v436 = vld [vmem:[%s3 + $0x8] sm:$0xff]
        %v437 = vld [vmem:[%s3 + $0x10] sm:$0xff]
        %v438 = vld [vmem:[%s3 + $0x18] sm:$0xff]
        %v439 = vld [vmem:[%s3 + $0x20] sm:$0xff]
        %v440 = vld [vmem:[%s3 + $0x28] sm:$0xff]
        %v441 = vld [vmem:[%s3 + $0x30] sm:$0xff]
        %v442 = vld [vmem:[%s3 + $0x38] sm:$0xff]
        %v443 = vld [vmem:[%s5] sm:$0xff]
        %v444 = vld [vmem:[%s2] sm:$0xff]
        %v445 = vld [vmem:[%s2 + $0x8] sm:$0xff]
        %v446 = vld [vmem:[%s4] sm:$0xff]
        %v447 = vld [vmem:[%s4 + $0x8] sm:$0xff]
        %v448 = vld [vmem:[%s6] sm:$0x3]
        loop: start=0, step=1, limit=18
        $region49: #{_lambda_.1} parent=47 // loop_pre_header
          _
        $region50: #{_lambda_.1} parent=47 // loop_header
          %s450 = sphi 0, %s454
          %p451 = scmp.ge.s32.totalorder %s450, 18
        $region51: #{_lambda_.1} parent=47 // loop_header_branch
          %453 = sbr.rel (%p451) target = $region55
        $region52: #{_lambda_.1} parent=47 // loop_body
          %s455 = smul.u32 %s450, 4
          %s456 = scalar_lea.vmem %s300, %s455
          %v457 = vld [vmem:[%s456] sm:$0x7]
          %s458 = sadd.s32 %s450, 1
          %s459 = smul.u32 %s458, 4
          %s460 = scalar_lea.vmem %s300, %s459
          %v461 = vld [vmem:[%s460] sm:$0x7]
          %s462 = sadd.s32 %s450, 2
          %s463 = smul.u32 %s462, 4
          %s464 = scalar_lea.vmem %s300, %s463
          %v465 = vld [vmem:[%s464] sm:$0x7]
          %s466 = sadd.s32 %s450, 3
          %s467 = smul.u32 %s466, 4
          %s468 = scalar_lea.vmem %s300, %s467
          %v469 = vld [vmem:[%s468] sm:$0x7]
          %s470 = sadd.s32 %s450, 4
          %s471 = smul.u32 %s470, 4
          %s472 = scalar_lea.vmem %s300, %s471
          %v473 = vld [vmem:[%s472] sm:$0x7]
          %v475 = vrot.slane %v457, 5
          %476 = vrot.lane.b32.xlu0 %v475, 127
          %v477 = vpop.permute.xlu0 %476
          %v479 = vrot.slane %v457, 2
          %480 = vrot.lane.b32.xlu0 %v479, 126
          %v481 = vpop.permute.xlu0 %480
          %v483 = vrot.slane %v457, 7
          %484 = vrot.lane.b32.xlu0 %v483, 125
          %v485 = vpop.permute.xlu0 %484
          %v487 = vrot.slane %v457, 4
          %488 = vrot.lane.b32.xlu0 %v487, 124
          %v489 = vpop.permute.xlu0 %488
          %v492 = vrot.slane %v461, 1
          %v494 = vrot.slane %v461, 6
          %495 = vrot.lane.b32.xlu0 %v494, 127
          %v496 = vpop.permute.xlu0 %495
          %v498 = vrot.slane %v461, 3
          %499 = vrot.lane.b32.xlu0 %v498, 126
          %v500 = vpop.permute.xlu0 %499
          %502 = vrot.lane.b32.xlu0 %v461, 125
          %v503 = vpop.permute.xlu0 %502
          %v505 = vrot.slane %v461, 5
          %506 = vrot.lane.b32.xlu0 %v505, 124
          %v507 = vpop.permute.xlu0 %506
          %v510 = vrot.slane %v465, 2
          %v512 = vrot.slane %v465, 7
          %513 = vrot.lane.b32.xlu0 %v512, 127
          %v514 = vpop.permute.xlu0 %513
          %v516 = vrot.slane %v465, 4
          %517 = vrot.lane.b32.xlu0 %v516, 126
          %v518 = vpop.permute.xlu0 %517
          %v520 = vrot.slane %v465, 1
          %521 = vrot.lane.b32.xlu0 %v520, 125
          %v522 = vpop.permute.xlu0 %521
          %v524 = vrot.slane %v465, 6
          %525 = vrot.lane.b32.xlu0 %v524, 124
          %v526 = vpop.permute.xlu0 %525
          %v529 = vrot.slane %v469, 3
          %vm531 = vcmask 1042432
          %v532 = vsel %vm531, %v457, %v477
          %vm533 = vcmask 1045504
          %v534 = vsel %vm533, %v532, %v481
          %vm535 = vcmask 1040384
          %v536 = vsel %vm535, %v481, %v485
          %vm537 = vcmask 1043456
          %v538 = vsel %vm537, %v536, %v489
          %vm539 = vcmask 1046528
          %v540 = vsel %vm539, %v538, %v492
          %vm541 = vcmask 1041408
          %v542 = vsel %vm541, %v492, %v496
          %vm543 = vcmask 1044480
          %v544 = vsel %vm543, %v542, %v500
          %v545 = vsel %vm531, %v503, %v507
          %v546 = vsel %vm533, %v545, %v510
          %v547 = vsel %vm535, %v510, %v514
          %v548 = vsel %vm537, %v547, %v518
          %v549 = vsel %vm539, %v548, %v522
          %v550 = vsel %vm541, %v522, %v526
          %v551 = vsel %vm543, %v550, %v529
          %v552 = vrot.slane %v469, 5
          %553 = vrot.lane.b32.xlu0 %v552, 127
          %v554 = vpop.permute.xlu0 %553
          %v556 = vrot.slane %v469, 2
          %557 = vrot.lane.b32.xlu0 %v556, 126
          %v558 = vpop.permute.xlu0 %557
          %v560 = vrot.slane %v469, 7
          %561 = vrot.lane.b32.xlu0 %v560, 125
          %v562 = vpop.permute.xlu0 %561
          %v565 = vrot.slane %v473, 4
          %566 = vrot.lane.b32.xlu0 %v565, 1
          %v567 = vpop.permute.xlu0 %566
          %v569 = vrot.slane %v473, 1
          %v571 = vrot.slane %v473, 6
          %572 = vrot.lane.b32.xlu0 %v571, 127
          %v573 = vpop.permute.xlu0 %572
          %v575 = vrot.slane %v473, 3
          %576 = vrot.lane.b32.xlu0 %v575, 126
          %v577 = vpop.permute.xlu0 %576
          %579 = vrot.lane.b32.xlu0 %v473, 125
          %v580 = vpop.permute.xlu0 %579
          %v581 = vsel %vm531, %v469, %v554
          %v582 = vsel %vm533, %v581, %v558
          %v583 = vsel %vm535, %v558, %v562
          %v584 = vsel %vm537, %v583, %v567
          %v585 = vsel %vm539, %v584, %v569
          %v586 = vsel %vm541, %v569, %v573
          %v587 = vsel %vm543, %v586, %v577
          %591 = vrot.lane.b32.xlu0 %v582, 127
          %v592 = vpop.permute.xlu0 %591
          %593 = vrot.lane.b32.xlu0 %v585, 127
          %v594 = vpop.permute.xlu0 %593
          %595 = vrot.lane.b32.xlu0 %v587, 127
          %v596 = vpop.permute.xlu0 %595
          %597 = vrot.lane.b32.xlu0 %v580, 127
          %v598 = vpop.permute.xlu0 %597
          %600 = vset.pattern.permute.xlu0 0
          %601 = vperm.xlu0 %600, %v444
          %v602 = vpop.permute.xlu0 %601
          %605 = vset.pattern.permute.xlu0 0
          %606 = vperm.xlu0 %605, %v445
          %v607 = vpop.permute.xlu0 %606
          %615 = vrot.lane.b32.xlu0 %v534, 123
          %v616 = vpop.permute.xlu0 %615
          %617 = vrot.lane.b32.xlu0 %v540, 123
          %v618 = vpop.permute.xlu0 %617
          %619 = vrot.lane.b32.xlu0 %v544, 123
          %v620 = vpop.permute.xlu0 %619
          %621 = vrot.lane.b32.xlu0 %v546, 123
          %v622 = vpop.permute.xlu0 %621
          %623 = vrot.lane.b32.xlu0 %v549, 123
          %v624 = vpop.permute.xlu0 %623
          %625 = vrot.lane.b32.xlu0 %v551, 123
          %v626 = vpop.permute.xlu0 %625
          %627 = vrot.lane.b32.xlu0 %v592, 123
          %v628 = vpop.permute.xlu0 %627
          %629 = vrot.lane.b32.xlu0 %v594, 123
          %v630 = vpop.permute.xlu0 %629
          %631 = vrot.lane.b32.xlu0 %v596, 123
          %v632 = vpop.permute.xlu0 %631
          %633 = vrot.lane.b32.xlu0 %v598, 123
          %v634 = vpop.permute.xlu0 %633
          %vm644 = vcmask 613376
          %v646 = vsel %vm644, %v433, 0
          %v649 = vsel %vm644, %v434, 0
          %v651 = vsel %vm531, %v634, 0
          %653 = vmatprep.subr.mxu0 0.0
          %654 = vmatpush1.msra.mxu0 %v616
          %655 = vmatprep.subr.mxu0 0.0
          %656 = vmatpush1.msra.mxu0 %v618
          %657 = vmatprep.subr.mxu0 0.0
          %658 = vmatpush1.msra.mxu0 %v620
          %659 = vmatprep.subr.mxu0 0.0
          %660 = vmatpush1.msra.mxu0 %v622
          %661 = vmatprep.subr.mxu0 0.0
          %662 = vmatpush1.msra.mxu0 %v624
          %663 = vmatprep.subr.mxu0 0.0
          %664 = vmatpush1.msra.mxu0 %v626
          %665 = vmatprep.subr.mxu0 0.0
          %666 = vmatpush1.msra.mxu0 %v628
          %667 = vmatprep.subr.mxu0 0.0
          %668 = vmatpush1.msra.mxu0 %v630
          %669 = vmatprep.subr.mxu0 0.0
          %670 = vmatpush1.msra.mxu0 %v632
          %671 = vmatprep.subr.mxu0 0.0
          %672 = vmatpush1.msra.mxu0 %v651
          %673 = vmatprep.subr.mxu0 0.0
          %674 = vmatpush1.msra.mxu0 0.0
          %675 = vmatprep.subr.mxu0 0.0
          %676 = vmatpush1.msra.mxu0 0.0
          %677 = vmatprep.subr.mxu0 0.0
          %678 = vmatpush1.msra.mxu0 0.0
          %679 = vmatprep.subr.mxu0 0.0
          %680 = vmatpush1.msra.mxu0 0.0
          %681 = vmatprep.subr.mxu0 0.0
          %682 = vmatpush1.msra.mxu0 0.0
          %683 = vmatprep.subr.mxu0 0.0
          %684 = vmatpush1.msra.mxu0 0.0
          %685 = vmatprep.subr.mxu0 0.0
          %686 = vmatpush1.msra.mxu0 0.0
          %687 = vmatprep.subr.mxu0 0.0
          %688 = vmatpush1.msra.mxu0 0.0
          %689 = vmatprep.subr.mxu0 0.0
          %690 = vmatpush1.msra.mxu0 0.0
          %691 = vmatprep.subr.mxu0 0.0
          %692 = vmatpush1.msra.mxu0 0.0
          %693 = vmatprep.subr.mxu0 0.0
          %694 = vmatpush1.msra.mxu0 0.0
          %695 = vmatprep.subr.mxu0 0.0
          %696 = vmatpush1.msra.mxu0 0.0
          %697 = vmatprep.subr.mxu0 0.0
          %698 = vmatpush1.msra.mxu0 0.0
          %699 = vmatprep.subr.mxu0 0.0
          %700 = vmatpush1.msra.mxu0 0.0
          %701 = vmatprep.subr.mxu0 0.0
          %702 = vmatpush1.msra.mxu0 0.0
          %703 = vmatprep.subr.mxu0 0.0
          %704 = vmatpush1.msra.mxu0 0.0
          %705 = vmatprep.subr.mxu0 0.0
          %706 = vmatpush1.msra.mxu0 0.0
          %707 = vmatprep.subr.mxu0 0.0
          %708 = vmatpush1.msra.mxu0 0.0
          %709 = vmatprep.subr.mxu0 0.0
          %710 = vmatpush1.msra.mxu0 0.0
          %711 = vmatprep.subr.mxu0 0.0
          %712 = vmatpush1.msra.mxu0 0.0
          %713 = vmatprep.subr.mxu0 0.0
          %714 = vmatpush1.msra.mxu0 0.0
          %715 = vmatprep.subr.mxu0 0.0
          %716 = vmatpush1.msra.mxu0 0.0
          %717 = vmatprep.mubr.f32.mxu0 0.0
          %718 = vmatmul.mubr.f32.gmra.mrb[0].mxu0 %v646
          %v719 = vpop.f32.mrb[0].mxu0
          %v720 = vadd.f32 %v602, %v719
          %v721 = vpop.f32.mrb[0].mxu0
          %722 = vmatprep.mubr.f32.mxu0 0.0
          %723 = vmatmul.mubr.f32.gmra.mrb[0].mxu0 %v649
          %v724 = vpop.f32.mrb[0].mxu0
          %v725 = vadd.f32 %v607, %v724
          %v726 = vpop.f32.mrb[0].mxu0
          %727 = vdwg.mxu0
          %v728 = vmax.f32 %v720, 0.0
          %v729 = vmax.f32 %v725, 0.0
          %p730 = scmp.gt.s32.totalorder %s23, 0
          %p731 = scmp.ge.s32.totalorder %s450, 5
          %p732 = por %p730, %p731
          %p733 = scmp.lt.s32.totalorder %s23, 1
          %p734 = scmp.lt.s32.totalorder %s450, 13
          %p735 = por %p733, %p734
          %p736 = pnand %p732, %p735
          %p737 = pneg %p736
          %s738 = scalar_select %p737, 1, 0
          %v739 = vstv %s738
          %vm740 = vcmp.eq.s32.totalorder %v739, 1
          %v741 = vsel %vm740, %v728, 0.0
          %v742 = vsel %vm740, %v729, 0.0
          %745 = vrot.lane.b32.xlu0 %v741, 5
          %v746 = vpop.permute.xlu0 %745
          %747 = vrot.lane.b32.xlu0 %v742, 5
          %v748 = vpop.permute.xlu0 %747
          %s751 = smul.u32 %s450, 16
          %s752 = scalar_lea.vmem [#allocation2], %s751
          %vm753 = vcmask 171048
          %754 = vst.msk [vmem:[%s752] sm:$0xff] %vm753, %v746
          %755 = vst.msk [vmem:[%s752 + $0x8] sm:$0xff] %vm753, %v748
        $region53: #{_lambda_.1} parent=47 // loop_footer
          %s454 = sadd.s32 1, %s450
        $region54: #{_lambda_.1} parent=47 // loop_footer_branch
          %449 = sbr.rel target = $region50
        $region55: #{_lambda_.1} parent=47 // loop_exit
          _
        loop: start=0, step=1, limit=14
        $region56: #{_lambda_.1} parent=47 // loop_pre_header
          _
        $region57: #{_lambda_.1} parent=47 // loop_header
          %s757 = sphi 0, %s761
          %p758 = scmp.ge.s32.totalorder %s757, 14
        $region58: #{_lambda_.1} parent=47 // loop_header_branch
          %760 = sbr.rel (%p758) target = $region62
        $region59: #{_lambda_.1} parent=47 // loop_body
          %s762 = smul.u32 %s757, 16
          %s763 = scalar_lea.vmem [#allocation2], %s762
          %v764 = vld [vmem:[%s763] sm:$0xff]
          %v765 = vld [vmem:[%s763 + $0x8] sm:$0xff]
          %s766 = sadd.s32 %s757, 1
          %s767 = smul.u32 %s766, 16
          %s768 = scalar_lea.vmem [#allocation2], %s767
          %v769 = vld [vmem:[%s768] sm:$0xff]
          %v770 = vld [vmem:[%s768 + $0x8] sm:$0xff]
          %s771 = sadd.s32 %s757, 2
          %s772 = smul.u32 %s771, 16
          %s773 = scalar_lea.vmem [#allocation2], %s772
          %v774 = vld [vmem:[%s773] sm:$0xff]
          %v775 = vld [vmem:[%s773 + $0x8] sm:$0xff]
          %s776 = sadd.s32 %s757, 3
          %s777 = smul.u32 %s776, 16
          %s778 = scalar_lea.vmem [#allocation2], %s777
          %v779 = vld [vmem:[%s778] sm:$0xff]
          %v780 = vld [vmem:[%s778 + $0x8] sm:$0xff]
          %s781 = sadd.s32 %s757, 4
          %s782 = smul.u32 %s781, 16
          %s783 = scalar_lea.vmem [#allocation2], %s782
          %v784 = vld [vmem:[%s783] sm:$0xff]
          %v785 = vld [vmem:[%s783 + $0x8] sm:$0xff]
          %788 = vrot.lane.b32.xlu0 %v764, 127
          %v789 = vpop.permute.xlu0 %788
          %790 = vrot.lane.b32.xlu0 %v765, 127
          %v791 = vpop.permute.xlu0 %790
          %792 = vrot.lane.b32.xlu0 %v764, 126
          %v793 = vpop.permute.xlu0 %792
          %794 = vrot.lane.b32.xlu0 %v765, 126
          %v795 = vpop.permute.xlu0 %794
          %796 = vrot.lane.b32.xlu0 %v764, 125
          %v797 = vpop.permute.xlu0 %796
          %798 = vrot.lane.b32.xlu0 %v765, 125
          %v799 = vpop.permute.xlu0 %798
          %800 = vrot.lane.b32.xlu0 %v764, 124
          %v801 = vpop.permute.xlu0 %800
          %802 = vrot.lane.b32.xlu0 %v765, 124
          %v803 = vpop.permute.xlu0 %802
          %806 = vrot.lane.b32.xlu0 %v769, 127
          %v807 = vpop.permute.xlu0 %806
          %808 = vrot.lane.b32.xlu0 %v770, 127
          %v809 = vpop.permute.xlu0 %808
          %810 = vrot.lane.b32.xlu0 %v769, 126
          %v811 = vpop.permute.xlu0 %810
          %812 = vrot.lane.b32.xlu0 %v770, 126
          %v813 = vpop.permute.xlu0 %812
          %814 = vrot.lane.b32.xlu0 %v769, 125
          %v815 = vpop.permute.xlu0 %814
          %816 = vrot.lane.b32.xlu0 %v770, 125
          %v817 = vpop.permute.xlu0 %816
          %818 = vrot.lane.b32.xlu0 %v769, 124
          %v819 = vpop.permute.xlu0 %818
          %820 = vrot.lane.b32.xlu0 %v770, 124
          %v821 = vpop.permute.xlu0 %820
          %824 = vrot.lane.b32.xlu0 %v774, 127
          %v825 = vpop.permute.xlu0 %824
          %826 = vrot.lane.b32.xlu0 %v775, 127
          %v827 = vpop.permute.xlu0 %826
          %828 = vrot.lane.b32.xlu0 %v774, 126
          %v829 = vpop.permute.xlu0 %828
          %830 = vrot.lane.b32.xlu0 %v775, 126
          %v831 = vpop.permute.xlu0 %830
          %832 = vrot.lane.b32.xlu0 %v774, 125
          %v833 = vpop.permute.xlu0 %832
          %834 = vrot.lane.b32.xlu0 %v775, 125
          %v835 = vpop.permute.xlu0 %834
          %836 = vrot.lane.b32.xlu0 %v774, 124
          %v837 = vpop.permute.xlu0 %836
          %838 = vrot.lane.b32.xlu0 %v775, 124
          %v839 = vpop.permute.xlu0 %838
          %842 = vrot.lane.b32.xlu0 %v779, 127
          %v843 = vpop.permute.xlu0 %842
          %844 = vrot.lane.b32.xlu0 %v780, 127
          %v845 = vpop.permute.xlu0 %844
          %846 = vrot.lane.b32.xlu0 %v779, 126
          %v847 = vpop.permute.xlu0 %846
          %848 = vrot.lane.b32.xlu0 %v780, 126
          %v849 = vpop.permute.xlu0 %848
          %850 = vrot.lane.b32.xlu0 %v779, 125
          %v851 = vpop.permute.xlu0 %850
          %852 = vrot.lane.b32.xlu0 %v780, 125
          %v853 = vpop.permute.xlu0 %852
          %856 = vrot.lane.b32.xlu0 %v784, 1
          %v857 = vpop.permute.xlu0 %856
          %858 = vrot.lane.b32.xlu0 %v785, 1
          %v859 = vpop.permute.xlu0 %858
          %860 = vrot.lane.b32.xlu0 %v784, 127
          %v861 = vpop.permute.xlu0 %860
          %862 = vrot.lane.b32.xlu0 %v785, 127
          %v863 = vpop.permute.xlu0 %862
          %864 = vrot.lane.b32.xlu0 %v784, 126
          %v865 = vpop.permute.xlu0 %864
          %866 = vrot.lane.b32.xlu0 %v785, 126
          %v867 = vpop.permute.xlu0 %866
          %868 = vrot.lane.b32.xlu0 %v784, 125
          %v869 = vpop.permute.xlu0 %868
          %870 = vrot.lane.b32.xlu0 %v785, 125
          %v871 = vpop.permute.xlu0 %870
          %872 = vrot.lane.b32.xlu0 %v843, 127
          %v873 = vpop.permute.xlu0 %872
          %874 = vrot.lane.b32.xlu0 %v845, 127
          %v875 = vpop.permute.xlu0 %874
          %876 = vrot.lane.b32.xlu0 %v847, 127
          %v877 = vpop.permute.xlu0 %876
          %878 = vrot.lane.b32.xlu0 %v849, 127
          %v879 = vpop.permute.xlu0 %878
          %880 = vrot.lane.b32.xlu0 %v851, 127
          %v881 = vpop.permute.xlu0 %880
          %882 = vrot.lane.b32.xlu0 %v853, 127
          %v883 = vpop.permute.xlu0 %882
          %884 = vrot.lane.b32.xlu0 %v857, 127
          %v885 = vpop.permute.xlu0 %884
          %886 = vrot.lane.b32.xlu0 %v859, 127
          %v887 = vpop.permute.xlu0 %886
          %888 = vrot.lane.b32.xlu0 %v861, 127
          %v889 = vpop.permute.xlu0 %888
          %890 = vrot.lane.b32.xlu0 %v863, 127
          %v891 = vpop.permute.xlu0 %890
          %892 = vrot.lane.b32.xlu0 %v865, 127
          %v893 = vpop.permute.xlu0 %892
          %894 = vrot.lane.b32.xlu0 %v867, 127
          %v895 = vpop.permute.xlu0 %894
          %896 = vrot.lane.b32.xlu0 %v869, 127
          %v897 = vpop.permute.xlu0 %896
          %898 = vrot.lane.b32.xlu0 %v871, 127
          %v899 = vpop.permute.xlu0 %898
          %901 = vset.pattern.permute.xlu0 0
          %902 = vperm.xlu0 %901, %v446
          %v903 = vpop.permute.xlu0 %902
          %906 = vset.pattern.permute.xlu0 0
          %907 = vperm.xlu0 %906, %v447
          %v908 = vpop.permute.xlu0 %907
          %910 = vrot.lane.b32.xlu0 %v789, 125
          %v911 = vpop.permute.xlu0 %910
          %912 = vrot.lane.b32.xlu0 %v791, 125
          %v913 = vpop.permute.xlu0 %912
          %914 = vrot.lane.b32.xlu0 %v793, 125
          %v915 = vpop.permute.xlu0 %914
          %916 = vrot.lane.b32.xlu0 %v795, 125
          %v917 = vpop.permute.xlu0 %916
          %918 = vrot.lane.b32.xlu0 %v797, 125
          %v919 = vpop.permute.xlu0 %918
          %920 = vrot.lane.b32.xlu0 %v799, 125
          %v921 = vpop.permute.xlu0 %920
          %922 = vrot.lane.b32.xlu0 %v801, 125
          %v923 = vpop.permute.xlu0 %922
          %924 = vrot.lane.b32.xlu0 %v803, 125
          %v925 = vpop.permute.xlu0 %924
          %926 = vrot.lane.b32.xlu0 %v807, 125
          %v927 = vpop.permute.xlu0 %926
          %928 = vrot.lane.b32.xlu0 %v809, 125
          %v929 = vpop.permute.xlu0 %928
          %930 = vrot.lane.b32.xlu0 %v811, 125
          %v931 = vpop.permute.xlu0 %930
          %932 = vrot.lane.b32.xlu0 %v813, 125
          %v933 = vpop.permute.xlu0 %932
          %934 = vrot.lane.b32.xlu0 %v815, 125
          %v935 = vpop.permute.xlu0 %934
          %936 = vrot.lane.b32.xlu0 %v817, 125
          %v937 = vpop.permute.xlu0 %936
          %938 = vrot.lane.b32.xlu0 %v819, 125
          %v939 = vpop.permute.xlu0 %938
          %940 = vrot.lane.b32.xlu0 %v821, 125
          %v941 = vpop.permute.xlu0 %940
          %942 = vrot.lane.b32.xlu0 %v825, 125
          %v943 = vpop.permute.xlu0 %942
          %944 = vrot.lane.b32.xlu0 %v827, 125
          %v945 = vpop.permute.xlu0 %944
          %946 = vrot.lane.b32.xlu0 %v829, 125
          %v947 = vpop.permute.xlu0 %946
          %948 = vrot.lane.b32.xlu0 %v831, 125
          %v949 = vpop.permute.xlu0 %948
          %950 = vrot.lane.b32.xlu0 %v833, 125
          %v951 = vpop.permute.xlu0 %950
          %952 = vrot.lane.b32.xlu0 %v835, 125
          %v953 = vpop.permute.xlu0 %952
          %954 = vrot.lane.b32.xlu0 %v837, 125
          %v955 = vpop.permute.xlu0 %954
          %956 = vrot.lane.b32.xlu0 %v839, 125
          %v957 = vpop.permute.xlu0 %956
          %958 = vrot.lane.b32.xlu0 %v843, 125
          %v959 = vpop.permute.xlu0 %958
          %960 = vrot.lane.b32.xlu0 %v845, 125
          %v961 = vpop.permute.xlu0 %960
          %962 = vrot.lane.b32.xlu0 %v873, 125
          %v963 = vpop.permute.xlu0 %962
          %964 = vrot.lane.b32.xlu0 %v875, 125
          %v965 = vpop.permute.xlu0 %964
          %966 = vrot.lane.b32.xlu0 %v877, 125
          %v967 = vpop.permute.xlu0 %966
          %968 = vrot.lane.b32.xlu0 %v879, 125
          %v969 = vpop.permute.xlu0 %968
          %970 = vrot.lane.b32.xlu0 %v881, 125
          %v971 = vpop.permute.xlu0 %970
          %972 = vrot.lane.b32.xlu0 %v883, 125
          %v973 = vpop.permute.xlu0 %972
          %974 = vrot.lane.b32.xlu0 %v885, 125
          %v975 = vpop.permute.xlu0 %974
          %976 = vrot.lane.b32.xlu0 %v887, 125
          %v977 = vpop.permute.xlu0 %976
          %978 = vrot.lane.b32.xlu0 %v861, 125
          %v979 = vpop.permute.xlu0 %978
          %980 = vrot.lane.b32.xlu0 %v863, 125
          %v981 = vpop.permute.xlu0 %980
          %982 = vrot.lane.b32.xlu0 %v889, 125
          %v983 = vpop.permute.xlu0 %982
          %984 = vrot.lane.b32.xlu0 %v891, 125
          %v985 = vpop.permute.xlu0 %984
          %986 = vrot.lane.b32.xlu0 %v893, 125
          %v987 = vpop.permute.xlu0 %986
          %988 = vrot.lane.b32.xlu0 %v895, 125
          %v989 = vpop.permute.xlu0 %988
          %990 = vrot.lane.b32.xlu0 %v897, 125
          %v991 = vpop.permute.xlu0 %990
          %992 = vrot.lane.b32.xlu0 %v899, 125
          %v993 = vpop.permute.xlu0 %992
          %vm1044 = vcmask 130048
          %v1046 = vsel %vm1044, %v438, 0
          %v1049 = vsel %vm1044, %v442, 0
          %1051 = vmatprep.subr.mxu0 0.0
          %1052 = vmatpush1.msra.mxu0 %v797
          %1053 = vmatprep.subr.mxu0 0.0
          %1054 = vmatpush1.msra.mxu0 %v799
          %1055 = vmatprep.subr.mxu0 0.0
          %1056 = vmatpush1.msra.mxu0 %v911
          %1057 = vmatprep.subr.mxu0 0.0
          %1058 = vmatpush1.msra.mxu0 %v913
          %1059 = vmatprep.subr.mxu0 0.0
          %1060 = vmatpush1.msra.mxu0 %v915
          %1061 = vmatprep.subr.mxu0 0.0
          %1062 = vmatpush1.msra.mxu0 %v917
          %1063 = vmatprep.subr.mxu0 0.0
          %1064 = vmatpush1.msra.mxu0 %v919
          %1065 = vmatprep.subr.mxu0 0.0
          %1066 = vmatpush1.msra.mxu0 %v921
          %1067 = vmatprep.subr.mxu0 0.0
          %1068 = vmatpush1.msra.mxu0 %v923
          %1069 = vmatprep.subr.mxu0 0.0
          %1070 = vmatpush1.msra.mxu0 %v925
          %1071 = vmatprep.subr.mxu0 0.0
          %1072 = vmatpush1.msra.mxu0 %v815
          %1073 = vmatprep.subr.mxu0 0.0
          %1074 = vmatpush1.msra.mxu0 %v817
          %1075 = vmatprep.subr.mxu0 0.0
          %1076 = vmatpush1.msra.mxu0 %v927
          %1077 = vmatprep.subr.mxu0 0.0
          %1078 = vmatpush1.msra.mxu0 %v929
          %1079 = vmatprep.subr.mxu0 0.0
          %1080 = vmatpush1.msra.mxu0 %v931
          %1081 = vmatprep.subr.mxu0 0.0
          %1082 = vmatpush1.msra.mxu0 %v933
          %1083 = vmatprep.subr.mxu0 0.0
          %1084 = vmatpush1.msra.mxu0 %v935
          %1085 = vmatprep.subr.mxu0 0.0
          %1086 = vmatpush1.msra.mxu0 %v937
          %1087 = vmatprep.subr.mxu0 0.0
          %1088 = vmatpush1.msra.mxu0 %v939
          %1089 = vmatprep.subr.mxu0 0.0
          %1090 = vmatpush1.msra.mxu0 %v941
          %1091 = vmatprep.subr.mxu0 0.0
          %1092 = vmatpush1.msra.mxu0 %v833
          %1093 = vmatprep.subr.mxu0 0.0
          %1094 = vmatpush1.msra.mxu0 %v835
          %1095 = vmatprep.subr.mxu0 0.0
          %1096 = vmatpush1.msra.mxu0 %v943
          %1097 = vmatprep.subr.mxu0 0.0
          %1098 = vmatpush1.msra.mxu0 %v945
          %1099 = vmatprep.subr.mxu0 0.0
          %1100 = vmatpush1.msra.mxu0 %v947
          %1101 = vmatprep.subr.mxu0 0.0
          %1102 = vmatpush1.msra.mxu0 %v949
          %1103 = vmatprep.subr.mxu0 0.0
          %1104 = vmatpush1.msra.mxu0 %v951
          %1105 = vmatprep.subr.mxu0 0.0
          %1106 = vmatpush1.msra.mxu0 %v953
          %1107 = vmatprep.subr.mxu0 0.0
          %1108 = vmatpush1.msra.mxu0 %v955
          %1109 = vmatprep.subr.mxu0 0.0
          %1110 = vmatpush1.msra.mxu0 %v957
          %1111 = vmatprep.subr.mxu0 0.0
          %1112 = vmatpush1.msra.mxu0 %v851
          %1113 = vmatprep.subr.mxu0 0.0
          %1114 = vmatpush1.msra.mxu0 %v853
          %1115 = vmatprep.mubr.f32.mxu0 %v436
          %1116 = vmatmul.mubr.f32.gmra.mrb[0].mxu0 %v435
          %v1117 = vpop.f32.mrb[0].mxu0
          %v1118 = vadd.f32 %v903, %v1117
          %v1119 = vpop.f32.mrb[0].mxu0
          %1120 = vmatprep.mubr.f32.mxu0 %v440
          %1121 = vmatmul.mubr.f32.gmra.mrb[0].mxu0 %v439
          %v1122 = vpop.f32.mrb[0].mxu0
          %v1123 = vadd.f32 %v908, %v1122
          %v1124 = vpop.f32.mrb[0].mxu0
          %1125 = vdwg.mxu0
          %1126 = vmatprep.subr.mxu0 0.0
          %1127 = vmatpush1.msra.mxu0 %v959
          %1128 = vmatprep.subr.mxu0 0.0
          %1129 = vmatpush1.msra.mxu0 %v961
          %1130 = vmatprep.subr.mxu0 0.0
          %1131 = vmatpush1.msra.mxu0 %v963
          %1132 = vmatprep.subr.mxu0 0.0
          %1133 = vmatpush1.msra.mxu0 %v965
          %1134 = vmatprep.subr.mxu0 0.0
          %1135 = vmatpush1.msra.mxu0 %v967
          %1136 = vmatprep.subr.mxu0 0.0
          %1137 = vmatpush1.msra.mxu0 %v969
          %1138 = vmatprep.subr.mxu0 0.0
          %1139 = vmatpush1.msra.mxu0 %v971
          %1140 = vmatprep.subr.mxu0 0.0
          %1141 = vmatpush1.msra.mxu0 %v973
          %1142 = vmatprep.subr.mxu0 0.0
          %1143 = vmatpush1.msra.mxu0 %v975
          %1144 = vmatprep.subr.mxu0 0.0
          %1145 = vmatpush1.msra.mxu0 %v977
          %1146 = vmatprep.subr.mxu0 0.0
          %1147 = vmatpush1.msra.mxu0 %v979
          %1148 = vmatprep.subr.mxu0 0.0
          %1149 = vmatpush1.msra.mxu0 %v981
          %1150 = vmatprep.subr.mxu0 0.0
          %1151 = vmatpush1.msra.mxu0 %v983
          %1152 = vmatprep.subr.mxu0 0.0
          %1153 = vmatpush1.msra.mxu0 %v985
          %1154 = vmatprep.subr.mxu0 0.0
          %1155 = vmatpush1.msra.mxu0 %v987
          %1156 = vmatprep.subr.mxu0 0.0
          %1157 = vmatpush1.msra.mxu0 %v989
          %1158 = vmatprep.subr.mxu0 0.0
          %1159 = vmatpush1.msra.mxu0 %v991
          %1160 = vmatprep.subr.mxu0 0.0
          %1161 = vmatpush1.msra.mxu0 %v993
          %1162 = vmatprep.subr.mxu0 0.0
          %1163 = vmatpush1.msra.mxu0 0.0
          %1164 = vmatprep.subr.mxu0 0.0
          %1165 = vmatpush1.msra.mxu0 0.0
          %1166 = vmatprep.subr.mxu0 0.0
          %1167 = vmatpush1.msra.mxu0 0.0
          %1168 = vmatprep.subr.mxu0 0.0
          %1169 = vmatpush1.msra.mxu0 0.0
          %1170 = vmatprep.subr.mxu0 0.0
          %1171 = vmatpush1.msra.mxu0 0.0
          %1172 = vmatprep.subr.mxu0 0.0
          %1173 = vmatpush1.msra.mxu0 0.0
          %1174 = vmatprep.subr.mxu0 0.0
          %1175 = vmatpush1.msra.mxu0 0.0
          %1176 = vmatprep.subr.mxu0 0.0
          %1177 = vmatpush1.msra.mxu0 0.0
          %1178 = vmatprep.subr.mxu0 0.0
          %1179 = vmatpush1.msra.mxu0 0.0
          %1180 = vmatprep.subr.mxu0 0.0
          %1181 = vmatpush1.msra.mxu0 0.0
          %1182 = vmatprep.subr.mxu0 0.0
          %1183 = vmatpush1.msra.mxu0 0.0
          %1184 = vmatprep.subr.mxu0 0.0
          %1185 = vmatpush1.msra.mxu0 0.0
          %1186 = vmatprep.subr.mxu0 0.0
          %1187 = vmatpush1.msra.mxu0 0.0
          %1188 = vmatprep.subr.mxu0 0.0
          %1189 = vmatpush1.msra.mxu0 0.0
          %1190 = vmatprep.mubr.f32.mxu0 %v1046
          %1191 = vmatmul.mubr.f32.gmra.mrb[0].mxu0 %v437
          %v1192 = vpop.f32.mrb[0].mxu0
          %v1193 = vadd.f32 %v1118, %v1192
          %v1194 = vpop.f32.mrb[0].mxu0
          %1195 = vmatprep.mubr.f32.mxu0 %v1049
          %1196 = vmatmul.mubr.f32.gmra.mrb[0].mxu0 %v441
          %v1197 = vpop.f32.mrb[0].mxu0
          %v1198 = vadd.f32 %v1123, %v1197
          %v1199 = vpop.f32.mrb[0].mxu0
          %1200 = vdwg.mxu0
          %v1201 = vmax.f32 %v1193, 0.0
          %v1202 = vmax.f32 %v1198, 0.0
          %p1203 = scmp.gt.s32.totalorder %s23, 0
          %p1204 = scmp.ge.s32.totalorder %s757, 3
          %p1205 = por %p1203, %p1204
          %p1206 = scmp.lt.s32.totalorder %s23, 1
          %p1207 = scmp.lt.s32.totalorder %s757, 11
          %p1208 = por %p1206, %p1207
          %p1209 = pnand %p1205, %p1208
          %p1210 = pneg %p1209
          %s1211 = scalar_select %p1210, 1, 0
          %v1212 = vstv %s1211
          %vm1213 = vcmp.eq.s32.totalorder %v1212, 1
          %v1214 = vsel %vm1213, %v1201, 0.0
          %v1215 = vsel %vm1213, %v1202, 0.0
          %1218 = vrot.lane.b32.xlu0 %v1214, 3
          %v1219 = vpop.permute.xlu0 %1218
          %1220 = vrot.lane.b32.xlu0 %v1215, 3
          %v1221 = vpop.permute.xlu0 %1220
          %s1224 = scalar_lea.vmem [#allocation3], %s762
          %vm1225 = vcmask 154648
          %1226 = vst.msk [vmem:[%s1224] sm:$0xff] %vm1225, %v1219
          %1227 = vst.msk [vmem:[%s1224 + $0x8] sm:$0xff] %vm1225, %v1221
        $region60: #{_lambda_.1} parent=47 // loop_footer
          %s761 = sadd.s32 1, %s757
        $region61: #{_lambda_.1} parent=47 // loop_footer_branch
          %756 = sbr.rel target = $region57
        $region62: #{_lambda_.1} parent=47 // loop_exit
          _
        loop: start=0, step=1, limit=10
        $region63: #{_lambda_.1} parent=47 // loop_pre_header
          _
        $region64: #{_lambda_.1} parent=47 // loop_header
          %s1229 = sphi 0, %s1233
          %p1230 = scmp.ge.s32.totalorder %s1229, 10
        $region65: #{_lambda_.1} parent=47 // loop_header_branch
          %1232 = sbr.rel (%p1230) target = $region69
        $region66: #{_lambda_.1} parent=47 // loop_body
          %s1234 = smul.u32 %s1229, 16
          %s1235 = scalar_lea.vmem [#allocation3], %s1234
          %v1236 = vld [vmem:[%s1235] sm:$0xff]
          %v1237 = vld [vmem:[%s1235 + $0x8] sm:$0xff]
          %s1238 = sadd.s32 %s1229, 1
          %s1239 = smul.u32 %s1238, 16
          %s1240 = scalar_lea.vmem [#allocation3], %s1239
          %v1241 = vld [vmem:[%s1240] sm:$0xff]
          %v1242 = vld [vmem:[%s1240 + $0x8] sm:$0xff]
          %s1243 = sadd.s32 %s1229, 2
          %s1244 = smul.u32 %s1243, 16
          %s1245 = scalar_lea.vmem [#allocation3], %s1244
          %v1246 = vld [vmem:[%s1245] sm:$0xff]
          %v1247 = vld [vmem:[%s1245 + $0x8] sm:$0xff]
          %s1248 = sadd.s32 %s1229, 3
          %s1249 = smul.u32 %s1248, 16
          %s1250 = scalar_lea.vmem [#allocation3], %s1249
          %v1251 = vld [vmem:[%s1250] sm:$0xff]
          %v1252 = vld [vmem:[%s1250 + $0x8] sm:$0xff]
          %s1253 = sadd.s32 %s1229, 4
          %s1254 = smul.u32 %s1253, 16
          %s1255 = scalar_lea.vmem [#allocation3], %s1254
          %v1256 = vld [vmem:[%s1255] sm:$0xff]
          %v1257 = vld [vmem:[%s1255 + $0x8] sm:$0xff]
          %1260 = vrot.lane.b32.xlu0 %v1236, 127
          %v1261 = vpop.permute.xlu0 %1260
          %1262 = vrot.lane.b32.xlu0 %v1237, 127
          %v1263 = vpop.permute.xlu0 %1262
          %1266 = vrot.lane.b32.xlu0 %v1236, 126
          %v1267 = vpop.permute.xlu0 %1266
          %1268 = vrot.lane.b32.xlu0 %v1237, 126
          %v1269 = vpop.permute.xlu0 %1268
          %1272 = vrot.lane.b32.xlu0 %v1236, 125
          %v1273 = vpop.permute.xlu0 %1272
          %1274 = vrot.lane.b32.xlu0 %v1237, 125
          %v1275 = vpop.permute.xlu0 %1274
          %1278 = vrot.lane.b32.xlu0 %v1236, 124
          %v1279 = vpop.permute.xlu0 %1278
          %1280 = vrot.lane.b32.xlu0 %v1237, 124
          %v1281 = vpop.permute.xlu0 %1280
          %1286 = vrot.lane.b32.xlu0 %v1241, 127
          %v1287 = vpop.permute.xlu0 %1286
          %1288 = vrot.lane.b32.xlu0 %v1242, 127
          %v1289 = vpop.permute.xlu0 %1288
          %1292 = vrot.lane.b32.xlu0 %v1241, 126
          %v1293 = vpop.permute.xlu0 %1292
          %1294 = vrot.lane.b32.xlu0 %v1242, 126
          %v1295 = vpop.permute.xlu0 %1294
          %1298 = vrot.lane.b32.xlu0 %v1241, 125
          %v1299 = vpop.permute.xlu0 %1298
          %1300 = vrot.lane.b32.xlu0 %v1242, 125
          %v1301 = vpop.permute.xlu0 %1300
          %1304 = vrot.lane.b32.xlu0 %v1241, 124
          %v1305 = vpop.permute.xlu0 %1304
          %1306 = vrot.lane.b32.xlu0 %v1242, 124
          %v1307 = vpop.permute.xlu0 %1306
          %1312 = vrot.lane.b32.xlu0 %v1246, 127
          %v1313 = vpop.permute.xlu0 %1312
          %1314 = vrot.lane.b32.xlu0 %v1247, 127
          %v1315 = vpop.permute.xlu0 %1314
          %1318 = vrot.lane.b32.xlu0 %v1246, 126
          %v1319 = vpop.permute.xlu0 %1318
          %1320 = vrot.lane.b32.xlu0 %v1247, 126
          %v1321 = vpop.permute.xlu0 %1320
          %1324 = vrot.lane.b32.xlu0 %v1246, 125
          %v1325 = vpop.permute.xlu0 %1324
          %1326 = vrot.lane.b32.xlu0 %v1247, 125
          %v1327 = vpop.permute.xlu0 %1326
          %1330 = vrot.lane.b32.xlu0 %v1246, 124
          %v1331 = vpop.permute.xlu0 %1330
          %1332 = vrot.lane.b32.xlu0 %v1247, 124
          %v1333 = vpop.permute.xlu0 %1332
          %1338 = vrot.lane.b32.xlu0 %v1251, 127
          %v1339 = vpop.permute.xlu0 %1338
          %1340 = vrot.lane.b32.xlu0 %v1252, 127
          %v1341 = vpop.permute.xlu0 %1340
          %1342 = vrot.lane.b32.xlu0 %v1251, 126
          %v1343 = vpop.permute.xlu0 %1342
          %1344 = vrot.lane.b32.xlu0 %v1252, 126
          %v1345 = vpop.permute.xlu0 %1344
          %1346 = vrot.lane.b32.xlu0 %v1251, 125
          %v1347 = vpop.permute.xlu0 %1346
          %1348 = vrot.lane.b32.xlu0 %v1252, 125
          %v1349 = vpop.permute.xlu0 %1348
          %1352 = vrot.lane.b32.xlu0 %v1256, 1
          %v1353 = vpop.permute.xlu0 %1352
          %1354 = vrot.lane.b32.xlu0 %v1257, 1
          %v1355 = vpop.permute.xlu0 %1354
          %1356 = vrot.lane.b32.xlu0 %v1256, 127
          %v1357 = vpop.permute.xlu0 %1356
          %1358 = vrot.lane.b32.xlu0 %v1257, 127
          %v1359 = vpop.permute.xlu0 %1358
          %1360 = vrot.lane.b32.xlu0 %v1256, 126
          %v1361 = vpop.permute.xlu0 %1360
          %1362 = vrot.lane.b32.xlu0 %v1257, 126
          %v1363 = vpop.permute.xlu0 %1362
          %1364 = vrot.lane.b32.xlu0 %v1256, 125
          %v1365 = vpop.permute.xlu0 %1364
          %1366 = vrot.lane.b32.xlu0 %v1257, 125
          %v1367 = vpop.permute.xlu0 %1366
          %1368 = vrot.lane.b32.xlu0 %v1339, 127
          %v1369 = vpop.permute.xlu0 %1368
          %1370 = vrot.lane.b32.xlu0 %v1341, 127
          %v1371 = vpop.permute.xlu0 %1370
          %1372 = vrot.lane.b32.xlu0 %v1343, 127
          %v1373 = vpop.permute.xlu0 %1372
          %1374 = vrot.lane.b32.xlu0 %v1345, 127
          %v1375 = vpop.permute.xlu0 %1374
          %1376 = vrot.lane.b32.xlu0 %v1347, 127
          %v1377 = vpop.permute.xlu0 %1376
          %1378 = vrot.lane.b32.xlu0 %v1349, 127
          %v1379 = vpop.permute.xlu0 %1378
          %1380 = vrot.lane.b32.xlu0 %v1353, 127
          %v1381 = vpop.permute.xlu0 %1380
          %1382 = vrot.lane.b32.xlu0 %v1355, 127
          %v1383 = vpop.permute.xlu0 %1382
          %1384 = vrot.lane.b32.xlu0 %v1357, 127
          %v1385 = vpop.permute.xlu0 %1384
          %1386 = vrot.lane.b32.xlu0 %v1359, 127
          %v1387 = vpop.permute.xlu0 %1386
          %1388 = vrot.lane.b32.xlu0 %v1361, 127
          %v1389 = vpop.permute.xlu0 %1388
          %1390 = vrot.lane.b32.xlu0 %v1363, 127
          %v1391 = vpop.permute.xlu0 %1390
          %1392 = vrot.lane.b32.xlu0 %v1365, 127
          %v1393 = vpop.permute.xlu0 %1392
          %1394 = vrot.lane.b32.xlu0 %v1367, 127
          %v1395 = vpop.permute.xlu0 %1394
          %1415 = vset.pattern.permute.xlu0 0
          %1416 = vperm.xlu0 %1415, %v448
          %v1417 = vpop.permute.xlu0 %1416
          %v1420 = vcombine.high %v443, %v443
          %v1422 = vunpack.c.l.s4 1983009808
          %v1423 = vunpack.c.0.s8 %v1422
          %v1424 = vlaneseq
          %v1425 = vshrl.u32 %v1424, 7
          %v1426 = vsub.s32 %v1423, %v1425
          %v1427 = vrot.slane %v443, %v1426
          %v1429 = vunpack.c.l.s4 1983009808
          %v1430 = vunpack.c.0.s8 %v1429
          %v1431 = vlaneseq
          %v1432 = vshrl.u32 %v1431, 7
          %v1433 = vsub.s32 %v1430, %v1432
          %v1434 = vrot.slane %v1420, %v1433
          %v1435 = vcombine.high %v1427, %v1427
          %v1436 = vcombine.high %v1434, %v1434
          %vm1440 = vcmask 130048
          %v1441 = vsel %vm1440, %v1436, 0
          %1443 = vmatprep.subr.mxu0 0.0
          %1444 = vmatpush1.msra.mxu0 %v1236
          %1445 = vmatprep.subr.mxu0 0.0
          %1446 = vmatpush1.msra.mxu0 %v1237
          %1447 = vmatprep.subr.mxu0 0.0
          %1448 = vmatpush1.msra.mxu0 %v1261
          %1449 = vmatprep.subr.mxu0 0.0
          %1450 = vmatpush1.msra.mxu0 %v1263
          %1451 = vmatprep.subr.mxu0 0.0
          %1452 = vmatpush1.msra.mxu0 %v1267
          %1453 = vmatprep.subr.mxu0 0.0
          %1454 = vmatpush1.msra.mxu0 %v1269
          %1455 = vmatprep.subr.mxu0 0.0
          %1456 = vmatpush1.msra.mxu0 %v1273
          %1457 = vmatprep.subr.mxu0 0.0
          %1458 = vmatpush1.msra.mxu0 %v1275
          %1459 = vmatprep.subr.mxu0 0.0
          %1460 = vmatpush1.msra.mxu0 %v1279
          %1461 = vmatprep.subr.mxu0 0.0
          %1462 = vmatpush1.msra.mxu0 %v1281
          %1463 = vmatprep.subr.mxu0 0.0
          %1464 = vmatpush1.msra.mxu0 %v1241
          %1465 = vmatprep.subr.mxu0 0.0
          %1466 = vmatpush1.msra.mxu0 %v1242
          %1467 = vmatprep.subr.mxu0 0.0
          %1468 = vmatpush1.msra.mxu0 %v1287
          %1469 = vmatprep.subr.mxu0 0.0
          %1470 = vmatpush1.msra.mxu0 %v1289
          %1471 = vmatprep.subr.mxu0 0.0
          %1472 = vmatpush1.msra.mxu0 %v1293
          %1473 = vmatprep.subr.mxu0 0.0
          %1474 = vmatpush1.msra.mxu0 %v1295
          %1475 = vmatprep.subr.mxu0 0.0
          %1476 = vmatpush1.msra.mxu0 %v1299
          %1477 = vmatprep.subr.mxu0 0.0
          %1478 = vmatpush1.msra.mxu0 %v1301
          %1479 = vmatprep.subr.mxu0 0.0
          %1480 = vmatpush1.msra.mxu0 %v1305
          %1481 = vmatprep.subr.mxu0 0.0
          %1482 = vmatpush1.msra.mxu0 %v1307
          %1483 = vmatprep.subr.mxu0 0.0
          %1484 = vmatpush1.msra.mxu0 %v1246
          %1485 = vmatprep.subr.mxu0 0.0
          %1486 = vmatpush1.msra.mxu0 %v1247
          %1487 = vmatprep.subr.mxu0 0.0
          %1488 = vmatpush1.msra.mxu0 %v1313
          %1489 = vmatprep.subr.mxu0 0.0
          %1490 = vmatpush1.msra.mxu0 %v1315
          %1491 = vmatprep.subr.mxu0 0.0
          %1492 = vmatpush1.msra.mxu0 %v1319
          %1493 = vmatprep.subr.mxu0 0.0
          %1494 = vmatpush1.msra.mxu0 %v1321
          %1495 = vmatprep.subr.mxu0 0.0
          %1496 = vmatpush1.msra.mxu0 %v1325
          %1497 = vmatprep.subr.mxu0 0.0
          %1498 = vmatpush1.msra.mxu0 %v1327
          %1499 = vmatprep.subr.mxu0 0.0
          %1500 = vmatpush1.msra.mxu0 %v1331
          %1501 = vmatprep.subr.mxu0 0.0
          %1502 = vmatpush1.msra.mxu0 %v1333
          %1503 = vmatprep.subr.mxu0 0.0
          %1504 = vmatpush1.msra.mxu0 %v1251
          %1505 = vmatprep.subr.mxu0 0.0
          %1506 = vmatpush1.msra.mxu0 %v1252
          %1507 = vmatprep.mubr.f32.mxu0 %v1435
          %1508 = vmatmul.mubr.f32.gmra.mrb[0].mxu0 %v1427
          %v1509 = vpop.f32.mrb[0].mxu0
          %v1510 = vadd.f32 %v1417, %v1509
          %v1511 = vpop.f32.mrb[0].mxu0
          %1512 = vdwg.mxu0
          %1513 = vmatprep.subr.mxu0 0.0
          %1514 = vmatpush1.msra.mxu0 %v1339
          %1515 = vmatprep.subr.mxu0 0.0
          %1516 = vmatpush1.msra.mxu0 %v1341
          %1517 = vmatprep.subr.mxu0 0.0
          %1518 = vmatpush1.msra.mxu0 %v1369
          %1519 = vmatprep.subr.mxu0 0.0
          %1520 = vmatpush1.msra.mxu0 %v1371
          %1521 = vmatprep.subr.mxu0 0.0
          %1522 = vmatpush1.msra.mxu0 %v1373
          %1523 = vmatprep.subr.mxu0 0.0
          %1524 = vmatpush1.msra.mxu0 %v1375
          %1525 = vmatprep.subr.mxu0 0.0
          %1526 = vmatpush1.msra.mxu0 %v1377
          %1527 = vmatprep.subr.mxu0 0.0
          %1528 = vmatpush1.msra.mxu0 %v1379
          %1529 = vmatprep.subr.mxu0 0.0
          %1530 = vmatpush1.msra.mxu0 %v1381
          %1531 = vmatprep.subr.mxu0 0.0
          %1532 = vmatpush1.msra.mxu0 %v1383
          %1533 = vmatprep.subr.mxu0 0.0
          %1534 = vmatpush1.msra.mxu0 %v1357
          %1535 = vmatprep.subr.mxu0 0.0
          %1536 = vmatpush1.msra.mxu0 %v1359
          %1537 = vmatprep.subr.mxu0 0.0
          %1538 = vmatpush1.msra.mxu0 %v1385
          %1539 = vmatprep.subr.mxu0 0.0
          %1540 = vmatpush1.msra.mxu0 %v1387
          %1541 = vmatprep.subr.mxu0 0.0
          %1542 = vmatpush1.msra.mxu0 %v1389
          %1543 = vmatprep.subr.mxu0 0.0
          %1544 = vmatpush1.msra.mxu0 %v1391
          %1545 = vmatprep.subr.mxu0 0.0
          %1546 = vmatpush1.msra.mxu0 %v1393
          %1547 = vmatprep.subr.mxu0 0.0
          %1548 = vmatpush1.msra.mxu0 %v1395
          %1549 = vmatprep.subr.mxu0 0.0
          %1550 = vmatpush1.msra.mxu0 0.0
          %1551 = vmatprep.subr.mxu0 0.0
          %1552 = vmatpush1.msra.mxu0 0.0
          %1553 = vmatprep.subr.mxu0 0.0
          %1554 = vmatpush1.msra.mxu0 0.0
          %1555 = vmatprep.subr.mxu0 0.0
          %1556 = vmatpush1.msra.mxu0 0.0
          %1557 = vmatprep.subr.mxu0 0.0
          %1558 = vmatpush1.msra.mxu0 0.0
          %1559 = vmatprep.subr.mxu0 0.0
          %1560 = vmatpush1.msra.mxu0 0.0
          %1561 = vmatprep.subr.mxu0 0.0
          %1562 = vmatpush1.msra.mxu0 0.0
          %1563 = vmatprep.subr.mxu0 0.0
          %1564 = vmatpush1.msra.mxu0 0.0
          %1565 = vmatprep.subr.mxu0 0.0
          %1566 = vmatpush1.msra.mxu0 0.0
          %1567 = vmatprep.subr.mxu0 0.0
          %1568 = vmatpush1.msra.mxu0 0.0
          %1569 = vmatprep.subr.mxu0 0.0
          %1570 = vmatpush1.msra.mxu0 0.0
          %1571 = vmatprep.subr.mxu0 0.0
          %1572 = vmatpush1.msra.mxu0 0.0
          %1573 = vmatprep.subr.mxu0 0.0
          %1574 = vmatpush1.msra.mxu0 0.0
          %1575 = vmatprep.subr.mxu0 0.0
          %1576 = vmatpush1.msra.mxu0 0.0
          %1577 = vmatprep.mubr.f32.mxu0 %v1441
          %1578 = vmatmul.mubr.f32.gmra.mrb[0].mxu0 %v1434
          %v1579 = vpop.f32.mrb[0].mxu0
          %v1580 = vadd.f32 %v1510, %v1579
          %v1581 = vpop.f32.mrb[0].mxu0
          %1582 = vdwg.mxu0
          %s1583 = smul.u32 %s1229, 2
          %s1584 = scalar_lea.vmem [#allocation4], %s1583
          %vm1585 = vcmask 140288
          %1586 = vst.msk [vmem:[%s1584] sm:$0x3] %vm1585, %v1580
        $region67: #{_lambda_.1} parent=47 // loop_footer
          %s1233 = sadd.s32 1, %s1229
        $region68: #{_lambda_.1} parent=47 // loop_footer_branch
          %1228 = sbr.rel target = $region64
        $region69: #{_lambda_.1} parent=47 // loop_exit
          _
        %v1587 = vld [vmem:[#allocation4] sm:$0x3]
        %v1588 = vld [vmem:[#allocation4 + $0x2] sm:$0x3]
        %v1589 = vld [vmem:[#allocation4 + $0x4] sm:$0x3]
        %v1590 = vld [vmem:[#allocation4 + $0x6] sm:$0x3]
        %v1591 = vld [vmem:[#allocation4 + $0x8] sm:$0x3]
        %v1592 = vld [vmem:[#allocation4 + $0xa] sm:$0x3]
        %v1593 = vld [vmem:[#allocation4 + $0xc] sm:$0x3]
        %v1594 = vld [vmem:[#allocation4 + $0xe] sm:$0x3]
        %v1595 = vld [vmem:[#allocation4 + $0x10] sm:$0x3]
        %v1596 = vld [vmem:[#allocation4 + $0x12] sm:$0x3]
        %1607 = vrot.lane.b32.xlu0 %v1587, 127
        %v1608 = vpop.permute.xlu0 %1607
        %1609 = vrot.lane.b32.xlu0 %v1588, 127
        %v1610 = vpop.permute.xlu0 %1609
        %1611 = vrot.lane.b32.xlu0 %v1589, 127
        %v1612 = vpop.permute.xlu0 %1611
        %1613 = vrot.lane.b32.xlu0 %v1590, 127
        %v1614 = vpop.permute.xlu0 %1613
        %1615 = vrot.lane.b32.xlu0 %v1591, 127
        %v1616 = vpop.permute.xlu0 %1615
        %1617 = vrot.lane.b32.xlu0 %v1592, 127
        %v1618 = vpop.permute.xlu0 %1617
        %1619 = vrot.lane.b32.xlu0 %v1593, 127
        %v1620 = vpop.permute.xlu0 %1619
        %1621 = vrot.lane.b32.xlu0 %v1594, 127
        %v1622 = vpop.permute.xlu0 %1621
        %1623 = vrot.lane.b32.xlu0 %v1595, 127
        %v1624 = vpop.permute.xlu0 %1623
        %1625 = vrot.lane.b32.xlu0 %v1596, 127
        %v1626 = vpop.permute.xlu0 %1625
        %vm1637 = vcmask 1024
        %1638 = vst.msk [vmem:[#allocation4] sm:$0x3] %vm1637, %v1608
        %1639 = vst.msk [vmem:[#allocation4 + $0x2] sm:$0x3] %vm1637, %v1610
        %1640 = vst.msk [vmem:[#allocation4 + $0x4] sm:$0x3] %vm1637, %v1612
        %1641 = vst.msk [vmem:[#allocation4 + $0x6] sm:$0x3] %vm1637, %v1614
        %1642 = vst.msk [vmem:[#allocation4 + $0x8] sm:$0x3] %vm1637, %v1616
        %1643 = vst.msk [vmem:[#allocation4 + $0xa] sm:$0x3] %vm1637, %v1618
        %1644 = vst.msk [vmem:[#allocation4 + $0xc] sm:$0x3] %vm1637, %v1620
        %1645 = vst.msk [vmem:[#allocation4 + $0xe] sm:$0x3] %vm1637, %v1622
        %1646 = vst.msk [vmem:[#allocation4 + $0x10] sm:$0x3] %vm1637, %v1624
        %1647 = vst.msk [vmem:[#allocation4 + $0x12] sm:$0x3] %vm1637, %v1626
        %v1648 = vld [vmem:[#allocation4] sm:$0x3]
        %v1649 = vld [vmem:[#allocation4 + $0x2] sm:$0x3]
        %v1650 = vld [vmem:[#allocation4 + $0x4] sm:$0x3]
        %v1651 = vld [vmem:[#allocation4 + $0x6] sm:$0x3]
        %v1652 = vld [vmem:[#allocation4 + $0x8] sm:$0x3]
        %v1653 = vld [vmem:[#allocation4 + $0xa] sm:$0x3]
        %v1654 = vld [vmem:[#allocation4 + $0xc] sm:$0x3]
        %v1655 = vld [vmem:[#allocation4 + $0xe] sm:$0x3]
        %v1656 = vld [vmem:[#allocation4 + $0x10] sm:$0x3]
        %v1657 = vld [vmem:[#allocation4 + $0x12] sm:$0x3]
        %1668 = vrot.lane.b32.xlu0 %v1648, 1
        %v1669 = vpop.permute.xlu0 %1668
        %1670 = vrot.lane.b32.xlu0 %v1649, 1
        %v1671 = vpop.permute.xlu0 %1670
        %1672 = vrot.lane.b32.xlu0 %v1650, 1
        %v1673 = vpop.permute.xlu0 %1672
        %1674 = vrot.lane.b32.xlu0 %v1651, 1
        %v1675 = vpop.permute.xlu0 %1674
        %1676 = vrot.lane.b32.xlu0 %v1652, 1
        %v1677 = vpop.permute.xlu0 %1676
        %1678 = vrot.lane.b32.xlu0 %v1653, 1
        %v1679 = vpop.permute.xlu0 %1678
        %1680 = vrot.lane.b32.xlu0 %v1654, 1
        %v1681 = vpop.permute.xlu0 %1680
        %1682 = vrot.lane.b32.xlu0 %v1655, 1
        %v1683 = vpop.permute.xlu0 %1682
        %1684 = vrot.lane.b32.xlu0 %v1656, 1
        %v1685 = vpop.permute.xlu0 %1684
        %1686 = vrot.lane.b32.xlu0 %v1657, 1
        %v1687 = vpop.permute.xlu0 %1686
        %vm1698 = vcmask 140424
        %1699 = vst.msk [vmem:[#allocation4] sm:$0x3] %vm1698, %v1669
        %1700 = vst.msk [vmem:[#allocation4 + $0x2] sm:$0x3] %vm1698, %v1671
        %1701 = vst.msk [vmem:[#allocation4 + $0x4] sm:$0x3] %vm1698, %v1673
        %1702 = vst.msk [vmem:[#allocation4 + $0x6] sm:$0x3] %vm1698, %v1675
        %1703 = vst.msk [vmem:[#allocation4 + $0x8] sm:$0x3] %vm1698, %v1677
        %1704 = vst.msk [vmem:[#allocation4 + $0xa] sm:$0x3] %vm1698, %v1679
        %1705 = vst.msk [vmem:[#allocation4 + $0xc] sm:$0x3] %vm1698, %v1681
        %1706 = vst.msk [vmem:[#allocation4 + $0xe] sm:$0x3] %vm1698, %v1683
        %1707 = vst.msk [vmem:[#allocation4 + $0x10] sm:$0x3] %vm1698, %v1685
        %1708 = vst.msk [vmem:[#allocation4 + $0x12] sm:$0x3] %vm1698, %v1687
        %p1709 = scmp.eq.s32.totalorder %s23, 0
        // Predicated region
        $region70: #{_lambda_.1} parent=47 // pred_check
          %p1710 = pneg %p1709
        $region71: #{_lambda_.1} parent=47 // pred_check_branch
          %1712 = sbr.rel (%p1710) target = $region73
        $region72: #{_lambda_.1} parent=47 // pred_region
          %s1713 = scalar_lea.vmem [#allocation4], 2
          %v1714 = vld [vmem:[%s1713] sm:$0x3]
          %vm1715 = vcmask 140288
          %1716 = vst.msk [vmem:[#allocation4] sm:$0x3] %vm1715, %v1714
        $region73: #{_lambda_.1} parent=47 // pred_fallthru
          _
        %p1717 = scmp.eq.s32.totalorder %s23, 1
        // Predicated region
        $region74: #{_lambda_.1} parent=47 // pred_check
          %p1718 = pneg %p1717
        $region75: #{_lambda_.1} parent=47 // pred_check_branch
          %1720 = sbr.rel (%p1718) target = $region77
        $region76: #{_lambda_.1} parent=47 // pred_region
          %s1721 = scalar_lea.vmem [#allocation4], 16
          %v1722 = vld [vmem:[%s1721] sm:$0x3]
          %s1723 = scalar_lea.vmem [#allocation4], 18
          %vm1724 = vcmask 140288
          %1725 = vst.msk [vmem:[%s1723] sm:$0x3] %vm1724, %v1722
        $region77: #{_lambda_.1} parent=47 // pred_fallthru
          _
        %v1726 = vld [vmem:[#allocation4] sm:$0x1]
        %v1727 = vld [vmem:[#allocation4 + $0x2] sm:$0x1]
        %v1728 = vld [vmem:[#allocation4 + $0x4] sm:$0x1]
        %v1729 = vld [vmem:[#allocation4 + $0x6] sm:$0x1]
        %v1730 = vld [vmem:[#allocation4 + $0x8] sm:$0x1]
        %v1731 = vld [vmem:[#allocation4 + $0xa] sm:$0x1]
        %v1732 = vld [vmem:[#allocation4 + $0xc] sm:$0x1]
        %v1733 = vld [vmem:[#allocation4 + $0xe] sm:$0x1]
        %v1734 = vld [vmem:[#allocation4 + $0x10] sm:$0x1]
        %v1735 = vld [vmem:[#allocation4 + $0x12] sm:$0x1]
        %v1736 = vmul.f32 %v1726, 0.0625
        %v1737 = vmul.f32 %v1727, 0.0625
        %v1738 = vmul.f32 %v1728, 0.0625
        %v1739 = vmul.f32 %v1729, 0.0625
        %v1740 = vmul.f32 %v1730, 0.0625
        %v1741 = vmul.f32 %v1731, 0.0625
        %v1742 = vmul.f32 %v1732, 0.0625
        %v1743 = vmul.f32 %v1733, 0.0625
        %v1744 = vmul.f32 %v1726, 0.1875
        %v1745 = vmul.f32 %v1727, 0.1875
        %v1746 = vmul.f32 %v1728, 0.1875
        %v1747 = vmul.f32 %v1729, 0.1875
        %v1748 = vmul.f32 %v1730, 0.1875
        %v1749 = vmul.f32 %v1731, 0.1875
        %v1750 = vmul.f32 %v1732, 0.1875
        %v1751 = vmul.f32 %v1733, 0.1875
        %1760 = vrot.lane.b32.xlu0 %v1744, 127
        %v1761 = vpop.permute.xlu0 %1760
        %1762 = vrot.lane.b32.xlu0 %v1745, 127
        %v1763 = vpop.permute.xlu0 %1762
        %1764 = vrot.lane.b32.xlu0 %v1746, 127
        %v1765 = vpop.permute.xlu0 %1764
        %1766 = vrot.lane.b32.xlu0 %v1747, 127
        %v1767 = vpop.permute.xlu0 %1766
        %1768 = vrot.lane.b32.xlu0 %v1748, 127
        %v1769 = vpop.permute.xlu0 %1768
        %1770 = vrot.lane.b32.xlu0 %v1749, 127
        %v1771 = vpop.permute.xlu0 %1770
        %1772 = vrot.lane.b32.xlu0 %v1750, 127
        %v1773 = vpop.permute.xlu0 %1772
        %1774 = vrot.lane.b32.xlu0 %v1751, 127
        %v1775 = vpop.permute.xlu0 %1774
        %v1784 = vadd.f32 %v1736, %v1761
        %v1785 = vadd.f32 %v1737, %v1763
        %v1786 = vadd.f32 %v1738, %v1765
        %v1787 = vadd.f32 %v1739, %v1767
        %v1788 = vadd.f32 %v1740, %v1769
        %v1789 = vadd.f32 %v1741, %v1771
        %v1790 = vadd.f32 %v1742, %v1773
        %v1791 = vadd.f32 %v1743, %v1775
        %v1792 = vmul.f32 %v1734, 0.1875
        %v1793 = vadd.f32 %v1784, %v1745
        %v1794 = vadd.f32 %v1785, %v1746
        %v1795 = vadd.f32 %v1786, %v1747
        %v1796 = vadd.f32 %v1787, %v1748
        %v1797 = vadd.f32 %v1788, %v1749
        %v1798 = vadd.f32 %v1789, %v1750
        %v1799 = vadd.f32 %v1790, %v1751
        %v1800 = vadd.f32 %v1791, %v1792
        %v1801 = vmul.f32 %v1727, 0.5625
        %v1802 = vmul.f32 %v1728, 0.5625
        %v1803 = vmul.f32 %v1729, 0.5625
        %v1804 = vmul.f32 %v1730, 0.5625
        %v1805 = vmul.f32 %v1731, 0.5625
        %v1806 = vmul.f32 %v1732, 0.5625
        %v1807 = vmul.f32 %v1733, 0.5625
        %v1808 = vmul.f32 %v1734, 0.5625
        %1817 = vrot.lane.b32.xlu0 %v1801, 127
        %v1818 = vpop.permute.xlu0 %1817
        %1819 = vrot.lane.b32.xlu0 %v1802, 127
        %v1820 = vpop.permute.xlu0 %1819
        %1821 = vrot.lane.b32.xlu0 %v1803, 127
        %v1822 = vpop.permute.xlu0 %1821
        %1823 = vrot.lane.b32.xlu0 %v1804, 127
        %v1824 = vpop.permute.xlu0 %1823
        %1825 = vrot.lane.b32.xlu0 %v1805, 127
        %v1826 = vpop.permute.xlu0 %1825
        %1827 = vrot.lane.b32.xlu0 %v1806, 127
        %v1828 = vpop.permute.xlu0 %1827
        %1829 = vrot.lane.b32.xlu0 %v1807, 127
        %v1830 = vpop.permute.xlu0 %1829
        %1831 = vrot.lane.b32.xlu0 %v1808, 127
        %v1832 = vpop.permute.xlu0 %1831
        %v1841 = vadd.f32 %v1793, %v1818
        %v1842 = vadd.f32 %v1794, %v1820
        %v1843 = vadd.f32 %v1795, %v1822
        %v1844 = vadd.f32 %v1796, %v1824
        %v1845 = vadd.f32 %v1797, %v1826
        %v1846 = vadd.f32 %v1798, %v1828
        %v1847 = vadd.f32 %v1799, %v1830
        %v1848 = vadd.f32 %v1800, %v1832
        %v1857 = vrot.slane %v1842, 7
        %vm1858 = vcmask 1041409
        %v1859 = vsel %vm1858, %v1857, %v1841
        %v1860 = vrot.slane %v1843, 6
        %vm1861 = vcmask 1042434
        %v1862 = vsel %vm1861, %v1860, %v1859
        %v1863 = vrot.slane %v1844, 5
        %vm1864 = vcmask 1043459
        %v1865 = vsel %vm1864, %v1863, %v1862
        %v1866 = vrot.slane %v1845, 4
        %vm1867 = vcmask 1044484
        %v1868 = vsel %vm1867, %v1866, %v1865
        %v1869 = vrot.slane %v1846, 3
        %vm1870 = vcmask 1045509
        %v1871 = vsel %vm1870, %v1869, %v1868
        %v1872 = vrot.slane %v1847, 2
        %vm1873 = vcmask 1046534
        %v1874 = vsel %vm1873, %v1872, %v1871
        %v1875 = vrot.slane %v1848, 1
        %vm1876 = vcmask 1047559
        %v1877 = vsel %vm1876, %v1875, %v1874
        %vm1879 = vcmask 130048
        %1880 = vst.msk [vmem:[%s291] sm:$0xff] %vm1879, %v1877
        %1889 = vrot.lane.b32.xlu0 %v1736, 127
        %v1890 = vpop.permute.xlu0 %1889
        %1891 = vrot.lane.b32.xlu0 %v1737, 127
        %v1892 = vpop.permute.xlu0 %1891
        %1893 = vrot.lane.b32.xlu0 %v1738, 127
        %v1894 = vpop.permute.xlu0 %1893
        %1895 = vrot.lane.b32.xlu0 %v1739, 127
        %v1896 = vpop.permute.xlu0 %1895
        %1897 = vrot.lane.b32.xlu0 %v1740, 127
        %v1898 = vpop.permute.xlu0 %1897
        %1899 = vrot.lane.b32.xlu0 %v1741, 127
        %v1900 = vpop.permute.xlu0 %1899
        %1901 = vrot.lane.b32.xlu0 %v1742, 127
        %v1902 = vpop.permute.xlu0 %1901
        %1903 = vrot.lane.b32.xlu0 %v1743, 127
        %v1904 = vpop.permute.xlu0 %1903
        %v1913 = vadd.f32 %v1744, %v1890
        %v1914 = vadd.f32 %v1745, %v1892
        %v1915 = vadd.f32 %v1746, %v1894
        %v1916 = vadd.f32 %v1747, %v1896
        %v1917 = vadd.f32 %v1748, %v1898
        %v1918 = vadd.f32 %v1749, %v1900
        %v1919 = vadd.f32 %v1750, %v1902
        %v1920 = vadd.f32 %v1751, %v1904
        %v1921 = vadd.f32 %v1913, %v1801
        %v1922 = vadd.f32 %v1914, %v1802
        %v1923 = vadd.f32 %v1915, %v1803
        %v1924 = vadd.f32 %v1916, %v1804
        %v1925 = vadd.f32 %v1917, %v1805
        %v1926 = vadd.f32 %v1918, %v1806
        %v1927 = vadd.f32 %v1919, %v1807
        %v1928 = vadd.f32 %v1920, %v1808
        %1930 = vrot.lane.b32.xlu0 %v1792, 127
        %v1931 = vpop.permute.xlu0 %1930
        %v1933 = vadd.f32 %v1921, %v1763
        %v1934 = vadd.f32 %v1922, %v1765
        %v1935 = vadd.f32 %v1923, %v1767
        %v1936 = vadd.f32 %v1924, %v1769
        %v1937 = vadd.f32 %v1925, %v1771
        %v1938 = vadd.f32 %v1926, %v1773
        %v1939 = vadd.f32 %v1927, %v1775
        %v1940 = vadd.f32 %v1928, %v1931
        %v1949 = vrot.slane %v1934, 7
        %v1950 = vsel %vm1858, %v1949, %v1933
        %v1951 = vrot.slane %v1935, 6
        %v1952 = vsel %vm1861, %v1951, %v1950
        %v1953 = vrot.slane %v1936, 5
        %v1954 = vsel %vm1864, %v1953, %v1952
        %v1955 = vrot.slane %v1937, 4
        %v1956 = vsel %vm1867, %v1955, %v1954
        %v1957 = vrot.slane %v1938, 3
        %v1958 = vsel %vm1870, %v1957, %v1956
        %v1959 = vrot.slane %v1939, 2
        %v1960 = vsel %vm1873, %v1959, %v1958
        %v1961 = vrot.slane %v1940, 1
        %v1962 = vsel %vm1876, %v1961, %v1960
        %1963 = vrot.lane.b32.xlu0 %v1962, 127
        %v1964 = vpop.permute.xlu0 %1963
        %s1966 = scalar_lea.vmem %s291, 32 [#allocation5]
        %1967 = vst.msk [vmem:[%s1966] sm:$0xff] %vm1879, %v1964
        %v1968 = vmul.f32 %v1734, 0.0625
        %v1969 = vmul.f32 %v1735, 0.0625
        %v1970 = vadd.f32 %v1745, %v1738
        %v1971 = vadd.f32 %v1746, %v1739
        %v1972 = vadd.f32 %v1747, %v1740
        %v1973 = vadd.f32 %v1748, %v1741
        %v1974 = vadd.f32 %v1749, %v1742
        %v1975 = vadd.f32 %v1750, %v1743
        %v1976 = vadd.f32 %v1751, %v1968
        %v1977 = vadd.f32 %v1792, %v1969
        %v1978 = vadd.f32 %v1970, %v1818
        %v1979 = vadd.f32 %v1971, %v1820
        %v1980 = vadd.f32 %v1972, %v1822
        %v1981 = vadd.f32 %v1973, %v1824
        %v1982 = vadd.f32 %v1974, %v1826
        %v1983 = vadd.f32 %v1975, %v1828
        %v1984 = vadd.f32 %v1976, %v1830
        %v1985 = vadd.f32 %v1977, %v1832
        %v1986 = vmul.f32 %v1735, 0.1875
        %1988 = vrot.lane.b32.xlu0 %v1986, 127
        %v1989 = vpop.permute.xlu0 %1988
        %v1991 = vadd.f32 %v1978, %v1765
        %v1992 = vadd.f32 %v1979, %v1767
        %v1993 = vadd.f32 %v1980, %v1769
        %v1994 = vadd.f32 %v1981, %v1771
        %v1995 = vadd.f32 %v1982, %v1773
        %v1996 = vadd.f32 %v1983, %v1775
        %v1997 = vadd.f32 %v1984, %v1931
        %v1998 = vadd.f32 %v1985, %v1989
        %v2007 = vrot.slane %v1992, 7
        %v2008 = vsel %vm1858, %v2007, %v1991
        %v2009 = vrot.slane %v1993, 6
        %v2010 = vsel %vm1861, %v2009, %v2008
        %v2011 = vrot.slane %v1994, 5
        %v2012 = vsel %vm1864, %v2011, %v2010
        %v2013 = vrot.slane %v1995, 4
        %v2014 = vsel %vm1867, %v2013, %v2012
        %v2015 = vrot.slane %v1996, 3
        %v2016 = vsel %vm1870, %v2015, %v2014
        %v2017 = vrot.slane %v1997, 2
        %v2018 = vsel %vm1873, %v2017, %v2016
        %v2019 = vrot.slane %v1998, 1
        %v2020 = vsel %vm1876, %v2019, %v2018
        %s2022 = scalar_lea.vmem %s291, 64 [#allocation5]
        %2023 = vst.msk [vmem:[%s2022] sm:$0xff] %vm1879, %v2020
        %v2024 = vadd.f32 %v1801, %v1763
        %v2025 = vadd.f32 %v1802, %v1765
        %v2026 = vadd.f32 %v1803, %v1767
        %v2027 = vadd.f32 %v1804, %v1769
        %v2028 = vadd.f32 %v1805, %v1771
        %v2029 = vadd.f32 %v1806, %v1773
        %v2030 = vadd.f32 %v1807, %v1775
        %v2031 = vadd.f32 %v1808, %v1931
        %v2032 = vadd.f32 %v2024, %v1746
        %v2033 = vadd.f32 %v2025, %v1747
        %v2034 = vadd.f32 %v2026, %v1748
        %v2035 = vadd.f32 %v2027, %v1749
        %v2036 = vadd.f32 %v2028, %v1750
        %v2037 = vadd.f32 %v2029, %v1751
        %v2038 = vadd.f32 %v2030, %v1792
        %v2039 = vadd.f32 %v2031, %v1986
        %2042 = vrot.lane.b32.xlu0 %v1968, 127
        %v2043 = vpop.permute.xlu0 %2042
        %2044 = vrot.lane.b32.xlu0 %v1969, 127
        %v2045 = vpop.permute.xlu0 %2044
        %v2048 = vadd.f32 %v2032, %v1894
        %v2049 = vadd.f32 %v2033, %v1896
        %v2050 = vadd.f32 %v2034, %v1898
        %v2051 = vadd.f32 %v2035, %v1900
        %v2052 = vadd.f32 %v2036, %v1902
        %v2053 = vadd.f32 %v2037, %v1904
        %v2054 = vadd.f32 %v2038, %v2043
        %v2055 = vadd.f32 %v2039, %v2045
        %v2064 = vrot.slane %v2049, 7
        %v2065 = vsel %vm1858, %v2064, %v2048
        %v2066 = vrot.slane %v2050, 6
        %v2067 = vsel %vm1861, %v2066, %v2065
        %v2068 = vrot.slane %v2051, 5
        %v2069 = vsel %vm1864, %v2068, %v2067
        %v2070 = vrot.slane %v2052, 4
        %v2071 = vsel %vm1867, %v2070, %v2069
        %v2072 = vrot.slane %v2053, 3
        %v2073 = vsel %vm1870, %v2072, %v2071
        %v2074 = vrot.slane %v2054, 2
        %v2075 = vsel %vm1873, %v2074, %v2073
        %v2076 = vrot.slane %v2055, 1
        %v2077 = vsel %vm1876, %v2076, %v2075
        %2078 = vrot.lane.b32.xlu0 %v2077, 127
        %v2079 = vpop.permute.xlu0 %2078
        %s2081 = scalar_lea.vmem %s291, 96 [#allocation5]
        %2082 = vst.msk [vmem:[%s2081] sm:$0xff] %vm1879, %v2079
        %v2091 = vrot.slane %v1728, 7
        %v2092 = vsel %vm1858, %v2091, %v1727
        %v2093 = vrot.slane %v1729, 6
        %v2094 = vsel %vm1861, %v2093, %v2092
        %v2095 = vrot.slane %v1730, 5
        %v2096 = vsel %vm1864, %v2095, %v2094
        %v2097 = vrot.slane %v1731, 4
        %v2098 = vsel %vm1867, %v2097, %v2096
        %v2099 = vrot.slane %v1732, 3
        %v2100 = vsel %vm1870, %v2099, %v2098
        %v2101 = vrot.slane %v1733, 2
        %v2102 = vsel %vm1873, %v2101, %v2100
        %v2103 = vrot.slane %v1734, 1
        %v2104 = vsel %vm1876, %v2103, %v2102
        %2105 = vrot.lane.b32.xlu0 %v2104, 127
        %v2106 = vpop.permute.xlu0 %2105
        %s2108 = scalar_lea.vmem %s291, 16 [#allocation5]
        %2109 = vst.msk [vmem:[%s2108] sm:$0xff] %vm1879, %v2106
        %s2110 = scalar_lea.vmem %s291, 48 [#allocation5]
        %2111 = vst.msk [vmem:[%s2110] sm:$0xff] %vm1879, %v2106
        %s2112 = scalar_lea.vmem %s291, 80 [#allocation5]
        %2113 = vst.msk [vmem:[%s2112] sm:$0xff] %vm1879, %v2106
        %s2114 = scalar_lea.vmem %s291, 112 [#allocation5]
        %2115 = vst.msk [vmem:[%s2114] sm:$0xff] %vm1879, %v2106
        %v2116 = vld [vmem:[#allocation4 + $0x1] sm:$0x1]
        %v2117 = vld [vmem:[#allocation4 + $0x3] sm:$0x1]
        %v2118 = vld [vmem:[#allocation4 + $0x5] sm:$0x1]
        %v2119 = vld [vmem:[#allocation4 + $0x7] sm:$0x1]
        %v2120 = vld [vmem:[#allocation4 + $0x9] sm:$0x1]
        %v2121 = vld [vmem:[#allocation4 + $0xb] sm:$0x1]
        %v2122 = vld [vmem:[#allocation4 + $0xd] sm:$0x1]
        %v2123 = vld [vmem:[#allocation4 + $0xf] sm:$0x1]
        %v2124 = vld [vmem:[#allocation4 + $0x11] sm:$0x1]
        %v2125 = vld [vmem:[#allocation4 + $0x13] sm:$0x1]
        %v2126 = vmul.f32 %v2116, 0.0625
        %v2127 = vmul.f32 %v2117, 0.0625
        %v2128 = vmul.f32 %v2118, 0.0625
        %v2129 = vmul.f32 %v2119, 0.0625
        %v2130 = vmul.f32 %v2120, 0.0625
        %v2131 = vmul.f32 %v2121, 0.0625
        %v2132 = vmul.f32 %v2122, 0.0625
        %v2133 = vmul.f32 %v2123, 0.0625
        %v2134 = vmul.f32 %v2116, 0.1875
        %v2135 = vmul.f32 %v2117, 0.1875
        %v2136 = vmul.f32 %v2118, 0.1875
        %v2137 = vmul.f32 %v2119, 0.1875
        %v2138 = vmul.f32 %v2120, 0.1875
        %v2139 = vmul.f32 %v2121, 0.1875
        %v2140 = vmul.f32 %v2122, 0.1875
        %v2141 = vmul.f32 %v2123, 0.1875
        %2150 = vrot.lane.b32.xlu0 %v2134, 127
        %v2151 = vpop.permute.xlu0 %2150
        %2152 = vrot.lane.b32.xlu0 %v2135, 127
        %v2153 = vpop.permute.xlu0 %2152
        %2154 = vrot.lane.b32.xlu0 %v2136, 127
        %v2155 = vpop.permute.xlu0 %2154
        %2156 = vrot.lane.b32.xlu0 %v2137, 127
        %v2157 = vpop.permute.xlu0 %2156
        %2158 = vrot.lane.b32.xlu0 %v2138, 127
        %v2159 = vpop.permute.xlu0 %2158
        %2160 = vrot.lane.b32.xlu0 %v2139, 127
        %v2161 = vpop.permute.xlu0 %2160
        %2162 = vrot.lane.b32.xlu0 %v2140, 127
        %v2163 = vpop.permute.xlu0 %2162
        %2164 = vrot.lane.b32.xlu0 %v2141, 127
        %v2165 = vpop.permute.xlu0 %2164
        %v2174 = vadd.f32 %v2126, %v2151
        %v2175 = vadd.f32 %v2127, %v2153
        %v2176 = vadd.f32 %v2128, %v2155
        %v2177 = vadd.f32 %v2129, %v2157
        %v2178 = vadd.f32 %v2130, %v2159
        %v2179 = vadd.f32 %v2131, %v2161
        %v2180 = vadd.f32 %v2132, %v2163
        %v2181 = vadd.f32 %v2133, %v2165
        %v2182 = vmul.f32 %v2124, 0.1875
        %v2183 = vadd.f32 %v2174, %v2135
        %v2184 = vadd.f32 %v2175, %v2136
        %v2185 = vadd.f32 %v2176, %v2137
        %v2186 = vadd.f32 %v2177, %v2138
        %v2187 = vadd.f32 %v2178, %v2139
        %v2188 = vadd.f32 %v2179, %v2140
        %v2189 = vadd.f32 %v2180, %v2141
        %v2190 = vadd.f32 %v2181, %v2182
        %v2191 = vmul.f32 %v2117, 0.5625
        %v2192 = vmul.f32 %v2118, 0.5625
        %v2193 = vmul.f32 %v2119, 0.5625
        %v2194 = vmul.f32 %v2120, 0.5625
        %v2195 = vmul.f32 %v2121, 0.5625
        %v2196 = vmul.f32 %v2122, 0.5625
        %v2197 = vmul.f32 %v2123, 0.5625
        %v2198 = vmul.f32 %v2124, 0.5625
        %2207 = vrot.lane.b32.xlu0 %v2191, 127
        %v2208 = vpop.permute.xlu0 %2207
        %2209 = vrot.lane.b32.xlu0 %v2192, 127
        %v2210 = vpop.permute.xlu0 %2209
        %2211 = vrot.lane.b32.xlu0 %v2193, 127
        %v2212 = vpop.permute.xlu0 %2211
        %2213 = vrot.lane.b32.xlu0 %v2194, 127
        %v2214 = vpop.permute.xlu0 %2213
        %2215 = vrot.lane.b32.xlu0 %v2195, 127
        %v2216 = vpop.permute.xlu0 %2215
        %2217 = vrot.lane.b32.xlu0 %v2196, 127
        %v2218 = vpop.permute.xlu0 %2217
        %2219 = vrot.lane.b32.xlu0 %v2197, 127
        %v2220 = vpop.permute.xlu0 %2219
        %2221 = vrot.lane.b32.xlu0 %v2198, 127
        %v2222 = vpop.permute.xlu0 %2221
        %v2231 = vadd.f32 %v2183, %v2208
        %v2232 = vadd.f32 %v2184, %v2210
        %v2233 = vadd.f32 %v2185, %v2212
        %v2234 = vadd.f32 %v2186, %v2214
        %v2235 = vadd.f32 %v2187, %v2216
        %v2236 = vadd.f32 %v2188, %v2218
        %v2237 = vadd.f32 %v2189, %v2220
        %v2238 = vadd.f32 %v2190, %v2222
        %v2247 = vrot.slane %v2232, 7
        %v2248 = vsel %vm1858, %v2247, %v2231
        %v2249 = vrot.slane %v2233, 6
        %v2250 = vsel %vm1861, %v2249, %v2248
        %v2251 = vrot.slane %v2234, 5
        %v2252 = vsel %vm1864, %v2251, %v2250
        %v2253 = vrot.slane %v2235, 4
        %v2254 = vsel %vm1867, %v2253, %v2252
        %v2255 = vrot.slane %v2236, 3
        %v2256 = vsel %vm1870, %v2255, %v2254
        %v2257 = vrot.slane %v2237, 2
        %v2258 = vsel %vm1873, %v2257, %v2256
        %v2259 = vrot.slane %v2238, 1
        %v2260 = vsel %vm1876, %v2259, %v2258
        %s2262 = scalar_lea.vmem %s291, 8 [#allocation5]
        %2263 = vst.msk [vmem:[%s2262] sm:$0xff] %vm1879, %v2260
        %2272 = vrot.lane.b32.xlu0 %v2126, 127
        %v2273 = vpop.permute.xlu0 %2272
        %2274 = vrot.lane.b32.xlu0 %v2127, 127
        %v2275 = vpop.permute.xlu0 %2274
        %2276 = vrot.lane.b32.xlu0 %v2128, 127
        %v2277 = vpop.permute.xlu0 %2276
        %2278 = vrot.lane.b32.xlu0 %v2129, 127
        %v2279 = vpop.permute.xlu0 %2278
        %2280 = vrot.lane.b32.xlu0 %v2130, 127
        %v2281 = vpop.permute.xlu0 %2280
        %2282 = vrot.lane.b32.xlu0 %v2131, 127
        %v2283 = vpop.permute.xlu0 %2282
        %2284 = vrot.lane.b32.xlu0 %v2132, 127
        %v2285 = vpop.permute.xlu0 %2284
        %2286 = vrot.lane.b32.xlu0 %v2133, 127
        %v2287 = vpop.permute.xlu0 %2286
        %v2296 = vadd.f32 %v2134, %v2273
        %v2297 = vadd.f32 %v2135, %v2275
        %v2298 = vadd.f32 %v2136, %v2277
        %v2299 = vadd.f32 %v2137, %v2279
        %v2300 = vadd.f32 %v2138, %v2281
        %v2301 = vadd.f32 %v2139, %v2283
        %v2302 = vadd.f32 %v2140, %v2285
        %v2303 = vadd.f32 %v2141, %v2287
        %v2304 = vadd.f32 %v2296, %v2191
        %v2305 = vadd.f32 %v2297, %v2192
        %v2306 = vadd.f32 %v2298, %v2193
        %v2307 = vadd.f32 %v2299, %v2194
        %v2308 = vadd.f32 %v2300, %v2195
        %v2309 = vadd.f32 %v2301, %v2196
        %v2310 = vadd.f32 %v2302, %v2197
        %v2311 = vadd.f32 %v2303, %v2198
        %2313 = vrot.lane.b32.xlu0 %v2182, 127
        %v2314 = vpop.permute.xlu0 %2313
        %v2316 = vadd.f32 %v2304, %v2153
        %v2317 = vadd.f32 %v2305, %v2155
        %v2318 = vadd.f32 %v2306, %v2157
        %v2319 = vadd.f32 %v2307, %v2159
        %v2320 = vadd.f32 %v2308, %v2161
        %v2321 = vadd.f32 %v2309, %v2163
        %v2322 = vadd.f32 %v2310, %v2165
        %v2323 = vadd.f32 %v2311, %v2314
        %v2332 = vrot.slane %v2317, 7
        %v2333 = vsel %vm1858, %v2332, %v2316
        %v2334 = vrot.slane %v2318, 6
        %v2335 = vsel %vm1861, %v2334, %v2333
        %v2336 = vrot.slane %v2319, 5
        %v2337 = vsel %vm1864, %v2336, %v2335
        %v2338 = vrot.slane %v2320, 4
        %v2339 = vsel %vm1867, %v2338, %v2337
        %v2340 = vrot.slane %v2321, 3
        %v2341 = vsel %vm1870, %v2340, %v2339
        %v2342 = vrot.slane %v2322, 2
        %v2343 = vsel %vm1873, %v2342, %v2341
        %v2344 = vrot.slane %v2323, 1
        %v2345 = vsel %vm1876, %v2344, %v2343
        %2346 = vrot.lane.b32.xlu0 %v2345, 127
        %v2347 = vpop.permute.xlu0 %2346
        %s2349 = scalar_lea.vmem %s291, 40 [#allocation5]
        %2350 = vst.msk [vmem:[%s2349] sm:$0xff] %vm1879, %v2347
        %v2351 = vmul.f32 %v2124, 0.0625
        %v2352 = vmul.f32 %v2125, 0.0625
        %v2353 = vadd.f32 %v2135, %v2128
        %v2354 = vadd.f32 %v2136, %v2129
        %v2355 = vadd.f32 %v2137, %v2130
        %v2356 = vadd.f32 %v2138, %v2131
        %v2357 = vadd.f32 %v2139, %v2132
        %v2358 = vadd.f32 %v2140, %v2133
        %v2359 = vadd.f32 %v2141, %v2351
        %v2360 = vadd.f32 %v2182, %v2352
        %v2361 = vadd.f32 %v2353, %v2208
        %v2362 = vadd.f32 %v2354, %v2210
        %v2363 = vadd.f32 %v2355, %v2212
        %v2364 = vadd.f32 %v2356, %v2214
        %v2365 = vadd.f32 %v2357, %v2216
        %v2366 = vadd.f32 %v2358, %v2218
        %v2367 = vadd.f32 %v2359, %v2220
        %v2368 = vadd.f32 %v2360, %v2222
        %v2369 = vmul.f32 %v2125, 0.1875
        %2371 = vrot.lane.b32.xlu0 %v2369, 127
        %v2372 = vpop.permute.xlu0 %2371
        %v2374 = vadd.f32 %v2361, %v2155
        %v2375 = vadd.f32 %v2362, %v2157
        %v2376 = vadd.f32 %v2363, %v2159
        %v2377 = vadd.f32 %v2364, %v2161
        %v2378 = vadd.f32 %v2365, %v2163
        %v2379 = vadd.f32 %v2366, %v2165
        %v2380 = vadd.f32 %v2367, %v2314
        %v2381 = vadd.f32 %v2368, %v2372
        %v2390 = vrot.slane %v2375, 7
        %v2391 = vsel %vm1858, %v2390, %v2374
        %v2392 = vrot.slane %v2376, 6
        %v2393 = vsel %vm1861, %v2392, %v2391
        %v2394 = vrot.slane %v2377, 5
        %v2395 = vsel %vm1864, %v2394, %v2393
        %v2396 = vrot.slane %v2378, 4
        %v2397 = vsel %vm1867, %v2396, %v2395
        %v2398 = vrot.slane %v2379, 3
        %v2399 = vsel %vm1870, %v2398, %v2397
        %v2400 = vrot.slane %v2380, 2
        %v2401 = vsel %vm1873, %v2400, %v2399
        %v2402 = vrot.slane %v2381, 1
        %v2403 = vsel %vm1876, %v2402, %v2401
        %s2405 = scalar_lea.vmem %s291, 72 [#allocation5]
        %2406 = vst.msk [vmem:[%s2405] sm:$0xff] %vm1879, %v2403
        %v2407 = vadd.f32 %v2191, %v2153
        %v2408 = vadd.f32 %v2192, %v2155
        %v2409 = vadd.f32 %v2193, %v2157
        %v2410 = vadd.f32 %v2194, %v2159
        %v2411 = vadd.f32 %v2195, %v2161
        %v2412 = vadd.f32 %v2196, %v2163
        %v2413 = vadd.f32 %v2197, %v2165
        %v2414 = vadd.f32 %v2198, %v2314
        %v2415 = vadd.f32 %v2407, %v2136
        %v2416 = vadd.f32 %v2408, %v2137
        %v2417 = vadd.f32 %v2409, %v2138
        %v2418 = vadd.f32 %v2410, %v2139
        %v2419 = vadd.f32 %v2411, %v2140
        %v2420 = vadd.f32 %v2412, %v2141
        %v2421 = vadd.f32 %v2413, %v2182
        %v2422 = vadd.f32 %v2414, %v2369
        %2425 = vrot.lane.b32.xlu0 %v2351, 127
        %v2426 = vpop.permute.xlu0 %2425
        %2427 = vrot.lane.b32.xlu0 %v2352, 127
        %v2428 = vpop.permute.xlu0 %2427
        %v2431 = vadd.f32 %v2415, %v2277
        %v2432 = vadd.f32 %v2416, %v2279
        %v2433 = vadd.f32 %v2417, %v2281
        %v2434 = vadd.f32 %v2418, %v2283
        %v2435 = vadd.f32 %v2419, %v2285
        %v2436 = vadd.f32 %v2420, %v2287
        %v2437 = vadd.f32 %v2421, %v2426
        %v2438 = vadd.f32 %v2422, %v2428
        %v2447 = vrot.slane %v2432, 7
        %v2448 = vsel %vm1858, %v2447, %v2431
        %v2449 = vrot.slane %v2433, 6
        %v2450 = vsel %vm1861, %v2449, %v2448
        %v2451 = vrot.slane %v2434, 5
        %v2452 = vsel %vm1864, %v2451, %v2450
        %v2453 = vrot.slane %v2435, 4
        %v2454 = vsel %vm1867, %v2453, %v2452
        %v2455 = vrot.slane %v2436, 3
        %v2456 = vsel %vm1870, %v2455, %v2454
        %v2457 = vrot.slane %v2437, 2
        %v2458 = vsel %vm1873, %v2457, %v2456
        %v2459 = vrot.slane %v2438, 1
        %v2460 = vsel %vm1876, %v2459, %v2458
        %2461 = vrot.lane.b32.xlu0 %v2460, 127
        %v2462 = vpop.permute.xlu0 %2461
        %s2464 = scalar_lea.vmem %s291, 104 [#allocation5]
        %2465 = vst.msk [vmem:[%s2464] sm:$0xff] %vm1879, %v2462
        %v2474 = vrot.slane %v2118, 7
        %v2475 = vsel %vm1858, %v2474, %v2117
        %v2476 = vrot.slane %v2119, 6
        %v2477 = vsel %vm1861, %v2476, %v2475
        %v2478 = vrot.slane %v2120, 5
        %v2479 = vsel %vm1864, %v2478, %v2477
        %v2480 = vrot.slane %v2121, 4
        %v2481 = vsel %vm1867, %v2480, %v2479
        %v2482 = vrot.slane %v2122, 3
        %v2483 = vsel %vm1870, %v2482, %v2481
        %v2484 = vrot.slane %v2123, 2
        %v2485 = vsel %vm1873, %v2484, %v2483
        %v2486 = vrot.slane %v2124, 1
        %v2487 = vsel %vm1876, %v2486, %v2485
        %2488 = vrot.lane.b32.xlu0 %v2487, 127
        %v2489 = vpop.permute.xlu0 %2488
        %s2491 = scalar_lea.vmem %s291, 24 [#allocation5]
        %2492 = vst.msk [vmem:[%s2491] sm:$0xff] %vm1879, %v2489
        %s2493 = scalar_lea.vmem %s291, 56 [#allocation5]
        %2494 = vst.msk [vmem:[%s2493] sm:$0xff] %vm1879, %v2489
        %s2495 = scalar_lea.vmem %s291, 88 [#allocation5]
        %2496 = vst.msk [vmem:[%s2495] sm:$0xff] %vm1879, %v2489
        %s2497 = scalar_lea.vmem %s291, 120 [#allocation5]
        %2498 = vst.msk [vmem:[%s2497] sm:$0xff] %vm1879, %v2489
        %s2499 = sand.u32 %s194, 1
        %s2500 = sand.u32 %s194, 1
        %s2501 = smul.addr %s2500, 128
        %s2502 = scalar_lea.vmem [#allocation5], %s2501
        // Predicated region
        $region78: #{_lambda_.1} parent=47 // pred_check
          %p2503 = pneg %p204
        $region79: #{_lambda_.1} parent=47 // pred_check_branch
          %2505 = sbr.rel (%p2503) target = $region81
        $region80: #{_lambda_.1} parent=47 // pred_region
          %s2506 = smul.addr %s22, 32
          %s2507 = sadd.s32 %s23, %s2506
          %s2508 = smul.addr %s2507, 8
          %s2509 = scalar_lea.vmem %s7, %s2508
          // Predicated region
          $region82: #{_lambda_.1} parent=80 // pred_check
            _
          $region83: #{_lambda_.1} parent=80 // pred_check_branch
            %2511 = sbr.rel (0) target = $region85
          $region84: #{_lambda_.1} parent=80 // pred_region
            // Predicated region
            $region86: #{_lambda_.1} parent=84 // pred_check
              _
            $region87: #{_lambda_.1} parent=84 // pred_check_branch
              %2513 = sbr.rel (0) target = $region89
            $region88: #{_lambda_.1} parent=84 // pred_region
              // Predicated region
              $region101: #{_lambda_.1} parent=88 // pred_check
                _
              $region102: #{_lambda_.1} parent=88 // pred_check_branch
                %2558 = sbr.rel (0) target = $region104
              $region103: #{_lambda_.1} parent=88 // pred_region
                loop: start=0, step=1, limit=1
                $region105: #{_lambda_.1} parent=103 // loop_pre_header
                  _
                $region106: #{_lambda_.1} parent=103 // loop_header
                  %s2560 = sphi 0, %s2564
                  %p2561 = scmp.ge.s32.totalorder %s2560, 1
                  %s2565 = sphi %s2502, %s2502
                  %s2566 = sphi %s2509, %s2509
                $region107: #{_lambda_.1} parent=103 // loop_header_branch
                  %2563 = sbr.rel (%p2561) target = $region111
                $region108: #{_lambda_.1} parent=103 // loop_body
                  %v2567 = vld [vmem:[%s2565] sm:$0xff]
                  %2568 = vst [vmem:[%s2566] sm:$0xff] %v2567
                  %v2569 = vld [vmem:[%s2565 + $0x8] sm:$0xff]
                  %2570 = vst [vmem:[%s2566 + $0x10] sm:$0xff] %v2569
                  %v2571 = vld [vmem:[%s2565 + $0x10] sm:$0xff]
                  %2572 = vst [vmem:[%s2566 + $0x20] sm:$0xff] %v2571
                  %v2573 = vld [vmem:[%s2565 + $0x18] sm:$0xff]
                  %2574 = vst [vmem:[%s2566 + $0x30] sm:$0xff] %v2573
                  %v2575 = vld [vmem:[%s2565 + $0x20] sm:$0xff]
                  %2576 = vst [vmem:[%s2566 + $0x40] sm:$0xff] %v2575
                  %v2577 = vld [vmem:[%s2565 + $0x28] sm:$0xff]
                  %2578 = vst [vmem:[%s2566 + $0x50] sm:$0xff] %v2577
                  %v2579 = vld [vmem:[%s2565 + $0x30] sm:$0xff]
                  %2580 = vst [vmem:[%s2566 + $0x60] sm:$0xff] %v2579
                  %v2581 = vld [vmem:[%s2565 + $0x38] sm:$0xff]
                  %2582 = vst [vmem:[%s2566 + $0x70] sm:$0xff] %v2581
                  %v2583 = vld [vmem:[%s2565 + $0x40] sm:$0xff]
                  %2584 = vst [vmem:[%s2566 + $0x80] sm:$0xff] %v2583
                  %v2585 = vld [vmem:[%s2565 + $0x48] sm:$0xff]
                  %2586 = vst [vmem:[%s2566 + $0x90] sm:$0xff] %v2585
                  %v2587 = vld [vmem:[%s2565 + $0x50] sm:$0xff]
                  %2588 = vst [vmem:[%s2566 + $0xa0] sm:$0xff] %v2587
                  %v2589 = vld [vmem:[%s2565 + $0x58] sm:$0xff]
                  %2590 = vst [vmem:[%s2566 + $0xb0] sm:$0xff] %v2589
                  %v2591 = vld [vmem:[%s2565 + $0x60] sm:$0xff]
                  %2592 = vst [vmem:[%s2566 + $0xc0] sm:$0xff] %v2591
                  %v2593 = vld [vmem:[%s2565 + $0x68] sm:$0xff]
                  %2594 = vst [vmem:[%s2566 + $0xd0] sm:$0xff] %v2593
                  %v2595 = vld [vmem:[%s2565 + $0x70] sm:$0xff]
                  %2596 = vst [vmem:[%s2566 + $0xe0] sm:$0xff] %v2595
                  %v2597 = vld [vmem:[%s2565 + $0x78] sm:$0xff]
                  %2598 = vst [vmem:[%s2566 + $0xf0] sm:$0xff] %v2597
                $region109: #{_lambda_.1} parent=103 // loop_footer
                  %s2564 = sadd.s32 1, %s2560
                $region110: #{_lambda_.1} parent=103 // loop_footer_branch
                  %2559 = sbr.rel target = $region106
                $region111: #{_lambda_.1} parent=103 // loop_exit
                  _
              $region104: #{_lambda_.1} parent=88 // pred_fallthru
                _
              // Predicated region
              $region112: #{_lambda_.1} parent=88 // pred_check
                _
              $region113: #{_lambda_.1} parent=88 // pred_check_branch
                %2600 = sbr.rel target = $region115
              $region114: #{_lambda_.1} parent=88 // pred_region
                _
              $region115: #{_lambda_.1} parent=88 // pred_fallthru
                _
            $region89: #{_lambda_.1} parent=84 // pred_fallthru
              _
            // Predicated region
            $region90: #{_lambda_.1} parent=84 // pred_check
              _
            $region91: #{_lambda_.1} parent=84 // pred_check_branch
              %2515 = sbr.rel target = $region93
            $region92: #{_lambda_.1} parent=84 // pred_region
              loop: start=0, step=1, limit=1
              $region94: #{_lambda_.1} parent=92 // loop_pre_header
                _
              $region95: #{_lambda_.1} parent=92 // loop_header
                %s2518 = sphi 0, %s2522
                %p2519 = scmp.ge.s32.totalorder %s2518, 1
                %s2523 = sphi %s2502, %s2502
                %s2524 = sphi %s2509, %s2509
              $region96: #{_lambda_.1} parent=92 // loop_header_branch
                %2521 = sbr.rel (%p2519) target = $region100
              $region97: #{_lambda_.1} parent=92 // loop_body
                %v2525 = vld [vmem:[%s2523] sm:$0xff]
                %2526 = vst [vmem:[%s2524] sm:$0xff] %v2525
                %v2527 = vld [vmem:[%s2523 + $0x8] sm:$0xff]
                %2528 = vst [vmem:[%s2524 + $0x10] sm:$0xff] %v2527
                %v2529 = vld [vmem:[%s2523 + $0x10] sm:$0xff]
                %2530 = vst [vmem:[%s2524 + $0x20] sm:$0xff] %v2529
                %v2531 = vld [vmem:[%s2523 + $0x18] sm:$0xff]
                %2532 = vst [vmem:[%s2524 + $0x30] sm:$0xff] %v2531
                %v2533 = vld [vmem:[%s2523 + $0x20] sm:$0xff]
                %2534 = vst [vmem:[%s2524 + $0x40] sm:$0xff] %v2533
                %v2535 = vld [vmem:[%s2523 + $0x28] sm:$0xff]
                %2536 = vst [vmem:[%s2524 + $0x50] sm:$0xff] %v2535
                %v2537 = vld [vmem:[%s2523 + $0x30] sm:$0xff]
                %2538 = vst [vmem:[%s2524 + $0x60] sm:$0xff] %v2537
                %v2539 = vld [vmem:[%s2523 + $0x38] sm:$0xff]
                %2540 = vst [vmem:[%s2524 + $0x70] sm:$0xff] %v2539
                %v2541 = vld [vmem:[%s2523 + $0x40] sm:$0xff]
                %2542 = vst [vmem:[%s2524 + $0x80] sm:$0xff] %v2541
                %v2543 = vld [vmem:[%s2523 + $0x48] sm:$0xff]
                %2544 = vst [vmem:[%s2524 + $0x90] sm:$0xff] %v2543
                %v2545 = vld [vmem:[%s2523 + $0x50] sm:$0xff]
                %2546 = vst [vmem:[%s2524 + $0xa0] sm:$0xff] %v2545
                %v2547 = vld [vmem:[%s2523 + $0x58] sm:$0xff]
                %2548 = vst [vmem:[%s2524 + $0xb0] sm:$0xff] %v2547
                %v2549 = vld [vmem:[%s2523 + $0x60] sm:$0xff]
                %2550 = vst [vmem:[%s2524 + $0xc0] sm:$0xff] %v2549
                %v2551 = vld [vmem:[%s2523 + $0x68] sm:$0xff]
                %2552 = vst [vmem:[%s2524 + $0xd0] sm:$0xff] %v2551
                %v2553 = vld [vmem:[%s2523 + $0x70] sm:$0xff]
                %2554 = vst [vmem:[%s2524 + $0xe0] sm:$0xff] %v2553
                %v2555 = vld [vmem:[%s2523 + $0x78] sm:$0xff]
                %2556 = vst [vmem:[%s2524 + $0xf0] sm:$0xff] %v2555
              $region98: #{_lambda_.1} parent=92 // loop_footer
                %s2522 = sadd.s32 1, %s2518
              $region99: #{_lambda_.1} parent=92 // loop_footer_branch
                %2517 = sbr.rel target = $region95
              $region100: #{_lambda_.1} parent=92 // loop_exit
                _
            $region93: #{_lambda_.1} parent=84 // pred_fallthru
              _
          $region85: #{_lambda_.1} parent=80 // pred_fallthru
            _
          %2601 = vnop
        $region81: #{_lambda_.1} parent=47 // pred_fallthru
          _
      $region48: #{_lambda_.1} parent=5 // pred_fallthru
        _
      %p2602 = scmp.le.s32.totalorder 2, %s13
      // Predicated region
      $region116: #{_lambda_.1} parent=5 // pred_check
        %p2603 = pneg %p2602
      $region117: #{_lambda_.1} parent=5 // pred_check_branch
        %2605 = sbr.rel (%p2603) target = $region119
      $region118: #{_lambda_.1} parent=5 // pred_region
        %s2606 = ssub.s32 %s13, 2
        // Predicated region
        $region120: #{_lambda_.1} parent=118 // pred_check
          %p2607 = pneg %p210
        $region121: #{_lambda_.1} parent=118 // pred_check_branch
          %2609 = sbr.rel (%p2607) target = $region123
        $region122: #{_lambda_.1} parent=118 // pred_region
          %s2610 = sand.u32 %s195, 1
          %s2611 = sand.u32 %s195, 1
          %s2612 = smul.addr %s2611, 128
          %s2613 = scalar_lea.vmem [#allocation5], %s2612
        $region123: #{_lambda_.1} parent=118 // pred_fallthru
          _
      $region119: #{_lambda_.1} parent=5 // pred_fallthru
        _
    $region6: #{_lambda_.1} parent=1 // loop_footer
      %s17 = sadd.s32 1, %s13
    $region7: #{_lambda_.1} parent=1 // loop_footer_branch
      %12 = sbr.rel target = $region3
    $region8: #{_lambda_.1} parent=1 // loop_exit
      _

</llo_original>
